<compile_context>
chip_gen: v5e
topology: v5e:2x2
jax: 0.10.0
libtpu: 0.0.40
codegen_flags: <defaults>
</compile_context>

<pallas_src>
import numpy as np
import jax
import jax.numpy as jnp
from jax import lax
from jax.experimental import pallas as pl
from jax.experimental.pallas import tpu as pltpu

LEAKY_SLOPE = 0.01
BN_EPS = 1e-5
_F32 = jnp.float32
_BF16 = jnp.bfloat16
_VMEM_LIMIT = 48 * 1024 * 1024     # < 64 MiB physical on v7x; above default scoped limits


def _cparams(dims):
    return pltpu.CompilerParams(dimension_semantics=dims,
                                vmem_limit_bytes=_VMEM_LIMIT)


def _leaky(v):
    return jnp.where(v >= 0, v, LEAKY_SLOPE * v)


def _pick_tile_n(n):
    """Largest MXU-friendly tile that divides N (multiples of 256 preferred, 128 ok)."""
    for t in (1024, 512, 256, 128):
        if n >= t and n % t == 0:
            return t
    return n


# ---------------- depthwise 3x3 stride-2 conv + folded BN(scale,shift) + leaky -----------------


def _dw_kernel(taps_ref, sel_ref, o_ref):
    # taps: (1, C*Ho, 3*Wp+1) bf16 (weights & BN scale folded, last column = BN shift)
    # sel : (3*Wp+1, Wo) bf16 (stride-2 column selection, last row = ones)
    acc = jnp.dot(taps_ref[0], sel_ref[...], preferred_element_type=_F32)
    o_ref[0] = _leaky(acc).astype(o_ref.dtype)


def dwconv3x3_s2_bn_act(x, w, scale, shift):
    """Depthwise Conv2d(C,C,3,stride=2,pad=1,groups=C,bias=False) + BN + leaky.

    x: (B, C, H, W); w: (C, 3, 3).  Only 3 H-strided row-tap slices (~1.5x input) are built in
    XLA glue; per-channel 3x3 weights and the BN scale are folded into them there, and the BN
    shift is appended as one extra matmul column, so the kernel is a single bf16 matmul.
    """
    B, C, H, W = x.shape
    Ho = (H - 1) // 2 + 1
    Wo = (W - 1) // 2 + 1
    Hp, Wp = H + 2, W + 2
    CH = C * Ho
    K = 3 * Wp + 1

    xp = jnp.pad(x.astype(_F32), ((0, 0), (0, 0), (1, 1), (1, 1)))
    rows = jnp.stack(
        [lax.slice(xp, (0, 0, di, 0), (B, C, di + 2 * (Ho - 1) + 1, Wp), (1, 1, 2, 1))
         for di in range(3)], axis=1)                              # (B, 3, C, Ho, Wp)
    wsc = w * scale[:, None, None]                                 # fold BN scale into the taps
    tapsw = jnp.einsum('bdchw,cde->bchew', rows, wsc)              # (B, C, Ho, 3, Wp)
    shift_col = jnp.broadcast_to(jnp.repeat(shift, Ho).reshape(1, CH, 1), (B, CH, 1))
    taps = jnp.concatenate([tapsw.reshape(B, CH, 3 * Wp), shift_col], axis=-1).astype(_BF16)

    sel_np = np.zeros((K, Wo), np.float32)
    jj = np.arange(Wo)
    for dj in range(3):
        sel_np[dj * Wp + 2 * jj + dj, jj] = 1.0
    sel_np[3 * Wp, :] = 1.0                                        # ones row -> adds the shift
    sel = jnp.asarray(sel_np, _BF16)

    out = pl.pallas_call(
        _dw_kernel,
        out_shape=jax.ShapeDtypeStruct((B, CH, Wo), _BF16),
        grid=(B,),
        in_specs=[pl.BlockSpec((1, CH, K), lambda b: (b, 0, 0)),
                  pl.BlockSpec((K, Wo), lambda b: (0, 0))],
        out_specs=pl.BlockSpec((1, CH, Wo), lambda b: (b, 0, 0)),
        compiler_params=_cparams(("parallel",)),
    )(taps, sel)
    return out.reshape(B, C, Ho, Wo)


# ---------------- main computation: two N-tiled pallas_calls ----------------


def main_fused(x_bf, lm_bf, U_bf, p):
    """x_bf: (B, C, N) bf16, lm_bf: (B, C, nl) bf16, U_bf: (nl, N) bf16. Returns (B, C, N) bf16."""
    B, C, N = x_bf.shape
    nl = lm_bf.shape[2]
    sgi = C // 2
    ci2 = p['wg_w'].shape[0]
    ci4 = p['adj_w'].shape[0]
    TN = _pick_tile_n(N)
    nN = N // TN

    # ---- fold BN scales into conv weights, pack shifts into one column per kernel ----
    kvq_w = jnp.concatenate([p['sg_wk'], p['sg_wv'], p['sg_wq']], axis=0).astype(_BF16)
    sgwg_w = (p['sg_wg_scale'][:, None] * p['sg_wg_w']).astype(_F32)
    sgout_w = (p['sg_out_scale'][:, None] * p['sg_out_w']).astype(_BF16)
    phi_w = p['phi_scale'][:, None] * p['phi_w']
    theta_w = p['theta_scale'][:, None] * p['theta_w']
    pt_w = jnp.concatenate([phi_w, theta_w], axis=0).astype(_BF16)
    theta_wb = theta_w.astype(_BF16)
    adj_w = (p['adj_scale'][:, None] * p['adj_w']).astype(_F32)
    wg_w = (p['wg_scale'][:, None] * p['wg_w']).astype(_F32)
    conv3_w = (p['bn3_scale'][:, None] * p['conv3_w']).astype(_BF16)
    fa_w = (p['final_scale'][:, None] * p['final_w'][:, :C]).astype(_BF16)
    fb_w = (p['final_scale'][:, None] * p['final_w'][:, C:]).astype(_BF16)

    def pack_shifts(named_segs):
        offs, pos = {}, 0
        cols = []
        for name, seg in named_segs:
            offs[name] = (pos, int(seg.shape[0]))
            pos += int(seg.shape[0])
            cols.append(seg)
        return jnp.concatenate(cols).reshape(-1, 1).astype(_F32), offs

    sh_a, off_a = pack_shifts([
        ('kvq', jnp.concatenate([p['sg_bk'], p['sg_bv'], p['sg_bq']])),
        ('sgwg', p['sg_wg_shift']),
        ('sgout', p['sg_out_shift']),
        ('pt', jnp.concatenate([p['phi_shift'], p['theta_shift']])),
        ('adj', p['adj_shift']),
        ('wg', p['wg_shift']),
    ])
    sh_b, off_b = pack_shifts([
        ('theta', p['theta_shift']),
        ('bn3', p['bn3_shift']),
        ('final', p['final_shift']),
    ])
    Ra, Rb = int(sh_a.shape[0]), int(sh_b.shape[0])
    gamma_a = p['sg_gamma'].astype(_F32)     # SpatialGCN gamma
    gamma_b = p['gamma1'].astype(_F32)       # graph-branch gamma1

    # ---------------- Kernel A: z_idt reduction over N + SpatialGCN (last tile) ----------------
    def kernel_a(x_ref, lm_ref, kvqw_ref, sgwgw_ref, sgoutw_ref, ptw_ref,
                 adjw_ref, wgw_ref, sh_ref, gam_ref, local_ref, z_ref, zacc):
        j = pl.program_id(1)

        def sh(name):
            o, k = off_a[name]
            return sh_ref[o:o + k]

        @pl.when(j == 0)
        def _init():
            zacc[...] = jnp.zeros_like(zacc)

        xt = x_ref[0]                                                 # (C, TN) bf16
        pt = _leaky(jnp.dot(ptw_ref[...], xt, preferred_element_type=_F32) + sh('pt'))
        xs = pt[:ci2].astype(_BF16)                                   # x_sqz tile
        bm = pt[ci2:].astype(_BF16)                                   # b tile
        zacc[...] += lax.dot_general(xs, bm, (((1,), (1,)), ((), ())),
                                     preferred_element_type=_F32)    # (ci2, ci4)

        @pl.when(j == pl.num_programs(1) - 1)
        def _finish():
            # ---- SpatialGCN on the (small) local features ----
            lm = lm_ref[0]                                            # (C, nl) bf16
            kvq = jnp.dot(kvqw_ref[...], lm, preferred_element_type=_F32) + sh('kvq')
            Kf = kvq[:sgi]
            Vf = kvq[sgi:2 * sgi]
            Qf = kvq[2 * sgi:]
            # AT[j,i] = A[i,j] = sum_n Q[i,n] V[j,n]; softmax over torch dim=2 -> axis 0 of AT.
            AT = lax.dot_general(Vf, Qf, (((1,), (1,)), ((), ())), preferred_element_type=_F32)
            AT = AT - jnp.max(AT, axis=0, keepdims=True)
            ET = jnp.exp(AT)
            ST = ET / jnp.sum(ET, axis=0, keepdims=True)
            AVt = jnp.dot(ST, Kf, preferred_element_type=_F32)        # (sgi, nl)
            AVW = jnp.dot(sgwgw_ref[...], AVt, preferred_element_type=_F32) + sh('sgwg')
            sgo = _leaky(jnp.dot(sgoutw_ref[...], AVW.astype(_BF16),
                                 preferred_element_type=_F32) + sh('sgout'))
            local = gam_ref[0] * sgo + lm.astype(_F32)
            local_ref[0] = local.astype(local_ref.dtype)

            # ---- z algebra (conv_adj / conv_wg on the tiny (ci2, ci4) matrix) ----
            zi = zacc[...]
            zt = lax.dot_general(adjw_ref[...], zi, (((1,), (1,)), ((), ())),
                                 preferred_element_type=_F32) + sh('adj')   # adj_w @ z_idt^T
            z = (lax.dot_general(wgw_ref[...], zt, (((1,), (1,)), ((), ())),
                                 preferred_element_type=_F32)               # wg_w @ zt^T
                 + jnp.dot(wgw_ref[...], zi, preferred_element_type=_F32)    # wg_w @ z_idt
                 + sh('wg'))
            z_ref[0] = z

    local_out, z_out = pl.pallas_call(
        kernel_a,
        out_shape=(jax.ShapeDtypeStruct((B, C, nl), _BF16),
                   jax.ShapeDtypeStruct((B, ci2, ci4), _F32)),
        grid=(B, nN),
        in_specs=[
            pl.BlockSpec((1, C, TN), lambda b, j: (b, 0, j)),
            pl.BlockSpec((1, C, nl), lambda b, j: (b, 0, 0)),
            pl.BlockSpec((3 * sgi, C), lambda b, j: (0, 0)),
            pl.BlockSpec((sgi, sgi), lambda b, j: (0, 0)),
            pl.BlockSpec((C, sgi), lambda b, j: (0, 0)),
            pl.BlockSpec((ci2 + ci4, C), lambda b, j: (0, 0)),
            pl.BlockSpec((ci4, ci4), lambda b, j: (0, 0)),
            pl.BlockSpec((ci2, ci2), lambda b, j: (0, 0)),
            pl.BlockSpec((Ra, 1), lambda b, j: (0, 0)),
            pl.BlockSpec(memory_space=pltpu.MemorySpace.SMEM),
        ],
        out_specs=(pl.BlockSpec((1, C, nl), lambda b, j: (b, 0, 0)),
                   pl.BlockSpec((1, ci2, ci4), lambda b, j: (b, 0, 0))),
        scratch_shapes=[pltpu.VMEM((ci2, ci4), _F32)],
        compiler_params=_cparams(("parallel", "arbitrary")),
    )(x_bf, lm_bf, kvq_w, sgwg_w, sgout_w, pt_w, adj_w, wg_w, sh_a, gamma_a)

    # ---------------- Kernel B: per-tile upsample, slf, y, conv3, final conv ----------------
    def kernel_b(x_ref, u_ref, local_ref, z_ref, thw_ref, c3w_ref,
                 faw_ref, fbw_ref, sh_ref, gam1_ref, o_ref):
        def sh(name):
            o, k = off_b[name]
            return sh_ref[o:o + k]

        xt = x_ref[0]                                                 # (C, TN) bf16
        xf = xt.astype(_F32)
        # bilinear upsample (align_corners=True) of the SpatialGCN output via kron matrix
        lup = jnp.dot(local_ref[0], u_ref[...], preferred_element_type=_F32)
        slf = xf * lup + xf                                           # spatial_local_feat tile
        # recompute b = leaky(bn_theta(theta(x))) for this tile (cheaper than HBM round-trip)
        bm = _leaky(jnp.dot(thw_ref[...], xt, preferred_element_type=_F32) + sh('theta'))
        y = jnp.dot(z_ref[0].astype(_BF16), bm.astype(_BF16),
                    preferred_element_type=_F32)                      # (ci2, TN)
        y = _leaky(jnp.dot(c3w_ref[...], y.astype(_BF16),
                           preferred_element_type=_F32) + sh('bn3'))  # conv3 + bn3 + leaky
        g = gam1_ref[0] * y + xf
        out = (jnp.dot(faw_ref[...], slf.astype(_BF16), preferred_element_type=_F32)
               + jnp.dot(fbw_ref[...], g.astype(_BF16), preferred_element_type=_F32)
               + sh('final'))
        o_ref[0] = _leaky(out).astype(o_ref.dtype)

    out = pl.pallas_call(
        kernel_b,
        out_shape=jax.ShapeDtypeStruct((B, C, N), _BF16),
        grid=(B, nN),
        in_specs=[
            pl.BlockSpec((1, C, TN), lambda b, j: (b, 0, j)),
            pl.BlockSpec((nl, TN), lambda b, j: (0, j)),
            pl.BlockSpec((1, C, nl), lambda b, j: (b, 0, 0)),
            pl.BlockSpec((1, ci2, ci4), lambda b, j: (b, 0, 0)),
            pl.BlockSpec((ci4, C), lambda b, j: (0, 0)),
            pl.BlockSpec((C, ci2), lambda b, j: (0, 0)),
            pl.BlockSpec((C, C), lambda b, j: (0, 0)),
            pl.BlockSpec((C, C), lambda b, j: (0, 0)),
            pl.BlockSpec((Rb, 1), lambda b, j: (0, 0)),
            pl.BlockSpec(memory_space=pltpu.MemorySpace.SMEM),
        ],
        out_specs=pl.BlockSpec((1, C, TN), lambda b, j: (b, 0, j)),
        compiler_params=_cparams(("parallel", "parallel")),
    )(x_bf, U_bf, local_out, z_out, theta_wb, conv3_w, fa_w, fb_w, sh_b, gamma_b)
    return out


# ----------------------------- glue / parameters ---------------------------------


def fold_bn(gamma, beta, mean, var, conv_bias=None, eps=BN_EPS):
    scale = gamma / jnp.sqrt(var + eps)
    shift = beta - mean * scale
    if conv_bias is not None:
        shift = shift + scale * conv_bias
    return scale, shift


def interp_matrix(out_size, in_size):
    """Row-interpolation matrix for bilinear, align_corners=True (numpy constant)."""
    R = np.zeros((out_size, in_size), np.float32)
    if in_size == 1:
        R[:, 0] = 1.0
        return R
    if out_size == 1:
        R[0, 0] = 1.0
        return R
    src = np.arange(out_size, dtype=np.float64) * ((in_size - 1) / (out_size - 1))
    i0 = np.clip(np.floor(src).astype(np.int64), 0, in_size - 2)
    w1 = src - i0
    rows = np.arange(out_size)
    R[rows, i0] = (1.0 - w1).astype(np.float32)
    R[rows, i0 + 1] += w1.astype(np.float32)
    return R


def ddual_gcn_forward(feat, p):
    B, C, H, W = feat.shape
    N = H * W

    # local path: 3 x (depthwise 3x3 stride-2 conv + ABN)
    l = feat
    for i in range(3):
        l = dwconv3x3_s2_bn_act(l, p[f'local{i}_w'],
                                p[f'local{i}_scale'], p[f'local{i}_shift'])
    hl, wl = l.shape[2], l.shape[3]
    lm = l.reshape(B, C, hl * wl)                                     # bf16

    # combined bilinear (align_corners=True) upsample matrix: (hl*wl, H*W)
    U = jnp.asarray(np.kron(interp_matrix(H, hl), interp_matrix(W, wl)).T, _BF16)

    x_bf = feat.reshape(B, C, N).astype(_BF16)
    out = main_fused(x_bf, lm, U, p)                                  # (B, C, N) bf16
    return out.reshape(B, C, H, W)


def init_params(key, planes, ratio=4):
    C = planes
    ci2 = C // ratio * 2
    ci4 = C // ratio
    sgi = C // 2

    state = {'key': key}

    def nxt():
        state['key'], sub = jax.random.split(state['key'])
        return sub

    def w_init(shape, fan_in):
        return (jax.random.normal(nxt(), shape, jnp.float32) /
                jnp.sqrt(jnp.float32(fan_in)))

    def bn_init(c):
        gamma = 1.0 + 0.1 * jax.random.normal(nxt(), (c,), jnp.float32)
        beta = 0.1 * jax.random.normal(nxt(), (c,), jnp.float32)
        mean = 0.05 * jax.random.normal(nxt(), (c,), jnp.float32)
        var = jnp.abs(1.0 + 0.1 * jax.random.normal(nxt(), (c,), jnp.float32))
        return gamma, beta, mean, var

    p = {}
    for i in range(3):
        p[f'local{i}_w'] = w_init((C, 3, 3), 9)
        p[f'local{i}_scale'], p[f'local{i}_shift'] = fold_bn(*bn_init(C))
    for name in ('k', 'v', 'q'):
        p[f'sg_w{name}'] = w_init((sgi, C), C)
        p[f'sg_b{name}'] = 0.1 * jax.random.normal(nxt(), (sgi,), jnp.float32)
    p['sg_wg_w'] = w_init((sgi, sgi), sgi)
    p['sg_wg_scale'], p['sg_wg_shift'] = fold_bn(*bn_init(sgi))
    p['sg_out_w'] = w_init((C, sgi), sgi)
    sg_out_b = 0.1 * jax.random.normal(nxt(), (C,), jnp.float32)
    p['sg_out_scale'], p['sg_out_shift'] = fold_bn(*bn_init(C), conv_bias=sg_out_b)
    # PyTorch initializes gamma/gamma1 to zero; use non-zero values here so the smoke test
    # actually exercises the SpatialGCN and graph-interaction branches.
    p['sg_gamma'] = jnp.full((1,), 0.5, jnp.float32)
    p['phi_w'] = w_init((ci2, C), C)
    p['phi_scale'], p['phi_shift'] = fold_bn(*bn_init(ci2))
    p['theta_w'] = w_init((ci4, C), C)
    p['theta_scale'], p['theta_shift'] = fold_bn(*bn_init(ci4))
    p['adj_w'] = w_init((ci4, ci4), ci4)
    p['adj_scale'], p['adj_shift'] = fold_bn(*bn_init(ci4))
    p['wg_w'] = w_init((ci2, ci2), ci2)
    p['wg_scale'], p['wg_shift'] = fold_bn(*bn_init(ci2))
    p['conv3_w'] = w_init((C, ci2), ci2)
    p['bn3_scale'], p['bn3_shift'] = fold_bn(*bn_init(C))
    p['final_w'] = w_init((C, 2 * C), 2 * C)
    p['final_scale'], p['final_shift'] = fold_bn(*bn_init(C))
    p['gamma1'] = jnp.full((1,), 0.3, jnp.float32)
    return p


if __name__ == "__main__":
    key = jax.random.PRNGKey(0)
    kx, kp = jax.random.split(key)
    B, C, H, W = 2, 16, 16, 16          # planes=16, ratio=4 -> inter=8, ci2=8, ci4=4
    feat = jax.random.normal(kx, (B, C, H, W), jnp.float32)
    params = init_params(kp, C)

    fwd = jax.jit(ddual_gcn_forward)
    out = jax.block_until_ready(fwd(feat, params))

    assert out.shape == (B, C, H, W), out.shape
    assert bool(jnp.all(jnp.isfinite(out.astype(jnp.float32))))
    print("KERNEL_OK")
</pallas_src>

<mosaic_0001>
module attributes {stable_mosaic.version = 11 : i64} {
  func.func @_dw_kernel(%arg0: i32, %arg1: memref<1x128x55xbf16, #tpu.memory_space<vmem>>, %arg2: memref<55x8xbf16, #tpu.memory_space<vmem>>, %arg3: memref<1x128x8xbf16, #tpu.memory_space<vmem>>) attributes {dimension_semantics = [#tpu.dimension_semantics<parallel>], iteration_bounds = array<i64: 2>, scalar_prefetch = 0 : i64, scratch_operands = 0 : i64, tpu.core_type = #tpu.core_type<tc>, window_params = [{transform_indices = @transform_0, window_bounds = array<i64: 1, 128, 55>}, {pipeline_mode = #tpu.pipeline_mode<synchronous>, transform_indices = @transform_1, window_bounds = array<i64: 55, 8>}, {transform_indices = @transform_2, window_bounds = array<i64: 1, 128, 8>}]} {
    %c0 = arith.constant 0 : index
    %c0_0 = arith.constant 0 : index
    %c0_1 = arith.constant 0 : index
    %0 = vector.load %arg1[%c0, %c0_0, %c0_1] : memref<1x128x55xbf16, #tpu.memory_space<vmem>>, vector<1x128x55xbf16>
    %1 = vector.shape_cast %0 : vector<1x128x55xbf16> to vector<128x55xbf16>
    %c0_2 = arith.constant 0 : index
    %c0_3 = arith.constant 0 : index
    %2 = vector.load %arg2[%c0_2, %c0_3] : memref<55x8xbf16, #tpu.memory_space<vmem>>, vector<55x8xbf16>
    %cst = arith.constant dense<0.000000e+00> : vector<128x8xf32>
    %3 = tpu.matmul %1, %2, %cst {dimension_numbers = #tpu.dot_dimension_numbers<[1], [0], [0], [1], [0, 0, 1, 1], [], []>} : vector<128x55xbf16>, vector<55x8xbf16>, vector<128x8xf32> -> vector<128x8xf32>
    %cst_4 = arith.constant 0.000000e+00 : f32
    %4 = vector.broadcast %cst_4 : f32 to vector<128x8xf32>
    %5 = arith.cmpf oge, %3, %4 : vector<128x8xf32>
    %cst_5 = arith.constant 0.00999999977 : f32
    %6 = vector.broadcast %cst_5 : f32 to vector<128x8xf32>
    %7 = arith.mulf %6, %3 : vector<128x8xf32>
    %8 = arith.select %5, %3, %7 : vector<128x8xi1>, vector<128x8xf32>
    %9 = arith.truncf %8 : vector<128x8xf32> to vector<128x8xbf16>
    %c0_6 = arith.constant 0 : index
    %c0_7 = arith.constant 0 : index
    %c0_8 = arith.constant 0 : index
    %10 = vector.load %arg3[%c0_6, %c0_7, %c0_8] : memref<1x128x8xbf16, #tpu.memory_space<vmem>>, vector<1x128x8xbf16>
    %11 = vector.shape_cast %10 : vector<1x128x8xbf16> to vector<128x8xbf16>
    %12 = vector.shape_cast %9 : vector<128x8xbf16> to vector<1x128x8xbf16>
    tpu.vector_store %arg3[%c0_6, %c0_7, %c0_8], %12 {strides = array<i32>} : memref<1x128x8xbf16, #tpu.memory_space<vmem>>, vector<1x128x8xbf16>,
    return
  }
  func.func @transform_0(%arg0: i32) -> (i32, i32, i32) {
    %c0_i32 = arith.constant 0 : i32
    %c0_i32_0 = arith.constant 0 : i32
    %c0_i32_1 = arith.constant 0 : i32
    return %arg0, %c0_i32, %c0_i32_0 : i32, i32, i32
  }
  func.func @transform_1(%arg0: i32) -> (i32, i32) {
    %c0_i32 = arith.constant 0 : i32
    %c0_i32_0 = arith.constant 0 : i32
    %c0_i32_1 = arith.constant 0 : i32
    return %c0_i32, %c0_i32_0 : i32, i32
  }
  func.func @transform_2(%arg0: i32) -> (i32, i32, i32) {
    %c0_i32 = arith.constant 0 : i32
    %c0_i32_0 = arith.constant 0 : i32
    %c0_i32_1 = arith.constant 0 : i32
    return %arg0, %c0_i32, %c0_i32_0 : i32, i32, i32
  }
}

module attributes {stable_mosaic.version = 11 : i64} {
  func.func @_dw_kernel(%arg0: i32, %arg1: memref<1x64x31xbf16, #tpu.memory_space<vmem>>, %arg2: memref<31x4xbf16, #tpu.memory_space<vmem>>, %arg3: memref<1x64x4xbf16, #tpu.memory_space<vmem>>) attributes {dimension_semantics = [#tpu.dimension_semantics<parallel>], iteration_bounds = array<i64: 2>, scalar_prefetch = 0 : i64, scratch_operands = 0 : i64, tpu.core_type = #tpu.core_type<tc>, window_params = [{transform_indices = @transform_0, window_bounds = array<i64: 1, 64, 31>}, {pipeline_mode = #tpu.pipeline_mode<synchronous>, transform_indices = @transform_1, window_bounds = array<i64: 31, 4>}, {transform_indices = @transform_2, window_bounds = array<i64: 1, 64, 4>}]} {
    %c0 = arith.constant 0 : index
    %c0_0 = arith.constant 0 : index
    %c0_1 = arith.constant 0 : index
    %0 = vector.load %arg1[%c0, %c0_0, %c0_1] : memref<1x64x31xbf16, #tpu.memory_space<vmem>>, vector<1x64x31xbf16>
    %1 = vector.shape_cast %0 : vector<1x64x31xbf16> to vector<64x31xbf16>
    %c0_2 = arith.constant 0 : index
    %c0_3 = arith.constant 0 : index
    %2 = vector.load %arg2[%c0_2, %c0_3] : memref<31x4xbf16, #tpu.memory_space<vmem>>, vector<31x4xbf16>
    %cst = arith.constant dense<0.000000e+00> : vector<64x4xf32>
    %3 = tpu.matmul %1, %2, %cst {dimension_numbers = #tpu.dot_dimension_numbers<[1], [0], [0], [1], [0, 0, 1, 1], [], []>} : vector<64x31xbf16>, vector<31x4xbf16>, vector<64x4xf32> -> vector<64x4xf32>
    %cst_4 = arith.constant 0.000000e+00 : f32
    %4 = vector.broadcast %cst_4 : f32 to vector<64x4xf32>
    %5 = arith.cmpf oge, %3, %4 : vector<64x4xf32>
    %cst_5 = arith.constant 0.00999999977 : f32
    %6 = vector.broadcast %cst_5 : f32 to vector<64x4xf32>
    %7 = arith.mulf %6, %3 : vector<64x4xf32>
    %8 = arith.select %5, %3, %7 : vector<64x4xi1>, vector<64x4xf32>
    %9 = arith.truncf %8 : vector<64x4xf32> to vector<64x4xbf16>
    %c0_6 = arith.constant 0 : index
    %c0_7 = arith.constant 0 : index
    %c0_8 = arith.constant 0 : index
    %10 = vector.load %arg3[%c0_6, %c0_7, %c0_8] : memref<1x64x4xbf16, #tpu.memory_space<vmem>>, vector<1x64x4xbf16>
    %11 = vector.shape_cast %10 : vector<1x64x4xbf16> to vector<64x4xbf16>
    %12 = vector.shape_cast %9 : vector<64x4xbf16> to vector<1x64x4xbf16>
    tpu.vector_store %arg3[%c0_6, %c0_7, %c0_8], %12 {strides = array<i32>} : memref<1x64x4xbf16, #tpu.memory_space<vmem>>, vector<1x64x4xbf16>,
    return
  }
  func.func @transform_0(%arg0: i32) -> (i32, i32, i32) {
    %c0_i32 = arith.constant 0 : i32
    %c0_i32_0 = arith.constant 0 : i32
    %c0_i32_1 = arith.constant 0 : i32
    return %arg0, %c0_i32, %c0_i32_0 : i32, i32, i32
  }
  func.func @transform_1(%arg0: i32) -> (i32, i32) {
    %c0_i32 = arith.constant 0 : i32
    %c0_i32_0 = arith.constant 0 : i32
    %c0_i32_1 = arith.constant 0 : i32
    return %c0_i32, %c0_i32_0 : i32, i32
  }
  func.func @transform_2(%arg0: i32) -> (i32, i32, i32) {
    %c0_i32 = arith.constant 0 : i32
    %c0_i32_0 = arith.constant 0 : i32
    %c0_i32_1 = arith.constant 0 : i32
    return %arg0, %c0_i32, %c0_i32_0 : i32, i32, i32
  }
}

module attributes {stable_mosaic.version = 11 : i64} {
  func.func @_dw_kernel(%arg0: i32, %arg1: memref<1x32x19xbf16, #tpu.memory_space<vmem>>, %arg2: memref<19x2xbf16, #tpu.memory_space<vmem>>, %arg3: memref<1x32x2xbf16, #tpu.memory_space<vmem>>) attributes {dimension_semantics = [#tpu.dimension_semantics<parallel>], iteration_bounds = array<i64: 2>, scalar_prefetch = 0 : i64, scratch_operands = 0 : i64, tpu.core_type = #tpu.core_type<tc>, window_params = [{transform_indices = @transform_0, window_bounds = array<i64: 1, 32, 19>}, {pipeline_mode = #tpu.pipeline_mode<synchronous>, transform_indices = @transform_1, window_bounds = array<i64: 19, 2>}, {transform_indices = @transform_2, window_bounds = array<i64: 1, 32, 2>}]} {
    %c0 = arith.constant 0 : index
    %c0_0 = arith.constant 0 : index
    %c0_1 = arith.constant 0 : index
    %0 = vector.load %arg1[%c0, %c0_0, %c0_1] : memref<1x32x19xbf16, #tpu.memory_space<vmem>>, vector<1x32x19xbf16>
    %1 = vector.shape_cast %0 : vector<1x32x19xbf16> to vector<32x19xbf16>
    %c0_2 = arith.constant 0 : index
    %c0_3 = arith.constant 0 : index
    %2 = vector.load %arg2[%c0_2, %c0_3] : memref<19x2xbf16, #tpu.memory_space<vmem>>, vector<19x2xbf16>
    %cst = arith.constant dense<0.000000e+00> : vector<32x2xf32>
    %3 = tpu.matmul %1, %2, %cst {dimension_numbers = #tpu.dot_dimension_numbers<[1], [0], [0], [1], [0, 0, 1, 1], [], []>} : vector<32x19xbf16>, vector<19x2xbf16>, vector<32x2xf32> -> vector<32x2xf32>
    %cst_4 = arith.constant 0.000000e+00 : f32
    %4 = vector.broadcast %cst_4 : f32 to vector<32x2xf32>
    %5 = arith.cmpf oge, %3, %4 : vector<32x2xf32>
    %cst_5 = arith.constant 0.00999999977 : f32
    %6 = vector.broadcast %cst_5 : f32 to vector<32x2xf32>
    %7 = arith.mulf %6, %3 : vector<32x2xf32>
    %8 = arith.select %5, %3, %7 : vector<32x2xi1>, vector<32x2xf32>
    %9 = arith.truncf %8 : vector<32x2xf32> to vector<32x2xbf16>
    %c0_6 = arith.constant 0 : index
    %c0_7 = arith.constant 0 : index
    %c0_8 = arith.constant 0 : index
    %10 = vector.load %arg3[%c0_6, %c0_7, %c0_8] : memref<1x32x2xbf16, #tpu.memory_space<vmem>>, vector<1x32x2xbf16>
    %11 = vector.shape_cast %10 : vector<1x32x2xbf16> to vector<32x2xbf16>
    %12 = vector.shape_cast %9 : vector<32x2xbf16> to vector<1x32x2xbf16>
    tpu.vector_store %arg3[%c0_6, %c0_7, %c0_8], %12 {strides = array<i32>} : memref<1x32x2xbf16, #tpu.memory_space<vmem>>, vector<1x32x2xbf16>,
    return
  }
  func.func @transform_0(%arg0: i32) -> (i32, i32, i32) {
    %c0_i32 = arith.constant 0 : i32
    %c0_i32_0 = arith.constant 0 : i32
    %c0_i32_1 = arith.constant 0 : i32
    return %arg0, %c0_i32, %c0_i32_0 : i32, i32, i32
  }
  func.func @transform_1(%arg0: i32) -> (i32, i32) {
    %c0_i32 = arith.constant 0 : i32
    %c0_i32_0 = arith.constant 0 : i32
    %c0_i32_1 = arith.constant 0 : i32
    return %c0_i32, %c0_i32_0 : i32, i32
  }
  func.func @transform_2(%arg0: i32) -> (i32, i32, i32) {
    %c0_i32 = arith.constant 0 : i32
    %c0_i32_0 = arith.constant 0 : i32
    %c0_i32_1 = arith.constant 0 : i32
    return %arg0, %c0_i32, %c0_i32_0 : i32, i32, i32
  }
}

module attributes {stable_mosaic.version = 11 : i64} {
  func.func @kernel_b(%arg0: i32, %arg1: i32, %arg2: memref<1x16x256xbf16, #tpu.memory_space<vmem>>, %arg3: memref<4x256xbf16, #tpu.memory_space<vmem>>, %arg4: memref<1x16x4xbf16, #tpu.memory_space<vmem>>, %arg5: memref<1x8x4xf32, #tpu.memory_space<vmem>>, %arg6: memref<4x16xbf16, #tpu.memory_space<vmem>>, %arg7: memref<16x8xbf16, #tpu.memory_space<vmem>>, %arg8: memref<16x16xbf16, #tpu.memory_space<vmem>>, %arg9: memref<16x16xbf16, #tpu.memory_space<vmem>>, %arg10: memref<36x1xf32, #tpu.memory_space<vmem>>, %arg11: memref<1xf32, #tpu.memory_space<smem>>, %arg12: memref<1x16x256xbf16, #tpu.memory_space<vmem>>) attributes {dimension_semantics = [#tpu.dimension_semantics<parallel>, #tpu.dimension_semantics<parallel>], iteration_bounds = array<i64: 2, 1>, scalar_prefetch = 0 : i64, scratch_operands = 0 : i64, tpu.core_type = #tpu.core_type<tc>, window_params = [{transform_indices = @transform_0, window_bounds = array<i64: 1, 16, 256>}, {transform_indices = @transform_1, window_bounds = array<i64: 4, 256>}, {transform_indices = @transform_2, window_bounds = array<i64: 1, 16, 4>}, {transform_indices = @transform_3, window_bounds = array<i64: 1, 8, 4>}, {pipeline_mode = #tpu.pipeline_mode<synchronous>, transform_indices = @transform_4, window_bounds = array<i64: 4, 16>}, {pipeline_mode = #tpu.pipeline_mode<synchronous>, transform_indices = @transform_5, window_bounds = array<i64: 16, 8>}, {pipeline_mode = #tpu.pipeline_mode<synchronous>, transform_indices = @transform_6, window_bounds = array<i64: 16, 16>}, {pipeline_mode = #tpu.pipeline_mode<synchronous>, transform_indices = @transform_7, window_bounds = array<i64: 16, 16>}, {pipeline_mode = #tpu.pipeline_mode<synchronous>, transform_indices = @transform_8, window_bounds = array<i64: 36, 1>}, {transform_indices = @transform_9, window_bounds = array<i64: 1>}, {transform_indices = @transform_10, window_bounds = array<i64: 1, 16, 256>}]} {
    %c0 = arith.constant 0 : index
    %c0_0 = arith.constant 0 : index
    %c0_1 = arith.constant 0 : index
    %0 = vector.load %arg2[%c0, %c0_0, %c0_1] : memref<1x16x256xbf16, #tpu.memory_space<vmem>>, vector<1x16x256xbf16>
    %1 = vector.shape_cast %0 : vector<1x16x256xbf16> to vector<16x256xbf16>
    %2 = arith.extf %1 : vector<16x256xbf16> to vector<16x256xf32>
    %c0_2 = arith.constant 0 : index
    %c0_3 = arith.constant 0 : index
    %c0_4 = arith.constant 0 : index
    %3 = vector.load %arg4[%c0_2, %c0_3, %c0_4] : memref<1x16x4xbf16, #tpu.memory_space<vmem>>, vector<1x16x4xbf16>
    %4 = vector.shape_cast %3 : vector<1x16x4xbf16> to vector<16x4xbf16>
    %c0_5 = arith.constant 0 : index
    %c0_6 = arith.constant 0 : index
    %5 = vector.load %arg3[%c0_5, %c0_6] : memref<4x256xbf16, #tpu.memory_space<vmem>>, vector<4x256xbf16>
    %cst = arith.constant dense<0.000000e+00> : vector<16x256xf32>
    %6 = tpu.matmul %4, %5, %cst {dimension_numbers = #tpu.dot_dimension_numbers<[1], [0], [0], [1], [0, 0, 1, 1], [], []>} : vector<16x4xbf16>, vector<4x256xbf16>, vector<16x256xf32> -> vector<16x256xf32>
    %7 = arith.mulf %2, %6 : vector<16x256xf32>
    %8 = arith.addf %7, %2 : vector<16x256xf32>
    %c0_7 = arith.constant 0 : index
    %c0_8 = arith.constant 0 : index
    %9 = vector.load %arg6[%c0_7, %c0_8] : memref<4x16xbf16, #tpu.memory_space<vmem>>, vector<4x16xbf16>
    %cst_9 = arith.constant dense<0.000000e+00> : vector<4x256xf32>
    %10 = tpu.matmul %9, %1, %cst_9 {dimension_numbers = #tpu.dot_dimension_numbers<[1], [0], [0], [1], [0, 0, 1, 1], [], []>} : vector<4x16xbf16>, vector<16x256xbf16>, vector<4x256xf32> -> vector<4x256xf32>
    %c0_10 = arith.constant 0 : index
    %c0_11 = arith.constant 0 : index
    %11 = vector.load %arg10[%c0_10, %c0_11] : memref<36x1xf32, #tpu.memory_space<vmem>>, vector<4x1xf32>
    %12 = vector.broadcast %11 : vector<4x1xf32> to vector<4x256xf32>
    %13 = arith.addf %10, %12 : vector<4x256xf32>
    %cst_12 = arith.constant 0.000000e+00 : f32
    %14 = vector.broadcast %cst_12 : f32 to vector<4x256xf32>
    %15 = arith.cmpf oge, %13, %14 : vector<4x256xf32>
    %cst_13 = arith.constant 0.00999999977 : f32
    %16 = vector.broadcast %cst_13 : f32 to vector<4x256xf32>
    %17 = arith.mulf %16, %13 : vector<4x256xf32>
    %18 = arith.select %15, %13, %17 : vector<4x256xi1>, vector<4x256xf32>
    %c0_14 = arith.constant 0 : index
    %c0_15 = arith.constant 0 : index
    %c0_16 = arith.constant 0 : index
    %19 = vector.load %arg5[%c0_14, %c0_15, %c0_16] : memref<1x8x4xf32, #tpu.memory_space<vmem>>, vector<1x8x4xf32>
    %20 = vector.shape_cast %19 : vector<1x8x4xf32> to vector<8x4xf32>
    %21 = arith.truncf %20 : vector<8x4xf32> to vector<8x4xbf16>
    %22 = arith.truncf %18 : vector<4x256xf32> to vector<4x256xbf16>
    %cst_17 = arith.constant dense<0.000000e+00> : vector<8x256xf32>
    %23 = tpu.matmul %21, %22, %cst_17 {dimension_numbers = #tpu.dot_dimension_numbers<[1], [0], [0], [1], [0, 0, 1, 1], [], []>} : vector<8x4xbf16>, vector<4x256xbf16>, vector<8x256xf32> -> vector<8x256xf32>
    %c0_18 = arith.constant 0 : index
    %c0_19 = arith.constant 0 : index
    %24 = vector.load %arg7[%c0_18, %c0_19] : memref<16x8xbf16, #tpu.memory_space<vmem>>, vector<16x8xbf16>
    %25 = arith.truncf %23 : vector<8x256xf32> to vector<8x256xbf16>
    %cst_20 = arith.constant dense<0.000000e+00> : vector<16x256xf32>
    %26 = tpu.matmul %24, %25, %cst_20 {dimension_numbers = #tpu.dot_dimension_numbers<[1], [0], [0], [1], [0, 0, 1, 1], [], []>} : vector<16x8xbf16>, vector<8x256xbf16>, vector<16x256xf32> -> vector<16x256xf32>
    %c4 = arith.constant 4 : index
    %c0_21 = arith.constant 0 : index
    %27 = vector.load %arg10[%c4, %c0_21] : memref<36x1xf32, #tpu.memory_space<vmem>>, vector<16x1xf32>
    %28 = vector.broadcast %27 : vector<16x1xf32> to vector<16x256xf32>
    %29 = arith.addf %26, %28 : vector<16x256xf32>
    %cst_22 = arith.constant 0.000000e+00 : f32
    %30 = vector.broadcast %cst_22 : f32 to vector<16x256xf32>
    %31 = arith.cmpf oge, %29, %30 : vector<16x256xf32>
    %cst_23 = arith.constant 0.00999999977 : f32
    %32 = vector.broadcast %cst_23 : f32 to vector<16x256xf32>
    %33 = arith.mulf %32, %29 : vector<16x256xf32>
    %34 = arith.select %31, %29, %33 : vector<16x256xi1>, vector<16x256xf32>
    %c0_24 = arith.constant 0 : index
    %35 = memref.load %arg11[%c0_24] : memref<1xf32, #tpu.memory_space<smem>>
    %36 = vector.broadcast %35 : f32 to vector<16x256xf32>
    %37 = arith.mulf %36, %34 : vector<16x256xf32>
    %38 = arith.addf %37, %2 : vector<16x256xf32>
    %c0_25 = arith.constant 0 : index
    %c0_26 = arith.constant 0 : index
    %39 = vector.load %arg8[%c0_25, %c0_26] : memref<16x16xbf16, #tpu.memory_space<vmem>>, vector<16x16xbf16>
    %40 = arith.truncf %8 : vector<16x256xf32> to vector<16x256xbf16>
    %cst_27 = arith.constant dense<0.000000e+00> : vector<16x256xf32>
    %41 = tpu.matmul %39, %40, %cst_27 {dimension_numbers = #tpu.dot_dimension_numbers<[1], [0], [0], [1], [0, 0, 1, 1], [], []>} : vector<16x16xbf16>, vector<16x256xbf16>, vector<16x256xf32> -> vector<16x256xf32>
    %c0_28 = arith.constant 0 : index
    %c0_29 = arith.constant 0 : index
    %42 = vector.load %arg9[%c0_28, %c0_29] : memref<16x16xbf16, #tpu.memory_space<vmem>>, vector<16x16xbf16>
    %43 = arith.truncf %38 : vector<16x256xf32> to vector<16x256xbf16>
    %cst_30 = arith.constant dense<0.000000e+00> : vector<16x256xf32>
    %44 = tpu.matmul %42, %43, %cst_30 {dimension_numbers = #tpu.dot_dimension_numbers<[1], [0], [0], [1], [0, 0, 1, 1], [], []>} : vector<16x16xbf16>, vector<16x256xbf16>, vector<16x256xf32> -> vector<16x256xf32>
    %45 = arith.addf %41, %44 : vector<16x256xf32>
    %c20 = arith.constant 20 : index
    %c0_31 = arith.constant 0 : index
    %46 = vector.load %arg10[%c20, %c0_31] : memref<36x1xf32, #tpu.memory_space<vmem>>, vector<16x1xf32>
    %47 = vector.broadcast %46 : vector<16x1xf32> to vector<16x256xf32>
    %48 = arith.addf %45, %47 : vector<16x256xf32>
    %cst_32 = arith.constant 0.000000e+00 : f32
    %49 = vector.broadcast %cst_32 : f32 to vector<16x256xf32>
    %50 = arith.cmpf oge, %48, %49 : vector<16x256xf32>
    %cst_33 = arith.constant 0.00999999977 : f32
    %51 = vector.broadcast %cst_33 : f32 to vector<16x256xf32>
    %52 = arith.mulf %51, %48 : vector<16x256xf32>
    %53 = arith.select %50, %48, %52 : vector<16x256xi1>, vector<16x256xf32>
    %54 = arith.truncf %53 : vector<16x256xf32> to vector<16x256xbf16>
    %c0_34 = arith.constant 0 : index
    %c0_35 = arith.constant 0 : index
    %c0_36 = arith.constant 0 : index
    %55 = vector.load %arg12[%c0_34, %c0_35, %c0_36] : memref<1x16x256xbf16, #tpu.memory_space<vmem>>, vector<1x16x256xbf16>
    %56 = vector.shape_cast %55 : vector<1x16x256xbf16> to vector<16x256xbf16>
    %57 = vector.shape_cast %54 : vector<16x256xbf16> to vector<1x16x256xbf16>
    tpu.vector_store %arg12[%c0_34, %c0_35, %c0_36], %57 {strides = array<i32>} : memref<1x16x256xbf16, #tpu.memory_space<vmem>>, vector<1x16x256xbf16>,
    return
  }
  func.func @transform_0(%arg0: i32, %arg1: i32) -> (i32, i32, i32) {
    %c0_i32 = arith.constant 0 : i32
    %c0_i32_0 = arith.constant 0 : i32
    return %arg0, %c0_i32, %arg1 : i32, i32, i32
  }
  func.func @transform_1(%arg0: i32, %arg1: i32) -> (i32, i32) {
    %c0_i32 = arith.constant 0 : i32
    %c0_i32_0 = arith.constant 0 : i32
    return %c0_i32, %arg1 : i32, i32
  }
  func.func @transform_2(%arg0: i32, %arg1: i32) -> (i32, i32, i32) {
    %c0_i32 = arith.constant 0 : i32
    %c0_i32_0 = arith.constant 0 : i32
    %c0_i32_1 = arith.constant 0 : i32
    return %arg0, %c0_i32, %c0_i32_0 : i32, i32, i32
  }
  func.func @transform_3(%arg0: i32, %arg1: i32) -> (i32, i32, i32) {
    %c0_i32 = arith.constant 0 : i32
    %c0_i32_0 = arith.constant 0 : i32
    %c0_i32_1 = arith.constant 0 : i32
    return %arg0, %c0_i32, %c0_i32_0 : i32, i32, i32
  }
  func.func @transform_4(%arg0: i32, %arg1: i32) -> (i32, i32) {
    %c0_i32 = arith.constant 0 : i32
    %c0_i32_0 = arith.constant 0 : i32
    %c0_i32_1 = arith.constant 0 : i32
    return %c0_i32, %c0_i32_0 : i32, i32
  }
  func.func @transform_5(%arg0: i32, %arg1: i32) -> (i32, i32) {
    %c0_i32 = arith.constant 0 : i32
    %c0_i32_0 = arith.constant 0 : i32
    %c0_i32_1 = arith.constant 0 : i32
    return %c0_i32, %c0_i32_0 : i32, i32
  }
  func.func @transform_6(%arg0: i32, %arg1: i32) -> (i32, i32) {
    %c0_i32 = arith.constant 0 : i32
    %c0_i32_0 = arith.constant 0 : i32
    %c0_i32_1 = arith.constant 0 : i32
    return %c0_i32, %c0_i32_0 : i32, i32
  }
  func.func @transform_7(%arg0: i32, %arg1: i32) -> (i32, i32) {
    %c0_i32 = arith.constant 0 : i32
    %c0_i32_0 = arith.constant 0 : i32
    %c0_i32_1 = arith.constant 0 : i32
    return %c0_i32, %c0_i32_0 : i32, i32
  }
  func.func @transform_8(%arg0: i32, %arg1: i32) -> (i32, i32) {
    %c0_i32 = arith.constant 0 : i32
    %c0_i32_0 = arith.constant 0 : i32
    %c0_i32_1 = arith.constant 0 : i32
    return %c0_i32, %c0_i32_0 : i32, i32
  }
  func.func @transform_9(%arg0: i32, %arg1: i32) -> i32 {
    %c0_i32 = arith.constant 0 : i32
    %c0_i32_0 = arith.constant 0 : i32
    return %c0_i32 : i32
  }
  func.func @transform_10(%arg0: i32, %arg1: i32) -> (i32, i32, i32) {
    %c0_i32 = arith.constant 0 : i32
    %c0_i32_0 = arith.constant 0 : i32
    return %arg0, %c0_i32, %arg1 : i32, i32, i32
  }
}

module attributes {stable_mosaic.version = 11 : i64} {
  func.func @kernel_a(%arg0: i32, %arg1: i32, %arg2: memref<1x16x256xbf16, #tpu.memory_space<vmem>>, %arg3: memref<1x16x4xbf16, #tpu.memory_space<vmem>>, %arg4: memref<24x16xbf16, #tpu.memory_space<vmem>>, %arg5: memref<8x8xf32, #tpu.memory_space<vmem>>, %arg6: memref<16x8xbf16, #tpu.memory_space<vmem>>, %arg7: memref<12x16xbf16, #tpu.memory_space<vmem>>, %arg8: memref<4x4xf32, #tpu.memory_space<vmem>>, %arg9: memref<8x8xf32, #tpu.memory_space<vmem>>, %arg10: memref<72x1xf32, #tpu.memory_space<vmem>>, %arg11: memref<1xf32, #tpu.memory_space<smem>>, %arg12: memref<1x16x4xbf16, #tpu.memory_space<vmem>>, %arg13: memref<1x8x4xf32, #tpu.memory_space<vmem>>, %arg14: memref<8x4xf32, #tpu.memory_space<vmem>>) attributes {dimension_semantics = [#tpu.dimension_semantics<parallel>, #tpu.dimension_semantics<arbitrary>], iteration_bounds = array<i64: 2, 1>, scalar_prefetch = 0 : i64, scratch_operands = 1 : i64, tpu.core_type = #tpu.core_type<tc>, window_params = [{transform_indices = @transform_0, window_bounds = array<i64: 1, 16, 256>}, {transform_indices = @transform_1, window_bounds = array<i64: 1, 16, 4>}, {pipeline_mode = #tpu.pipeline_mode<synchronous>, transform_indices = @transform_2, window_bounds = array<i64: 24, 16>}, {pipeline_mode = #tpu.pipeline_mode<synchronous>, transform_indices = @transform_3, window_bounds = array<i64: 8, 8>}, {pipeline_mode = #tpu.pipeline_mode<synchronous>, transform_indices = @transform_4, window_bounds = array<i64: 16, 8>}, {pipeline_mode = #tpu.pipeline_mode<synchronous>, transform_indices = @transform_5, window_bounds = array<i64: 12, 16>}, {pipeline_mode = #tpu.pipeline_mode<synchronous>, transform_indices = @transform_6, window_bounds = array<i64: 4, 4>}, {pipeline_mode = #tpu.pipeline_mode<synchronous>, transform_indices = @transform_7, window_bounds = array<i64: 8, 8>}, {pipeline_mode = #tpu.pipeline_mode<synchronous>, transform_indices = @transform_8, window_bounds = array<i64: 72, 1>}, {transform_indices = @transform_9, window_bounds = array<i64: 1>}, {transform_indices = @transform_10, window_bounds = array<i64: 1, 16, 4>}, {transform_indices = @transform_11, window_bounds = array<i64: 1, 8, 4>}]} {
    %c0_i32 = arith.constant 0 : i32
    %0 = arith.cmpi eq, %arg1, %c0_i32 : i32
    %1 = arith.extui %0 : i1 to i32
    %c0_i32_0 = arith.constant 0 : i32
    %2 = arith.cmpi ne, %1, %c0_i32_0 : i32
    scf.if %2 {
      %cst_15 = arith.constant 0.000000e+00 : f32
      %26 = vector.broadcast %cst_15 : f32 to vector<8x4xf32>
      %c0_16 = arith.constant 0 : index
      %c0_17 = arith.constant 0 : index
      %27 = vector.load %arg14[%c0_16, %c0_17] : memref<8x4xf32, #tpu.memory_space<vmem>>, vector<8x4xf32>
      tpu.vector_store %arg14[%c0_16, %c0_17], %26 {strides = array<i32>} : memref<8x4xf32, #tpu.memory_space<vmem>>, vector<8x4xf32>,
    } else {
    }
    %c0 = arith.constant 0 : index
    %c0_1 = arith.constant 0 : index
    %c0_2 = arith.constant 0 : index
    %3 = vector.load %arg2[%c0, %c0_1, %c0_2] : memref<1x16x256xbf16, #tpu.memory_space<vmem>>, vector<1x16x256xbf16>
    %4 = vector.shape_cast %3 : vector<1x16x256xbf16> to vector<16x256xbf16>
    %c0_3 = arith.constant 0 : index
    %c0_4 = arith.constant 0 : index
    %5 = vector.load %arg7[%c0_3, %c0_4] : memref<12x16xbf16, #tpu.memory_space<vmem>>, vector<12x16xbf16>
    %cst = arith.constant dense<0.000000e+00> : vector<12x256xf32>
    %6 = tpu.matmul %5, %4, %cst {dimension_numbers = #tpu.dot_dimension_numbers<[1], [0], [0], [1], [0, 0, 1, 1], [], []>} : vector<12x16xbf16>, vector<16x256xbf16>, vector<12x256xf32> -> vector<12x256xf32>
    %c48 = arith.constant 48 : index
    %c0_5 = arith.constant 0 : index
    %7 = vector.load %arg10[%c48, %c0_5] : memref<72x1xf32, #tpu.memory_space<vmem>>, vector<12x1xf32>
    %8 = vector.broadcast %7 : vector<12x1xf32> to vector<12x256xf32>
    %9 = arith.addf %6, %8 : vector<12x256xf32>
    %cst_6 = arith.constant 0.000000e+00 : f32
    %10 = vector.broadcast %cst_6 : f32 to vector<12x256xf32>
    %11 = arith.cmpf oge, %9, %10 : vector<12x256xf32>
    %cst_7 = arith.constant 0.00999999977 : f32
    %12 = vector.broadcast %cst_7 : f32 to vector<12x256xf32>
    %13 = arith.mulf %12, %9 : vector<12x256xf32>
    %14 = arith.select %11, %9, %13 : vector<12x256xi1>, vector<12x256xf32>
    %15 = vector.extract_strided_slice %14 {offsets = [0, 0], sizes = [8, 256], strides = [1, 1]} : vector<12x256xf32> to vector<8x256xf32>
    %16 = arith.truncf %15 : vector<8x256xf32> to vector<8x256xbf16>
    %17 = vector.extract_strided_slice %14 {offsets = [8, 0], sizes = [4, 256], strides = [1, 1]} : vector<12x256xf32> to vector<4x256xf32>
    %18 = arith.truncf %17 : vector<4x256xf32> to vector<4x256xbf16>
    %c0_8 = arith.constant 0 : index
    %c0_9 = arith.constant 0 : index
    %19 = vector.load %arg14[%c0_8, %c0_9] : memref<8x4xf32, #tpu.memory_space<vmem>>, vector<8x4xf32>
    %cst_10 = arith.constant dense<0.000000e+00> : vector<8x4xf32>
    %20 = tpu.matmul %16, %18, %cst_10 {dimension_numbers = #tpu.dot_dimension_numbers<[1], [1], [0], [0], [0, 0, 1, 0], [], []>} : vector<8x256xbf16>, vector<4x256xbf16>, vector<8x4xf32> -> vector<8x4xf32>
    %21 = arith.addf %19, %20 : vector<8x4xf32>
    %c0_11 = arith.constant 0 : index
    %c0_12 = arith.constant 0 : index
    %22 = vector.load %arg14[%c0_11, %c0_12] : memref<8x4xf32, #tpu.memory_space<vmem>>, vector<8x4xf32>
    tpu.vector_store %arg14[%c0_11, %c0_12], %21 {strides = array<i32>} : memref<8x4xf32, #tpu.memory_space<vmem>>, vector<8x4xf32>,
    %c0_i32_13 = arith.constant 0 : i32
    %23 = arith.cmpi eq, %arg1, %c0_i32_13 : i32
    %24 = arith.extui %23 : i1 to i32
    %c0_i32_14 = arith.constant 0 : i32
    %25 = arith.cmpi ne, %24, %c0_i32_14 : i32
    scf.if %25 {
      %c0_15 = arith.constant 0 : index
      %c0_16 = arith.constant 0 : index
      %c0_17 = arith.constant 0 : index
      %26 = vector.load %arg3[%c0_15, %c0_16, %c0_17] : memref<1x16x4xbf16, #tpu.memory_space<vmem>>, vector<1x16x4xbf16>
      %27 = vector.shape_cast %26 : vector<1x16x4xbf16> to vector<16x4xbf16>
      %c0_18 = arith.constant 0 : index
      %c0_19 = arith.constant 0 : index
      %28 = vector.load %arg4[%c0_18, %c0_19] : memref<24x16xbf16, #tpu.memory_space<vmem>>, vector<24x16xbf16>
      %cst_20 = arith.constant dense<0.000000e+00> : vector<24x4xf32>
      %29 = tpu.matmul %28, %27, %cst_20 {dimension_numbers = #tpu.dot_dimension_numbers<[1], [0], [0], [1], [0, 0, 1, 1], [], []>} : vector<24x16xbf16>, vector<16x4xbf16>, vector<24x4xf32> -> vector<24x4xf32>
      %c0_21 = arith.constant 0 : index
      %c0_22 = arith.constant 0 : index
      %30 = vector.load %arg10[%c0_21, %c0_22] : memref<72x1xf32, #tpu.memory_space<vmem>>, vector<24x1xf32>
      %31 = vector.broadcast %30 : vector<24x1xf32> to vector<24x4xf32>
      %32 = arith.addf %29, %31 : vector<24x4xf32>
      %33 = vector.extract_strided_slice %32 {offsets = [0, 0], sizes = [8, 4], strides = [1, 1]} : vector<24x4xf32> to vector<8x4xf32>
      %34 = vector.extract_strided_slice %32 {offsets = [8, 0], sizes = [8, 4], strides = [1, 1]} : vector<24x4xf32> to vector<8x4xf32>
      %35 = vector.extract_strided_slice %32 {offsets = [16, 0], sizes = [8, 4], strides = [1, 1]} : vector<24x4xf32> to vector<8x4xf32>
      %cst_23 = arith.constant dense<0.000000e+00> : vector<8x8xf32>
      %36 = tpu.matmul %34, %35, %cst_23 {dimension_numbers = #tpu.dot_dimension_numbers<[1], [1], [0], [0], [0, 0, 1, 0], [], []>} : vector<8x4xf32>, vector<8x4xf32>, vector<8x8xf32> -> vector<8x8xf32>
      %cst_24 = arith.constant dense<0xFF800000> : vector<8xf32>
      %37 = vector.multi_reduction <maximumf>, %36, %cst_24 [0] : vector<8x8xf32> to vector<8xf32>
      %38 = vector.shape_cast %37 : vector<8xf32> to vector<1x8xf32>
      %39 = vector.broadcast %38 : vector<1x8xf32> to vector<8x8xf32>
      %40 = arith.subf %36, %39 : vector<8x8xf32>
      %41 = math.exp %40 : vector<8x8xf32>
      %cst_25 = arith.constant dense<0.000000e+00> : vector<8xf32>
      %42 = vector.multi_reduction <add>, %41, %cst_25 [0] : vector<8x8xf32> to vector<8xf32>
      %43 = vector.shape_cast %42 : vector<8xf32> to vector<1x8xf32>
      %44 = vector.broadcast %43 : vector<1x8xf32> to vector<8x8xf32>
      %45 = arith.divf %41, %44 : vector<8x8xf32>
      %cst_26 = arith.constant dense<0.000000e+00> : vector<8x4xf32>
      %46 = tpu.matmul %45, %33, %cst_26 {dimension_numbers = #tpu.dot_dimension_numbers<[1], [0], [0], [1], [0, 0, 1, 1], [], []>} : vector<8x8xf32>, vector<8x4xf32>, vector<8x4xf32> -> vector<8x4xf32>
      %c0_27 = arith.constant 0 : index
      %c0_28 = arith.constant 0 : index
      %47 = vector.load %arg5[%c0_27, %c0_28] : memref<8x8xf32, #tpu.memory_space<vmem>>, vector<8x8xf32>
      %cst_29 = arith.constant dense<0.000000e+00> : vector<8x4xf32>
      %48 = tpu.matmul %47, %46, %cst_29 {dimension_numbers = #tpu.dot_dimension_numbers<[1], [0], [0], [1], [0, 0, 1, 1], [], []>} : vector<8x8xf32>, vector<8x4xf32>, vector<8x4xf32> -> vector<8x4xf32>
      %c24 = arith.constant 24 : index
      %c0_30 = arith.constant 0 : index
      %49 = vector.load %arg10[%c24, %c0_30] : memref<72x1xf32, #tpu.memory_space<vmem>>, vector<8x1xf32>
      %50 = vector.broadcast %49 : vector<8x1xf32> to vector<8x4xf32>
      %51 = arith.addf %48, %50 : vector<8x4xf32>
      %c0_31 = arith.constant 0 : index
      %c0_32 = arith.constant 0 : index
      %52 = vector.load %arg6[%c0_31, %c0_32] : memref<16x8xbf16, #tpu.memory_space<vmem>>, vector<16x8xbf16>
      %53 = arith.truncf %51 : vector<8x4xf32> to vector<8x4xbf16>
      %cst_33 = arith.constant dense<0.000000e+00> : vector<16x4xf32>
      %54 = tpu.matmul %52, %53, %cst_33 {dimension_numbers = #tpu.dot_dimension_numbers<[1], [0], [0], [1], [0, 0, 1, 1], [], []>} : vector<16x8xbf16>, vector<8x4xbf16>, vector<16x4xf32> -> vector<16x4xf32>
      %c32 = arith.constant 32 : index
      %c0_34 = arith.constant 0 : index
      %55 = vector.load %arg10[%c32, %c0_34] : memref<72x1xf32, #tpu.memory_space<vmem>>, vector<16x1xf32>
      %56 = vector.broadcast %55 : vector<16x1xf32> to vector<16x4xf32>
      %57 = arith.addf %54, %56 : vector<16x4xf32>
      %cst_35 = arith.constant 0.000000e+00 : f32
      %58 = vector.broadcast %cst_35 : f32 to vector<16x4xf32>
      %59 = arith.cmpf oge, %57, %58 : vector<16x4xf32>
      %cst_36 = arith.constant 0.00999999977 : f32
      %60 = vector.broadcast %cst_36 : f32 to vector<16x4xf32>
      %61 = arith.mulf %60, %57 : vector<16x4xf32>
      %62 = arith.select %59, %57, %61 : vector<16x4xi1>, vector<16x4xf32>
      %c0_37 = arith.constant 0 : index
      %63 = memref.load %arg11[%c0_37] : memref<1xf32, #tpu.memory_space<smem>>
      %64 = vector.broadcast %63 : f32 to vector<16x4xf32>
      %65 = arith.mulf %64, %62 : vector<16x4xf32>
      %66 = arith.extf %27 : vector<16x4xbf16> to vector<16x4xf32>
      %67 = arith.addf %65, %66 : vector<16x4xf32>
      %68 = arith.truncf %67 : vector<16x4xf32> to vector<16x4xbf16>
      %c0_38 = arith.constant 0 : index
      %c0_39 = arith.constant 0 : index
      %c0_40 = arith.constant 0 : index
      %69 = vector.load %arg12[%c0_38, %c0_39, %c0_40] : memref<1x16x4xbf16, #tpu.memory_space<vmem>>, vector<1x16x4xbf16>
      %70 = vector.shape_cast %69 : vector<1x16x4xbf16> to vector<16x4xbf16>
      %71 = vector.shape_cast %68 : vector<16x4xbf16> to vector<1x16x4xbf16>
      tpu.vector_store %arg12[%c0_38, %c0_39, %c0_40], %71 {strides = array<i32>} : memref<1x16x4xbf16, #tpu.memory_space<vmem>>, vector<1x16x4xbf16>,
      %c0_41 = arith.constant 0 : index
      %c0_42 = arith.constant 0 : index
      %72 = vector.load %arg14[%c0_41, %c0_42] : memref<8x4xf32, #tpu.memory_space<vmem>>, vector<8x4xf32>
      %c0_43 = arith.constant 0 : index
      %c0_44 = arith.constant 0 : index
      %73 = vector.load %arg8[%c0_43, %c0_44] : memref<4x4xf32, #tpu.memory_space<vmem>>, vector<4x4xf32>
      %cst_45 = arith.constant dense<0.000000e+00> : vector<4x8xf32>
      %74 = tpu.matmul %73, %72, %cst_45 {dimension_numbers = #tpu.dot_dimension_numbers<[1], [1], [0], [0], [0, 0, 1, 0], [], []>} : vector<4x4xf32>, vector<8x4xf32>, vector<4x8xf32> -> vector<4x8xf32>
      %c60 = arith.constant 60 : index
      %c0_46 = arith.constant 0 : index
      %75 = vector.load %arg10[%c60, %c0_46] : memref<72x1xf32, #tpu.memory_space<vmem>>, vector<4x1xf32>
      %76 = vector.broadcast %75 : vector<4x1xf32> to vector<4x8xf32>
      %77 = arith.addf %74, %76 : vector<4x8xf32>
      %c0_47 = arith.constant 0 : index
      %c0_48 = arith.constant 0 : index
      %78 = vector.load %arg9[%c0_47, %c0_48] : memref<8x8xf32, #tpu.memory_space<vmem>>, vector<8x8xf32>
      %cst_49 = arith.constant dense<0.000000e+00> : vector<8x4xf32>
      %79 = tpu.matmul %78, %77, %cst_49 {dimension_numbers = #tpu.dot_dimension_numbers<[1], [1], [0], [0], [0, 0, 1, 0], [], []>} : vector<8x8xf32>, vector<4x8xf32>, vector<8x4xf32> -> vector<8x4xf32>
      %c0_50 = arith.constant 0 : index
      %c0_51 = arith.constant 0 : index
      %80 = vector.load %arg9[%c0_50, %c0_51] : memref<8x8xf32, #tpu.memory_space<vmem>>, vector<8x8xf32>
      %cst_52 = arith.constant dense<0.000000e+00> : vector<8x4xf32>
      %81 = tpu.matmul %80, %72, %cst_52 {dimension_numbers = #tpu.dot_dimension_numbers<[1], [0], [0], [1], [0, 0, 1, 1], [], []>} : vector<8x8xf32>, vector<8x4xf32>, vector<8x4xf32> -> vector<8x4xf32>
      %82 = arith.addf %79, %81 : vector<8x4xf32>
      %c64 = arith.constant 64 : index
      %c0_53 = arith.constant 0 : index
      %83 = vector.load %arg10[%c64, %c0_53] : memref<72x1xf32, #tpu.memory_space<vmem>>, vector<8x1xf32>
      %84 = vector.broadcast %83 : vector<8x1xf32> to vector<8x4xf32>
      %85 = arith.addf %82, %84 : vector<8x4xf32>
      %c0_54 = arith.constant 0 : index
      %c0_55 = arith.constant 0 : index
      %c0_56 = arith.constant 0 : index
      %86 = vector.load %arg13[%c0_54, %c0_55, %c0_56] : memref<1x8x4xf32, #tpu.memory_space<vmem>>, vector<1x8x4xf32>
      %87 = vector.shape_cast %86 : vector<1x8x4xf32> to vector<8x4xf32>
      %88 = vector.shape_cast %85 : vector<8x4xf32> to vector<1x8x4xf32>
      tpu.vector_store %arg13[%c0_54, %c0_55, %c0_56], %88 {strides = array<i32>} : memref<1x8x4xf32, #tpu.memory_space<vmem>>, vector<1x8x4xf32>,
    } else {
    }
    return
  }
  func.func @transform_0(%arg0: i32, %arg1: i32) -> (i32, i32, i32) {
    %c0_i32 = arith.constant 0 : i32
    %c0_i32_0 = arith.constant 0 : i32
    return %arg0, %c0_i32, %arg1 : i32, i32, i32
  }
  func.func @transform_1(%arg0: i32, %arg1: i32) -> (i32, i32, i32) {
    %c0_i32 = arith.constant 0 : i32
    %c0_i32_0 = arith.constant 0 : i32
    %c0_i32_1 = arith.constant 0 : i32
    return %arg0, %c0_i32, %c0_i32_0 : i32, i32, i32
  }
  func.func @transform_2(%arg0: i32, %arg1: i32) -> (i32, i32) {
    %c0_i32 = arith.constant 0 : i32
    %c0_i32_0 = arith.constant 0 : i32
    %c0_i32_1 = arith.constant 0 : i32
    return %c0_i32, %c0_i32_0 : i32, i32
  }
  func.func @transform_3(%arg0: i32, %arg1: i32) -> (i32, i32) {
    %c0_i32 = arith.constant 0 : i32
    %c0_i32_0 = arith.constant 0 : i32
    %c0_i32_1 = arith.constant 0 : i32
    return %c0_i32, %c0_i32_0 : i32, i32
  }
  func.func @transform_4(%arg0: i32, %arg1: i32) -> (i32, i32) {
    %c0_i32 = arith.constant 0 : i32
    %c0_i32_0 = arith.constant 0 : i32
    %c0_i32_1 = arith.constant 0 : i32
    return %c0_i32, %c0_i32_0 : i32, i32
  }
  func.func @transform_5(%arg0: i32, %arg1: i32) -> (i32, i32) {
    %c0_i32 = arith.constant 0 : i32
    %c0_i32_0 = arith.constant 0 : i32
    %c0_i32_1 = arith.constant 0 : i32
    return %c0_i32, %c0_i32_0 : i32, i32
  }
  func.func @transform_6(%arg0: i32, %arg1: i32) -> (i32, i32) {
    %c0_i32 = arith.constant 0 : i32
    %c0_i32_0 = arith.constant 0 : i32
    %c0_i32_1 = arith.constant 0 : i32
    return %c0_i32, %c0_i32_0 : i32, i32
  }
  func.func @transform_7(%arg0: i32, %arg1: i32) -> (i32, i32) {
    %c0_i32 = arith.constant 0 : i32
    %c0_i32_0 = arith.constant 0 : i32
    %c0_i32_1 = arith.constant 0 : i32
    return %c0_i32, %c0_i32_0 : i32, i32
  }
  func.func @transform_8(%arg0: i32, %arg1: i32) -> (i32, i32) {
    %c0_i32 = arith.constant 0 : i32
    %c0_i32_0 = arith.constant 0 : i32
    %c0_i32_1 = arith.constant 0 : i32
    return %c0_i32, %c0_i32_0 : i32, i32
  }
  func.func @transform_9(%arg0: i32, %arg1: i32) -> i32 {
    %c0_i32 = arith.constant 0 : i32
    %c0_i32_0 = arith.constant 0 : i32
    return %c0_i32 : i32
  }
  func.func @transform_10(%arg0: i32, %arg1: i32) -> (i32, i32, i32) {
    %c0_i32 = arith.constant 0 : i32
    %c0_i32_0 = arith.constant 0 : i32
    %c0_i32_1 = arith.constant 0 : i32
    return %arg0, %c0_i32, %c0_i32_0 : i32, i32, i32
  }
  func.func @transform_11(%arg0: i32, %arg1: i32) -> (i32, i32, i32) {
    %c0_i32 = arith.constant 0 : i32
    %c0_i32_0 = arith.constant 0 : i32
    %c0_i32_1 = arith.constant 0 : i32
    return %arg0, %c0_i32, %c0_i32_0 : i32, i32, i32
  }
}

</mosaic_0001>

<llo_original>
// kernel: ddual_gcn_forward.5
$region0: #{ddual_gcn_forward.5}
  #allocation0 [shape = 'u32[]', space=smem, size = 0x4, offset = 0x4, fixed_abs, tag = 'smem constant byte address 0x4 - core index']
  #allocation1 [shape = 'u32[72,128]{1,0:T(1,128)}', space=vmem, size = 0x9000, scoped, tag = 'internal scratch']
  %s0 = inlined_call_operand.vmem [shape: bf16[2,128,55], index: 0, kind: input, shape index: {}]
  %s1 = inlined_call_operand.vmem [shape: bf16[55,8], index: 1, kind: input, shape index: {}]
  %s2 = inlined_call_operand.vmem [shape: bf16[2,128,8], index: 2, kind: output, shape index: {}]
  %s3 = sld [smem:[#allocation0]]
  $region41: #{ddual_gcn_forward.5} parent=0
    _
  %s5 = ssub.s32 1, %s3
  %s6 = scalar_select 0, %s5, %s3
  loop: start=0, step=1, limit=4
  $region2: #{ddual_gcn_forward.5} parent=0 // loop_pre_header
    _
  $region3: #{ddual_gcn_forward.5} parent=0 // loop_header
    %s8 = sphi 0, %s12
    %p9 = scmp.ge.s32.totalorder %s8, 4
    %s18 = sphi 0, %s20
    %s21 = sphi 0, %s18
    %s22 = sphi 0, %s21
    %s38 = sphi 0, %s22
    %s42 = sphi 0, %s42
    %s44 = sphi 0, %s42
    %s45 = sphi 0, %s44
    %s59 = sphi 0, %s45
    %s65 = sphi 0, %s67
    %s68 = sphi 0, %s65
    %s69 = sphi 0, %s68
    %s85 = sphi 0, %s69
  $region4: #{ddual_gcn_forward.5} parent=0 // loop_header_branch
    %11 = sbr.rel (%p9) target = $region8
  $region5: #{ddual_gcn_forward.5} parent=0 // loop_body
    %s13 = ssub.s32 %s8, 1
    %s14 = ssub.s32 %s8, 2
    %s15 = sadd.s32 %s8, 1
    %s16 = ssub.s32 %s8, %s15
    %p17 = scmp.eq.s32.totalorder %s16, 0
    %s19 = sadd.s32 %s18, 1
    %s20 = scalar_select %p17, %s18, %s19
    %p23 = pneg %p17
    %p24 = scmp.eq.s32.totalorder %s8, 1
    %p25 = por %p23, %p24
    %p26 = scmp.ne.s32.totalorder %s18, %s21
    %p27 = scmp.eq.s32.totalorder %s8, 0
    %p28 = por %p26, %p27
    %p29 = scmp.ne.s32.totalorder %s18, %s21
    %p30 = scmp.eq.s32.totalorder %s13, 1
    %p31 = por %p29, %p30
    %p32 = scmp.ne.s32.totalorder %s21, %s22
    %p33 = scmp.eq.s32.totalorder %s13, 0
    %p34 = por %p32, %p33
    %p35 = scmp.ne.s32.totalorder %s21, %s22
    %p36 = scmp.eq.s32.totalorder %s14, 1
    %p37 = por %p35, %p36
    %p39 = scmp.ne.s32.totalorder %s22, %s38
    %p40 = scmp.eq.s32.totalorder %s14, 0
    %p41 = por %p39, %p40
    %s43 = sadd.s32 %s42, 1
    %p46 = scmp.eq.s32.totalorder %s8, 1
    %p47 = scmp.ne.s32.totalorder %s42, %s44
    %p48 = scmp.eq.s32.totalorder %s8, 0
    %p49 = por %p47, %p48
    %p50 = scmp.ne.s32.totalorder %s42, %s44
    %p51 = scmp.eq.s32.totalorder %s13, 1
    %p52 = por %p50, %p51
    %p53 = scmp.ne.s32.totalorder %s44, %s45
    %p54 = scmp.eq.s32.totalorder %s13, 0
    %p55 = por %p53, %p54
    %p56 = scmp.ne.s32.totalorder %s44, %s45
    %p57 = scmp.eq.s32.totalorder %s14, 1
    %p58 = por %p56, %p57
    %p60 = scmp.ne.s32.totalorder %s45, %s59
    %p61 = scmp.eq.s32.totalorder %s14, 0
    %p62 = por %p60, %p61
    %s63 = ssub.s32 %s8, %s15
    %p64 = scmp.eq.s32.totalorder %s63, 0
    %s66 = sadd.s32 %s65, 1
    %s67 = scalar_select %p64, %s65, %s66
    %p70 = pneg %p64
    %p71 = scmp.eq.s32.totalorder %s8, 1
    %p72 = por %p70, %p71
    %p73 = scmp.ne.s32.totalorder %s65, %s68
    %p74 = scmp.eq.s32.totalorder %s8, 0
    %p75 = por %p73, %p74
    %p76 = scmp.ne.s32.totalorder %s65, %s68
    %p77 = scmp.eq.s32.totalorder %s13, 1
    %p78 = por %p76, %p77
    %p79 = scmp.ne.s32.totalorder %s68, %s69
    %p80 = scmp.eq.s32.totalorder %s13, 0
    %p81 = por %p79, %p80
    %p82 = scmp.ne.s32.totalorder %s68, %s69
    %p83 = scmp.eq.s32.totalorder %s14, 1
    %p84 = por %p82, %p83
    %p86 = scmp.ne.s32.totalorder %s69, %s85
    %p87 = scmp.eq.s32.totalorder %s14, 0
    %p88 = por %p86, %p87
    %p89 = scmp.le.s32.totalorder 1, %s8
    %p90 = scmp.lt.s32.totalorder %s8, 3
    %p91 = pnand %p89, %p90
    %p92 = pneg %p91
    // Predicated region
    $region9: #{ddual_gcn_forward.5} parent=5 // pred_check
      _
    $region10: #{ddual_gcn_forward.5} parent=5 // pred_check_branch
      %94 = sbr.rel (%p91) target = $region12
    $region11: #{ddual_gcn_forward.5} parent=5 // pred_region
      %s95 = ssub.s32 %s8, 1
      // Predicated region
      $region13: #{ddual_gcn_forward.5} parent=11 // pred_check
        %p96 = pneg %p55
      $region14: #{ddual_gcn_forward.5} parent=11 // pred_check_branch
        %98 = sbr.rel (%p96) target = $region16
      $region15: #{ddual_gcn_forward.5} parent=11 // pred_region
        _
      $region16: #{ddual_gcn_forward.5} parent=11 // pred_fallthru
        _
    $region12: #{ddual_gcn_forward.5} parent=5 // pred_fallthru
      _
    %p99 = scmp.lt.s32.totalorder %s8, 2
    // Predicated region
    $region17: #{ddual_gcn_forward.5} parent=5 // pred_check
      %p100 = pneg %p99
    $region18: #{ddual_gcn_forward.5} parent=5 // pred_check_branch
      %102 = sbr.rel (%p100) target = $region20
    $region19: #{ddual_gcn_forward.5} parent=5 // pred_region
      // Predicated region
      $region21: #{ddual_gcn_forward.5} parent=19 // pred_check
        %p103 = pneg %p28
      $region22: #{ddual_gcn_forward.5} parent=19 // pred_check_branch
        %105 = sbr.rel (%p103) target = $region24
      $region23: #{ddual_gcn_forward.5} parent=19 // pred_region
        %p106 = scmp.lt.s32.totalorder %s8, 1
        %s107 = scalar_select %p106, %s8, 1
        %s108 = smul.addr %s107, 16
        %s109 = smul.addr %s108, 4
        %s110 = scalar_lea.vmem %s0, %s109
      $region24: #{ddual_gcn_forward.5} parent=19 // pred_fallthru
        _
    $region20: #{ddual_gcn_forward.5} parent=5 // pred_fallthru
      _
    %p111 = scmp.le.s32.totalorder 1, %s8
    %p112 = scmp.lt.s32.totalorder %s8, 3
    %p113 = pnand %p111, %p112
    %p114 = pneg %p113
    // Predicated region
    $region25: #{ddual_gcn_forward.5} parent=5 // pred_check
      _
    $region26: #{ddual_gcn_forward.5} parent=5 // pred_check_branch
      %116 = sbr.rel (%p113) target = $region28
    $region27: #{ddual_gcn_forward.5} parent=5 // pred_region
      %s117 = ssub.s32 %s8, 1
      %p118 = scmp.lt.s32.totalorder %s13, 1
      %s119 = scalar_select %p118, %s13, 1
      %s120 = smul.addr %s119, 16
      %s121 = smul.addr %s120, 4
      %s122 = scalar_lea.vmem %s0, %s121
      %p123 = pneg %p34
      %p124 = pneg %p31
      %p125 = pneg %p55
      %p126 = pneg %p52
      %p127 = pneg %p81
      %p128 = pneg %p78
      %p129 = scmp.lt.s32.totalorder %s13, 1
      %s130 = scalar_select %p129, %s13, 1
      %s131 = smul.addr %s130, 16
      %s132 = smul.addr %s131, 4
      %s133 = scalar_lea.vmem %s2, %s132
      %p134 = scmp.lt.s32.totalorder %s13, 1
      %s135 = scalar_select %p134, %s13, 1
      %s136 = smul.addr %s135, 16
      %s137 = smul.addr %s136, 4
      %s138 = scalar_lea.vmem %s0, %s137
      %p139 = scmp.lt.s32.totalorder %s13, 1
      %s140 = scalar_select %p139, %s13, 1
      %s141 = smul.addr %s140, 16
      %s142 = smul.addr %s141, 4
      %s143 = scalar_lea.vmem %s2, %s142
      %v145 = vld [vmem:[%s138] sm:$0xf]
      %v146 = vld [vmem:[%s138 + $0x4] sm:$0xf]
      %v147 = vld [vmem:[%s138 + $0x8] sm:$0xf]
      %v148 = vld [vmem:[%s138 + $0xc] sm:$0xf]
      %v149 = vld [vmem:[%s138 + $0x10] sm:$0xf]
      %v150 = vld [vmem:[%s138 + $0x14] sm:$0xf]
      %v151 = vld [vmem:[%s138 + $0x18] sm:$0xf]
      %v152 = vld [vmem:[%s138 + $0x1c] sm:$0xf]
      %v153 = vld [vmem:[%s138 + $0x20] sm:$0xf]
      %v154 = vld [vmem:[%s138 + $0x24] sm:$0xf]
      %v155 = vld [vmem:[%s138 + $0x28] sm:$0xf]
      %v156 = vld [vmem:[%s138 + $0x2c] sm:$0xf]
      %v157 = vld [vmem:[%s138 + $0x30] sm:$0xf]
      %v158 = vld [vmem:[%s138 + $0x34] sm:$0xf]
      %v159 = vld [vmem:[%s138 + $0x38] sm:$0xf]
      %v160 = vld [vmem:[%s138 + $0x3c] sm:$0xf]
      %v161 = vld [vmem:[%s1] sm:$0xf]
      %v162 = vld [vmem:[%s1 + $0x4] sm:$0xf]
      %v163 = vld [vmem:[%s1 + $0x8] sm:$0xf]
      %v164 = vld [vmem:[%s1 + $0xc] sm:$0xf]
      %v165 = vld [vmem:[%s1 + $0x10] sm:$0xf]
      %v166 = vld [vmem:[%s1 + $0x14] sm:$0xf]
      %v167 = vld [vmem:[%s1 + $0x18] sm:$0xf]
      %v184 = vunpack.c.l.b16 %v145
      %v185 = vunpack.c.l.b16 %v146
      %v186 = vunpack.c.l.b16 %v147
      %v187 = vunpack.c.l.b16 %v148
      %v188 = vunpack.c.l.b16 %v149
      %v189 = vunpack.c.l.b16 %v150
      %v190 = vunpack.c.l.b16 %v151
      %v191 = vunpack.c.l.b16 %v152
      %v192 = vunpack.c.l.b16 %v153
      %v193 = vunpack.c.l.b16 %v154
      %v194 = vunpack.c.l.b16 %v155
      %v195 = vunpack.c.l.b16 %v156
      %v196 = vunpack.c.l.b16 %v157
      %v197 = vunpack.c.l.b16 %v158
      %v198 = vunpack.c.l.b16 %v159
      %v199 = vunpack.c.l.b16 %v160
      %v200 = vpack.c.b16 %v185, %v184
      %v201 = vpack.c.b16 %v187, %v186
      %v202 = vpack.c.b16 %v189, %v188
      %v203 = vpack.c.b16 %v191, %v190
      %v204 = vpack.c.b16 %v193, %v192
      %v205 = vpack.c.b16 %v195, %v194
      %v206 = vpack.c.b16 %v197, %v196
      %v207 = vpack.c.b16 %v199, %v198
      %v215 = vunpack.c.l.b16 %v161
      %v216 = vunpack.c.l.b16 %v162
      %v217 = vunpack.c.l.b16 %v163
      %v218 = vunpack.c.l.b16 %v164
      %v219 = vunpack.c.l.b16 %v165
      %v220 = vunpack.c.l.b16 %v166
      %v221 = vunpack.c.l.b16 %v167
      %v222 = vpack.c.b16 %v216, %v215
      %v223 = vpack.c.b16 %v218, %v217
      %v224 = vpack.c.b16 %v220, %v219
      %v225 = vpack.c.b16 %v221, %v221
      %vm229 = vcmask 449536
      %v231 = vsel %vm229, %v200, 0
      %v234 = vsel %vm229, %v201, 0
      %v237 = vsel %vm229, %v202, 0
      %v240 = vsel %vm229, %v203, 0
      %v243 = vsel %vm229, %v204, 0
      %v246 = vsel %vm229, %v205, 0
      %v249 = vsel %vm229, %v206, 0
      %v252 = vsel %vm229, %v207, 0
      %vm254 = vcmask 1042432
      %vm255 = vcmask 1043456
      %v256 = vsel %vm254, 4294967295, 65535
      %v257 = vsel %vm255, %v256, 0
      %v259 = vand.u32 %v225, %v257
      %261 = vmatpush.bf16.msra.mxu0 0
      %262 = vmatpush.bf16.msra.mxu0 0
      %263 = vmatpush.bf16.msra.mxu0 0
      %264 = vmatpush.bf16.msra.mxu0 0
      %265 = vmatpush.bf16.msra.mxu0 %v259
      %266 = vmatpush.bf16.msra.mxu0 %v224
      %267 = vmatpush.bf16.msra.mxu0 %v223
      %268 = vmatpush.bf16.msra.mxu0 %v222
      %269 = vmatmul.bf16.gmra.mxu0 %v231
      %v270 = vpop.f32.mrf.mxu0
      %v271 = vadd.f32 0.0, %v270
      %v272 = vpop.f32.mrf.mxu0
      %v273 = vadd.f32 0.0, %v272
      %274 = vmatmul.bf16.gmra.mxu0 %v234
      %v275 = vpop.f32.mrf.mxu0
      %v276 = vadd.f32 0.0, %v275
      %v277 = vpop.f32.mrf.mxu0
      %v278 = vadd.f32 0.0, %v277
      %279 = vmatmul.bf16.gmra.mxu0 %v237
      %v280 = vpop.f32.mrf.mxu0
      %v281 = vadd.f32 0.0, %v280
      %v282 = vpop.f32.mrf.mxu0
      %v283 = vadd.f32 0.0, %v282
      %284 = vmatmul.bf16.gmra.mxu0 %v240
      %v285 = vpop.f32.mrf.mxu0
      %v286 = vadd.f32 0.0, %v285
      %v287 = vpop.f32.mrf.mxu0
      %v288 = vadd.f32 0.0, %v287
      %289 = vmatmul.bf16.gmra.mxu0 %v243
      %v290 = vpop.f32.mrf.mxu0
      %v291 = vadd.f32 0.0, %v290
      %v292 = vpop.f32.mrf.mxu0
      %v293 = vadd.f32 0.0, %v292
      %294 = vmatmul.bf16.gmra.mxu0 %v246
      %v295 = vpop.f32.mrf.mxu0
      %v296 = vadd.f32 0.0, %v295
      %v297 = vpop.f32.mrf.mxu0
      %v298 = vadd.f32 0.0, %v297
      %299 = vmatmul.bf16.gmra.mxu0 %v249
      %v300 = vpop.f32.mrf.mxu0
      %v301 = vadd.f32 0.0, %v300
      %v302 = vpop.f32.mrf.mxu0
      %v303 = vadd.f32 0.0, %v302
      %304 = vmatmul.bf16.gmra.mxu0 %v252
      %v305 = vpop.f32.mrf.mxu0
      %v306 = vadd.f32 0.0, %v305
      %v307 = vpop.f32.mrf.mxu0
      %v308 = vadd.f32 0.0, %v307
      %309 = vdwg.mxu0
      %vm310 = vcmp.ge.f32.partialorder %v271, 0.0
      %vm311 = vcmp.ge.f32.partialorder %v273, 0.0
      %vm312 = vcmp.ge.f32.partialorder %v276, 0.0
      %vm313 = vcmp.ge.f32.partialorder %v278, 0.0
      %vm314 = vcmp.ge.f32.partialorder %v281, 0.0
      %vm315 = vcmp.ge.f32.partialorder %v283, 0.0
      %vm316 = vcmp.ge.f32.partialorder %v286, 0.0
      %vm317 = vcmp.ge.f32.partialorder %v288, 0.0
      %vm318 = vcmp.ge.f32.partialorder %v291, 0.0
      %vm319 = vcmp.ge.f32.partialorder %v293, 0.0
      %vm320 = vcmp.ge.f32.partialorder %v296, 0.0
      %vm321 = vcmp.ge.f32.partialorder %v298, 0.0
      %vm322 = vcmp.ge.f32.partialorder %v301, 0.0
      %vm323 = vcmp.ge.f32.partialorder %v303, 0.0
      %vm324 = vcmp.ge.f32.partialorder %v306, 0.0
      %vm325 = vcmp.ge.f32.partialorder %v308, 0.0
      %v326 = vmul.f32 %v271, 0.01
      %v327 = vmul.f32 %v273, 0.01
      %v328 = vmul.f32 %v276, 0.01
      %v329 = vmul.f32 %v278, 0.01
      %v330 = vmul.f32 %v281, 0.01
      %v331 = vmul.f32 %v283, 0.01
      %v332 = vmul.f32 %v286, 0.01
      %v333 = vmul.f32 %v288, 0.01
      %v334 = vmul.f32 %v291, 0.01
      %v335 = vmul.f32 %v293, 0.01
      %v336 = vmul.f32 %v296, 0.01
      %v337 = vmul.f32 %v298, 0.01
      %v338 = vmul.f32 %v301, 0.01
      %v339 = vmul.f32 %v303, 0.01
      %v340 = vmul.f32 %v306, 0.01
      %v341 = vmul.f32 %v308, 0.01
      %v342 = vsel %vm310, %v271, %v326
      %v343 = vsel %vm311, %v273, %v327
      %v344 = vsel %vm312, %v276, %v328
      %v345 = vsel %vm313, %v278, %v329
      %v346 = vsel %vm314, %v281, %v330
      %v347 = vsel %vm315, %v283, %v331
      %v348 = vsel %vm316, %v286, %v332
      %v349 = vsel %vm317, %v288, %v333
      %v350 = vsel %vm318, %v291, %v334
      %v351 = vsel %vm319, %v293, %v335
      %v352 = vsel %vm320, %v296, %v336
      %v353 = vsel %vm321, %v298, %v337
      %v354 = vsel %vm322, %v301, %v338
      %v355 = vsel %vm323, %v303, %v339
      %v356 = vsel %vm324, %v306, %v340
      %v357 = vsel %vm325, %v308, %v341
      %v358 = vpack.c.bf16 %v342, %v342
      %v359 = vpack.c.bf16 %v343, %v343
      %v360 = vpack.c.bf16 %v344, %v344
      %v361 = vpack.c.bf16 %v345, %v345
      %v362 = vpack.c.bf16 %v346, %v346
      %v363 = vpack.c.bf16 %v347, %v347
      %v364 = vpack.c.bf16 %v348, %v348
      %v365 = vpack.c.bf16 %v349, %v349
      %v366 = vpack.c.bf16 %v350, %v350
      %v367 = vpack.c.bf16 %v351, %v351
      %v368 = vpack.c.bf16 %v352, %v352
      %v369 = vpack.c.bf16 %v353, %v353
      %v370 = vpack.c.bf16 %v354, %v354
      %v371 = vpack.c.bf16 %v355, %v355
      %v372 = vpack.c.bf16 %v356, %v356
      %v373 = vpack.c.bf16 %v357, %v357
      %vm374 = vcmask 60416
      %375 = vst.msk [vmem:[%s143] sm:$0xf] %vm374, %v358
      %376 = vst.msk [vmem:[%s143 + $0x4] sm:$0xf] %vm374, %v359
      %377 = vst.msk [vmem:[%s143 + $0x8] sm:$0xf] %vm374, %v360
      %378 = vst.msk [vmem:[%s143 + $0xc] sm:$0xf] %vm374, %v361
      %379 = vst.msk [vmem:[%s143 + $0x10] sm:$0xf] %vm374, %v362
      %380 = vst.msk [vmem:[%s143 + $0x14] sm:$0xf] %vm374, %v363
      %381 = vst.msk [vmem:[%s143 + $0x18] sm:$0xf] %vm374, %v364
      %382 = vst.msk [vmem:[%s143 + $0x1c] sm:$0xf] %vm374, %v365
      %383 = vst.msk [vmem:[%s143 + $0x20] sm:$0xf] %vm374, %v366
      %384 = vst.msk [vmem:[%s143 + $0x24] sm:$0xf] %vm374, %v367
      %385 = vst.msk [vmem:[%s143 + $0x28] sm:$0xf] %vm374, %v368
      %386 = vst.msk [vmem:[%s143 + $0x2c] sm:$0xf] %vm374, %v369
      %387 = vst.msk [vmem:[%s143 + $0x30] sm:$0xf] %vm374, %v370
      %388 = vst.msk [vmem:[%s143 + $0x34] sm:$0xf] %vm374, %v371
      %389 = vst.msk [vmem:[%s143 + $0x38] sm:$0xf] %vm374, %v372
      %390 = vst.msk [vmem:[%s143 + $0x3c] sm:$0xf] %vm374, %v373
      %p391 = scmp.lt.s32.totalorder %s13, 1
      %s392 = scalar_select %p391, %s13, 1
      %s393 = smul.addr %s392, 16
      %s394 = smul.addr %s393, 4
      %s395 = scalar_lea.vmem %s2, %s394
      // Predicated region
      $region29: #{ddual_gcn_forward.5} parent=27 // pred_check
        %p396 = pneg %p78
      $region30: #{ddual_gcn_forward.5} parent=27 // pred_check_branch
        %398 = sbr.rel (%p396) target = $region32
      $region31: #{ddual_gcn_forward.5} parent=27 // pred_region
        _
      $region32: #{ddual_gcn_forward.5} parent=27 // pred_fallthru
        _
    $region28: #{ddual_gcn_forward.5} parent=5 // pred_fallthru
      _
    %p399 = scmp.le.s32.totalorder 2, %s8
    // Predicated region
    $region33: #{ddual_gcn_forward.5} parent=5 // pred_check
      %p400 = pneg %p399
    $region34: #{ddual_gcn_forward.5} parent=5 // pred_check_branch
      %402 = sbr.rel (%p400) target = $region36
    $region35: #{ddual_gcn_forward.5} parent=5 // pred_region
      %s403 = ssub.s32 %s8, 2
      // Predicated region
      $region37: #{ddual_gcn_forward.5} parent=35 // pred_check
        %p404 = pneg %p84
      $region38: #{ddual_gcn_forward.5} parent=35 // pred_check_branch
        %406 = sbr.rel (%p404) target = $region40
      $region39: #{ddual_gcn_forward.5} parent=35 // pred_region
        %p407 = scmp.lt.s32.totalorder %s14, 1
        %s408 = scalar_select %p407, %s14, 1
        %s409 = smul.addr %s408, 16
        %s410 = smul.addr %s409, 4
        %s411 = scalar_lea.vmem %s2, %s410
      $region40: #{ddual_gcn_forward.5} parent=35 // pred_fallthru
        _
    $region36: #{ddual_gcn_forward.5} parent=5 // pred_fallthru
      _
  $region6: #{ddual_gcn_forward.5} parent=0 // loop_footer
    %s12 = sadd.s32 1, %s8
  $region7: #{ddual_gcn_forward.5} parent=0 // loop_footer_branch
    %7 = sbr.rel target = $region3
  $region8: #{ddual_gcn_forward.5} parent=0 // loop_exit
    _

// kernel: ddual_gcn_forward.6
$region0: #{ddual_gcn_forward.6}
  #allocation0 [shape = 'u32[]', space=smem, size = 0x4, offset = 0x4, fixed_abs, tag = 'smem constant byte address 0x4 - core index']
  #allocation1 [shape = 'u32[72,128]{1,0:T(1,128)}', space=vmem, size = 0x9000, scoped, tag = 'internal scratch']
  %s0 = inlined_call_operand.vmem [shape: bf16[2,64,31], index: 0, kind: input, shape index: {}]
  %s1 = inlined_call_operand.vmem [shape: bf16[31,4], index: 1, kind: input, shape index: {}]
  %s2 = inlined_call_operand.vmem [shape: bf16[2,64,4], index: 2, kind: output, shape index: {}]
  %s3 = sld [smem:[#allocation0]]
  $region41: #{ddual_gcn_forward.6} parent=0
    _
  %s5 = ssub.s32 1, %s3
  %s6 = scalar_select 0, %s5, %s3
  loop: start=0, step=1, limit=4
  $region2: #{ddual_gcn_forward.6} parent=0 // loop_pre_header
    _
  $region3: #{ddual_gcn_forward.6} parent=0 // loop_header
    %s8 = sphi 0, %s12
    %p9 = scmp.ge.s32.totalorder %s8, 4
    %s18 = sphi 0, %s20
    %s21 = sphi 0, %s18
    %s22 = sphi 0, %s21
    %s38 = sphi 0, %s22
    %s42 = sphi 0, %s42
    %s44 = sphi 0, %s42
    %s45 = sphi 0, %s44
    %s59 = sphi 0, %s45
    %s65 = sphi 0, %s67
    %s68 = sphi 0, %s65
    %s69 = sphi 0, %s68
    %s85 = sphi 0, %s69
  $region4: #{ddual_gcn_forward.6} parent=0 // loop_header_branch
    %11 = sbr.rel (%p9) target = $region8
  $region5: #{ddual_gcn_forward.6} parent=0 // loop_body
    %s13 = ssub.s32 %s8, 1
    %s14 = ssub.s32 %s8, 2
    %s15 = sadd.s32 %s8, 1
    %s16 = ssub.s32 %s8, %s15
    %p17 = scmp.eq.s32.totalorder %s16, 0
    %s19 = sadd.s32 %s18, 1
    %s20 = scalar_select %p17, %s18, %s19
    %p23 = pneg %p17
    %p24 = scmp.eq.s32.totalorder %s8, 1
    %p25 = por %p23, %p24
    %p26 = scmp.ne.s32.totalorder %s18, %s21
    %p27 = scmp.eq.s32.totalorder %s8, 0
    %p28 = por %p26, %p27
    %p29 = scmp.ne.s32.totalorder %s18, %s21
    %p30 = scmp.eq.s32.totalorder %s13, 1
    %p31 = por %p29, %p30
    %p32 = scmp.ne.s32.totalorder %s21, %s22
    %p33 = scmp.eq.s32.totalorder %s13, 0
    %p34 = por %p32, %p33
    %p35 = scmp.ne.s32.totalorder %s21, %s22
    %p36 = scmp.eq.s32.totalorder %s14, 1
    %p37 = por %p35, %p36
    %p39 = scmp.ne.s32.totalorder %s22, %s38
    %p40 = scmp.eq.s32.totalorder %s14, 0
    %p41 = por %p39, %p40
    %s43 = sadd.s32 %s42, 1
    %p46 = scmp.eq.s32.totalorder %s8, 1
    %p47 = scmp.ne.s32.totalorder %s42, %s44
    %p48 = scmp.eq.s32.totalorder %s8, 0
    %p49 = por %p47, %p48
    %p50 = scmp.ne.s32.totalorder %s42, %s44
    %p51 = scmp.eq.s32.totalorder %s13, 1
    %p52 = por %p50, %p51
    %p53 = scmp.ne.s32.totalorder %s44, %s45
    %p54 = scmp.eq.s32.totalorder %s13, 0
    %p55 = por %p53, %p54
    %p56 = scmp.ne.s32.totalorder %s44, %s45
    %p57 = scmp.eq.s32.totalorder %s14, 1
    %p58 = por %p56, %p57
    %p60 = scmp.ne.s32.totalorder %s45, %s59
    %p61 = scmp.eq.s32.totalorder %s14, 0
    %p62 = por %p60, %p61
    %s63 = ssub.s32 %s8, %s15
    %p64 = scmp.eq.s32.totalorder %s63, 0
    %s66 = sadd.s32 %s65, 1
    %s67 = scalar_select %p64, %s65, %s66
    %p70 = pneg %p64
    %p71 = scmp.eq.s32.totalorder %s8, 1
    %p72 = por %p70, %p71
    %p73 = scmp.ne.s32.totalorder %s65, %s68
    %p74 = scmp.eq.s32.totalorder %s8, 0
    %p75 = por %p73, %p74
    %p76 = scmp.ne.s32.totalorder %s65, %s68
    %p77 = scmp.eq.s32.totalorder %s13, 1
    %p78 = por %p76, %p77
    %p79 = scmp.ne.s32.totalorder %s68, %s69
    %p80 = scmp.eq.s32.totalorder %s13, 0
    %p81 = por %p79, %p80
    %p82 = scmp.ne.s32.totalorder %s68, %s69
    %p83 = scmp.eq.s32.totalorder %s14, 1
    %p84 = por %p82, %p83
    %p86 = scmp.ne.s32.totalorder %s69, %s85
    %p87 = scmp.eq.s32.totalorder %s14, 0
    %p88 = por %p86, %p87
    %p89 = scmp.le.s32.totalorder 1, %s8
    %p90 = scmp.lt.s32.totalorder %s8, 3
    %p91 = pnand %p89, %p90
    %p92 = pneg %p91
    // Predicated region
    $region9: #{ddual_gcn_forward.6} parent=5 // pred_check
      _
    $region10: #{ddual_gcn_forward.6} parent=5 // pred_check_branch
      %94 = sbr.rel (%p91) target = $region12
    $region11: #{ddual_gcn_forward.6} parent=5 // pred_region
      %s95 = ssub.s32 %s8, 1
      // Predicated region
      $region13: #{ddual_gcn_forward.6} parent=11 // pred_check
        %p96 = pneg %p55
      $region14: #{ddual_gcn_forward.6} parent=11 // pred_check_branch
        %98 = sbr.rel (%p96) target = $region16
      $region15: #{ddual_gcn_forward.6} parent=11 // pred_region
        _
      $region16: #{ddual_gcn_forward.6} parent=11 // pred_fallthru
        _
    $region12: #{ddual_gcn_forward.6} parent=5 // pred_fallthru
      _
    %p99 = scmp.lt.s32.totalorder %s8, 2
    // Predicated region
    $region17: #{ddual_gcn_forward.6} parent=5 // pred_check
      %p100 = pneg %p99
    $region18: #{ddual_gcn_forward.6} parent=5 // pred_check_branch
      %102 = sbr.rel (%p100) target = $region20
    $region19: #{ddual_gcn_forward.6} parent=5 // pred_region
      // Predicated region
      $region21: #{ddual_gcn_forward.6} parent=19 // pred_check
        %p103 = pneg %p28
      $region22: #{ddual_gcn_forward.6} parent=19 // pred_check_branch
        %105 = sbr.rel (%p103) target = $region24
      $region23: #{ddual_gcn_forward.6} parent=19 // pred_region
        %p106 = scmp.lt.s32.totalorder %s8, 1
        %s107 = scalar_select %p106, %s8, 1
        %s108 = smul.addr %s107, 8
        %s109 = smul.addr %s108, 4
        %s110 = scalar_lea.vmem %s0, %s109
      $region24: #{ddual_gcn_forward.6} parent=19 // pred_fallthru
        _
    $region20: #{ddual_gcn_forward.6} parent=5 // pred_fallthru
      _
    %p111 = scmp.le.s32.totalorder 1, %s8
    %p112 = scmp.lt.s32.totalorder %s8, 3
    %p113 = pnand %p111, %p112
    %p114 = pneg %p113
    // Predicated region
    $region25: #{ddual_gcn_forward.6} parent=5 // pred_check
      _
    $region26: #{ddual_gcn_forward.6} parent=5 // pred_check_branch
      %116 = sbr.rel (%p113) target = $region28
    $region27: #{ddual_gcn_forward.6} parent=5 // pred_region
      %s117 = ssub.s32 %s8, 1
      %p118 = scmp.lt.s32.totalorder %s13, 1
      %s119 = scalar_select %p118, %s13, 1
      %s120 = smul.addr %s119, 8
      %s121 = smul.addr %s120, 4
      %s122 = scalar_lea.vmem %s0, %s121
      %p123 = pneg %p34
      %p124 = pneg %p31
      %p125 = pneg %p55
      %p126 = pneg %p52
      %p127 = pneg %p81
      %p128 = pneg %p78
      %p129 = scmp.lt.s32.totalorder %s13, 1
      %s130 = scalar_select %p129, %s13, 1
      %s131 = smul.addr %s130, 8
      %s132 = smul.addr %s131, 4
      %s133 = scalar_lea.vmem %s2, %s132
      %p134 = scmp.lt.s32.totalorder %s13, 1
      %s135 = scalar_select %p134, %s13, 1
      %s136 = smul.addr %s135, 8
      %s137 = smul.addr %s136, 4
      %s138 = scalar_lea.vmem %s0, %s137
      %p139 = scmp.lt.s32.totalorder %s13, 1
      %s140 = scalar_select %p139, %s13, 1
      %s141 = smul.addr %s140, 8
      %s142 = smul.addr %s141, 4
      %s143 = scalar_lea.vmem %s2, %s142
      %v145 = vld [vmem:[%s138] sm:$0xf]
      %v146 = vld [vmem:[%s138 + $0x4] sm:$0xf]
      %v147 = vld [vmem:[%s138 + $0x8] sm:$0xf]
      %v148 = vld [vmem:[%s138 + $0xc] sm:$0xf]
      %v149 = vld [vmem:[%s138 + $0x10] sm:$0xf]
      %v150 = vld [vmem:[%s138 + $0x14] sm:$0xf]
      %v151 = vld [vmem:[%s138 + $0x18] sm:$0xf]
      %v152 = vld [vmem:[%s138 + $0x1c] sm:$0xf]
      %v153 = vld [vmem:[%s1] sm:$0xf]
      %v154 = vld [vmem:[%s1 + $0x4] sm:$0xf]
      %v155 = vld [vmem:[%s1 + $0x8] sm:$0xf]
      %v156 = vld [vmem:[%s1 + $0xc] sm:$0xf]
      %v165 = vunpack.c.l.b16 %v145
      %v166 = vunpack.c.l.b16 %v146
      %v167 = vunpack.c.l.b16 %v147
      %v168 = vunpack.c.l.b16 %v148
      %v169 = vunpack.c.l.b16 %v149
      %v170 = vunpack.c.l.b16 %v150
      %v171 = vunpack.c.l.b16 %v151
      %v172 = vunpack.c.l.b16 %v152
      %v173 = vpack.c.b16 %v166, %v165
      %v174 = vpack.c.b16 %v168, %v167
      %v175 = vpack.c.b16 %v170, %v169
      %v176 = vpack.c.b16 %v172, %v171
      %v181 = vunpack.c.l.b16 %v153
      %v182 = vunpack.c.l.b16 %v154
      %v183 = vunpack.c.l.b16 %v155
      %v184 = vunpack.c.l.b16 %v156
      %v185 = vpack.c.b16 %v182, %v181
      %v186 = vpack.c.b16 %v184, %v183
      %vm188 = vcmask 252928
      %v190 = vsel %vm188, %v173, 0
      %v193 = vsel %vm188, %v174, 0
      %v196 = vsel %vm188, %v175, 0
      %v199 = vsel %vm188, %v176, 0
      %vm201 = vcmask 1046528
      %vm202 = vcmask 1047552
      %v203 = vsel %vm201, 4294967295, 65535
      %v204 = vsel %vm202, %v203, 0
      %v206 = vand.u32 %v186, %v204
      %208 = vmatpush.bf16.msra.mxu0 0
      %209 = vmatpush.bf16.msra.mxu0 0
      %210 = vmatpush.bf16.msra.mxu0 0
      %211 = vmatpush.bf16.msra.mxu0 0
      %212 = vmatpush.bf16.msra.mxu0 0
      %213 = vmatpush.bf16.msra.mxu0 0
      %214 = vmatpush.bf16.msra.mxu0 %v206
      %215 = vmatpush.bf16.msra.mxu0 %v185
      %216 = vmatmul.bf16.gmra.mxu0 %v190
      %v217 = vpop.f32.mrf.mxu0
      %v218 = vadd.f32 0.0, %v217
      %v219 = vpop.f32.mrf.mxu0
      %v220 = vadd.f32 0.0, %v219
      %221 = vmatmul.bf16.gmra.mxu0 %v193
      %v222 = vpop.f32.mrf.mxu0
      %v223 = vadd.f32 0.0, %v222
      %v224 = vpop.f32.mrf.mxu0
      %v225 = vadd.f32 0.0, %v224
      %226 = vmatmul.bf16.gmra.mxu0 %v196
      %v227 = vpop.f32.mrf.mxu0
      %v228 = vadd.f32 0.0, %v227
      %v229 = vpop.f32.mrf.mxu0
      %v230 = vadd.f32 0.0, %v229
      %231 = vmatmul.bf16.gmra.mxu0 %v199
      %v232 = vpop.f32.mrf.mxu0
      %v233 = vadd.f32 0.0, %v232
      %v234 = vpop.f32.mrf.mxu0
      %v235 = vadd.f32 0.0, %v234
      %236 = vdwg.mxu0
      %vm237 = vcmp.ge.f32.partialorder %v218, 0.0
      %vm238 = vcmp.ge.f32.partialorder %v220, 0.0
      %vm239 = vcmp.ge.f32.partialorder %v223, 0.0
      %vm240 = vcmp.ge.f32.partialorder %v225, 0.0
      %vm241 = vcmp.ge.f32.partialorder %v228, 0.0
      %vm242 = vcmp.ge.f32.partialorder %v230, 0.0
      %vm243 = vcmp.ge.f32.partialorder %v233, 0.0
      %vm244 = vcmp.ge.f32.partialorder %v235, 0.0
      %v245 = vmul.f32 %v218, 0.01
      %v246 = vmul.f32 %v220, 0.01
      %v247 = vmul.f32 %v223, 0.01
      %v248 = vmul.f32 %v225, 0.01
      %v249 = vmul.f32 %v228, 0.01
      %v250 = vmul.f32 %v230, 0.01
      %v251 = vmul.f32 %v233, 0.01
      %v252 = vmul.f32 %v235, 0.01
      %v253 = vsel %vm237, %v218, %v245
      %v254 = vsel %vm238, %v220, %v246
      %v255 = vsel %vm239, %v223, %v247
      %v256 = vsel %vm240, %v225, %v248
      %v257 = vsel %vm241, %v228, %v249
      %v258 = vsel %vm242, %v230, %v250
      %v259 = vsel %vm243, %v233, %v251
      %v260 = vsel %vm244, %v235, %v252
      %v261 = vpack.c.bf16 %v253, %v253
      %v262 = vpack.c.bf16 %v254, %v254
      %v263 = vpack.c.bf16 %v255, %v255
      %v264 = vpack.c.bf16 %v256, %v256
      %v265 = vpack.c.bf16 %v257, %v257
      %v266 = vpack.c.bf16 %v258, %v258
      %v267 = vpack.c.bf16 %v259, %v259
      %v268 = vpack.c.bf16 %v260, %v260
      %vm269 = vcmask 27648
      %270 = vst.msk [vmem:[%s143] sm:$0xf] %vm269, %v261
      %271 = vst.msk [vmem:[%s143 + $0x4] sm:$0xf] %vm269, %v262
      %272 = vst.msk [vmem:[%s143 + $0x8] sm:$0xf] %vm269, %v263
      %273 = vst.msk [vmem:[%s143 + $0xc] sm:$0xf] %vm269, %v264
      %274 = vst.msk [vmem:[%s143 + $0x10] sm:$0xf] %vm269, %v265
      %275 = vst.msk [vmem:[%s143 + $0x14] sm:$0xf] %vm269, %v266
      %276 = vst.msk [vmem:[%s143 + $0x18] sm:$0xf] %vm269, %v267
      %277 = vst.msk [vmem:[%s143 + $0x1c] sm:$0xf] %vm269, %v268
      %p278 = scmp.lt.s32.totalorder %s13, 1
      %s279 = scalar_select %p278, %s13, 1
      %s280 = smul.addr %s279, 8
      %s281 = smul.addr %s280, 4
      %s282 = scalar_lea.vmem %s2, %s281
      // Predicated region
      $region29: #{ddual_gcn_forward.6} parent=27 // pred_check
        %p283 = pneg %p78
      $region30: #{ddual_gcn_forward.6} parent=27 // pred_check_branch
        %285 = sbr.rel (%p283) target = $region32
      $region31: #{ddual_gcn_forward.6} parent=27 // pred_region
        _
      $region32: #{ddual_gcn_forward.6} parent=27 // pred_fallthru
        _
    $region28: #{ddual_gcn_forward.6} parent=5 // pred_fallthru
      _
    %p286 = scmp.le.s32.totalorder 2, %s8
    // Predicated region
    $region33: #{ddual_gcn_forward.6} parent=5 // pred_check
      %p287 = pneg %p286
    $region34: #{ddual_gcn_forward.6} parent=5 // pred_check_branch
      %289 = sbr.rel (%p287) target = $region36
    $region35: #{ddual_gcn_forward.6} parent=5 // pred_region
      %s290 = ssub.s32 %s8, 2
      // Predicated region
      $region37: #{ddual_gcn_forward.6} parent=35 // pred_check
        %p291 = pneg %p84
      $region38: #{ddual_gcn_forward.6} parent=35 // pred_check_branch
        %293 = sbr.rel (%p291) target = $region40
      $region39: #{ddual_gcn_forward.6} parent=35 // pred_region
        %p294 = scmp.lt.s32.totalorder %s14, 1
        %s295 = scalar_select %p294, %s14, 1
        %s296 = smul.addr %s295, 8
        %s297 = smul.addr %s296, 4
        %s298 = scalar_lea.vmem %s2, %s297
      $region40: #{ddual_gcn_forward.6} parent=35 // pred_fallthru
        _
    $region36: #{ddual_gcn_forward.6} parent=5 // pred_fallthru
      _
  $region6: #{ddual_gcn_forward.6} parent=0 // loop_footer
    %s12 = sadd.s32 1, %s8
  $region7: #{ddual_gcn_forward.6} parent=0 // loop_footer_branch
    %7 = sbr.rel target = $region3
  $region8: #{ddual_gcn_forward.6} parent=0 // loop_exit
    _

// kernel: ddual_gcn_forward.7
$region0: #{ddual_gcn_forward.7}
  #allocation0 [shape = 'u32[]', space=smem, size = 0x4, offset = 0x4, fixed_abs, tag = 'smem constant byte address 0x4 - core index']
  #allocation1 [shape = 'u32[72,128]{1,0:T(1,128)}', space=vmem, size = 0x9000, scoped, tag = 'internal scratch']
  %s0 = inlined_call_operand.vmem [shape: bf16[2,32,19], index: 0, kind: input, shape index: {}]
  %s1 = inlined_call_operand.vmem [shape: bf16[19,2], index: 1, kind: input, shape index: {}]
  %s2 = inlined_call_operand.vmem [shape: bf16[2,32,2], index: 2, kind: output, shape index: {}]
  %s3 = sld [smem:[#allocation0]]
  $region41: #{ddual_gcn_forward.7} parent=0
    _
  %s5 = ssub.s32 1, %s3
  %s6 = scalar_select 0, %s5, %s3
  loop: start=0, step=1, limit=4
  $region2: #{ddual_gcn_forward.7} parent=0 // loop_pre_header
    _
  $region3: #{ddual_gcn_forward.7} parent=0 // loop_header
    %s8 = sphi 0, %s12
    %p9 = scmp.ge.s32.totalorder %s8, 4
    %s18 = sphi 0, %s20
    %s21 = sphi 0, %s18
    %s22 = sphi 0, %s21
    %s38 = sphi 0, %s22
    %s42 = sphi 0, %s42
    %s44 = sphi 0, %s42
    %s45 = sphi 0, %s44
    %s59 = sphi 0, %s45
    %s65 = sphi 0, %s67
    %s68 = sphi 0, %s65
    %s69 = sphi 0, %s68
    %s85 = sphi 0, %s69
  $region4: #{ddual_gcn_forward.7} parent=0 // loop_header_branch
    %11 = sbr.rel (%p9) target = $region8
  $region5: #{ddual_gcn_forward.7} parent=0 // loop_body
    %s13 = ssub.s32 %s8, 1
    %s14 = ssub.s32 %s8, 2
    %s15 = sadd.s32 %s8, 1
    %s16 = ssub.s32 %s8, %s15
    %p17 = scmp.eq.s32.totalorder %s16, 0
    %s19 = sadd.s32 %s18, 1
    %s20 = scalar_select %p17, %s18, %s19
    %p23 = pneg %p17
    %p24 = scmp.eq.s32.totalorder %s8, 1
    %p25 = por %p23, %p24
    %p26 = scmp.ne.s32.totalorder %s18, %s21
    %p27 = scmp.eq.s32.totalorder %s8, 0
    %p28 = por %p26, %p27
    %p29 = scmp.ne.s32.totalorder %s18, %s21
    %p30 = scmp.eq.s32.totalorder %s13, 1
    %p31 = por %p29, %p30
    %p32 = scmp.ne.s32.totalorder %s21, %s22
    %p33 = scmp.eq.s32.totalorder %s13, 0
    %p34 = por %p32, %p33
    %p35 = scmp.ne.s32.totalorder %s21, %s22
    %p36 = scmp.eq.s32.totalorder %s14, 1
    %p37 = por %p35, %p36
    %p39 = scmp.ne.s32.totalorder %s22, %s38
    %p40 = scmp.eq.s32.totalorder %s14, 0
    %p41 = por %p39, %p40
    %s43 = sadd.s32 %s42, 1
    %p46 = scmp.eq.s32.totalorder %s8, 1
    %p47 = scmp.ne.s32.totalorder %s42, %s44
    %p48 = scmp.eq.s32.totalorder %s8, 0
    %p49 = por %p47, %p48
    %p50 = scmp.ne.s32.totalorder %s42, %s44
    %p51 = scmp.eq.s32.totalorder %s13, 1
    %p52 = por %p50, %p51
    %p53 = scmp.ne.s32.totalorder %s44, %s45
    %p54 = scmp.eq.s32.totalorder %s13, 0
    %p55 = por %p53, %p54
    %p56 = scmp.ne.s32.totalorder %s44, %s45
    %p57 = scmp.eq.s32.totalorder %s14, 1
    %p58 = por %p56, %p57
    %p60 = scmp.ne.s32.totalorder %s45, %s59
    %p61 = scmp.eq.s32.totalorder %s14, 0
    %p62 = por %p60, %p61
    %s63 = ssub.s32 %s8, %s15
    %p64 = scmp.eq.s32.totalorder %s63, 0
    %s66 = sadd.s32 %s65, 1
    %s67 = scalar_select %p64, %s65, %s66
    %p70 = pneg %p64
    %p71 = scmp.eq.s32.totalorder %s8, 1
    %p72 = por %p70, %p71
    %p73 = scmp.ne.s32.totalorder %s65, %s68
    %p74 = scmp.eq.s32.totalorder %s8, 0
    %p75 = por %p73, %p74
    %p76 = scmp.ne.s32.totalorder %s65, %s68
    %p77 = scmp.eq.s32.totalorder %s13, 1
    %p78 = por %p76, %p77
    %p79 = scmp.ne.s32.totalorder %s68, %s69
    %p80 = scmp.eq.s32.totalorder %s13, 0
    %p81 = por %p79, %p80
    %p82 = scmp.ne.s32.totalorder %s68, %s69
    %p83 = scmp.eq.s32.totalorder %s14, 1
    %p84 = por %p82, %p83
    %p86 = scmp.ne.s32.totalorder %s69, %s85
    %p87 = scmp.eq.s32.totalorder %s14, 0
    %p88 = por %p86, %p87
    %p89 = scmp.le.s32.totalorder 1, %s8
    %p90 = scmp.lt.s32.totalorder %s8, 3
    %p91 = pnand %p89, %p90
    %p92 = pneg %p91
    // Predicated region
    $region9: #{ddual_gcn_forward.7} parent=5 // pred_check
      _
    $region10: #{ddual_gcn_forward.7} parent=5 // pred_check_branch
      %94 = sbr.rel (%p91) target = $region12
    $region11: #{ddual_gcn_forward.7} parent=5 // pred_region
      %s95 = ssub.s32 %s8, 1
      // Predicated region
      $region13: #{ddual_gcn_forward.7} parent=11 // pred_check
        %p96 = pneg %p55
      $region14: #{ddual_gcn_forward.7} parent=11 // pred_check_branch
        %98 = sbr.rel (%p96) target = $region16
      $region15: #{ddual_gcn_forward.7} parent=11 // pred_region
        _
      $region16: #{ddual_gcn_forward.7} parent=11 // pred_fallthru
        _
    $region12: #{ddual_gcn_forward.7} parent=5 // pred_fallthru
      _
    %p99 = scmp.lt.s32.totalorder %s8, 2
    // Predicated region
    $region17: #{ddual_gcn_forward.7} parent=5 // pred_check
      %p100 = pneg %p99
    $region18: #{ddual_gcn_forward.7} parent=5 // pred_check_branch
      %102 = sbr.rel (%p100) target = $region20
    $region19: #{ddual_gcn_forward.7} parent=5 // pred_region
      // Predicated region
      $region21: #{ddual_gcn_forward.7} parent=19 // pred_check
        %p103 = pneg %p28
      $region22: #{ddual_gcn_forward.7} parent=19 // pred_check_branch
        %105 = sbr.rel (%p103) target = $region24
      $region23: #{ddual_gcn_forward.7} parent=19 // pred_region
        %p106 = scmp.lt.s32.totalorder %s8, 1
        %s107 = scalar_select %p106, %s8, 1
        %s108 = smul.addr %s107, 4
        %s109 = smul.addr %s108, 4
        %s110 = scalar_lea.vmem %s0, %s109
      $region24: #{ddual_gcn_forward.7} parent=19 // pred_fallthru
        _
    $region20: #{ddual_gcn_forward.7} parent=5 // pred_fallthru
      _
    %p111 = scmp.le.s32.totalorder 1, %s8
    %p112 = scmp.lt.s32.totalorder %s8, 3
    %p113 = pnand %p111, %p112
    %p114 = pneg %p113
    // Predicated region
    $region25: #{ddual_gcn_forward.7} parent=5 // pred_check
      _
    $region26: #{ddual_gcn_forward.7} parent=5 // pred_check_branch
      %116 = sbr.rel (%p113) target = $region28
    $region27: #{ddual_gcn_forward.7} parent=5 // pred_region
      %s117 = ssub.s32 %s8, 1
      %p118 = scmp.lt.s32.totalorder %s13, 1
      %s119 = scalar_select %p118, %s13, 1
      %s120 = smul.addr %s119, 4
      %s121 = smul.addr %s120, 4
      %s122 = scalar_lea.vmem %s0, %s121
      %p123 = pneg %p34
      %p124 = pneg %p31
      %p125 = pneg %p55
      %p126 = pneg %p52
      %p127 = pneg %p81
      %p128 = pneg %p78
      %p129 = scmp.lt.s32.totalorder %s13, 1
      %s130 = scalar_select %p129, %s13, 1
      %s131 = smul.addr %s130, 4
      %s132 = smul.addr %s131, 4
      %s133 = scalar_lea.vmem %s2, %s132
      %p134 = scmp.lt.s32.totalorder %s13, 1
      %s135 = scalar_select %p134, %s13, 1
      %s136 = smul.addr %s135, 4
      %s137 = smul.addr %s136, 4
      %s138 = scalar_lea.vmem %s0, %s137
      %p139 = scmp.lt.s32.totalorder %s13, 1
      %s140 = scalar_select %p139, %s13, 1
      %s141 = smul.addr %s140, 4
      %s142 = smul.addr %s141, 4
      %s143 = scalar_lea.vmem %s2, %s142
      %v145 = vld [vmem:[%s138] sm:$0xf]
      %v146 = vld [vmem:[%s138 + $0x4] sm:$0xf]
      %v147 = vld [vmem:[%s138 + $0x8] sm:$0xf]
      %v148 = vld [vmem:[%s138 + $0xc] sm:$0xf]
      %v149 = vld [vmem:[%s1] sm:$0xf]
      %v150 = vld [vmem:[%s1 + $0x4] sm:$0xf]
      %v151 = vld [vmem:[%s1 + $0x8] sm:$0x3]
      %v156 = vunpack.c.l.b16 %v145
      %v157 = vunpack.c.l.b16 %v146
      %v158 = vunpack.c.l.b16 %v147
      %v159 = vunpack.c.l.b16 %v148
      %v160 = vpack.c.b16 %v157, %v156
      %v161 = vpack.c.b16 %v159, %v158
      %v165 = vunpack.c.l.b16 %v149
      %v166 = vunpack.c.l.b16 %v150
      %v167 = vunpack.c.l.b16 %v151
      %v168 = vpack.c.b16 %v166, %v165
      %v169 = vpack.c.b16 %v167, %v167
      %vm171 = vcmask 154624
      %v173 = vsel %vm171, %v160, 0
      %v176 = vsel %vm171, %v161, 0
      %vm178 = vcmask 1040384
      %vm179 = vcmask 1041408
      %v180 = vsel %vm178, 4294967295, 65535
      %v181 = vsel %vm179, %v180, 0
      %v183 = vand.u32 %v169, %v181
      %185 = vmatpush.bf16.msra.mxu0 0
      %186 = vmatpush.bf16.msra.mxu0 0
      %187 = vmatpush.bf16.msra.mxu0 0
      %188 = vmatpush.bf16.msra.mxu0 0
      %189 = vmatpush.bf16.msra.mxu0 0
      %190 = vmatpush.bf16.msra.mxu0 0
      %191 = vmatpush.bf16.msra.mxu0 %v183
      %192 = vmatpush.bf16.msra.mxu0 %v168
      %193 = vmatmul.bf16.gmra.mxu0 %v173
      %v194 = vpop.f32.mrf.mxu0
      %v195 = vadd.f32 0.0, %v194
      %v196 = vpop.f32.mrf.mxu0
      %v197 = vadd.f32 0.0, %v196
      %198 = vmatmul.bf16.gmra.mxu0 %v176
      %v199 = vpop.f32.mrf.mxu0
      %v200 = vadd.f32 0.0, %v199
      %v201 = vpop.f32.mrf.mxu0
      %v202 = vadd.f32 0.0, %v201
      %203 = vdwg.mxu0
      %vm204 = vcmp.ge.f32.partialorder %v195, 0.0
      %vm205 = vcmp.ge.f32.partialorder %v197, 0.0
      %vm206 = vcmp.ge.f32.partialorder %v200, 0.0
      %vm207 = vcmp.ge.f32.partialorder %v202, 0.0
      %v208 = vmul.f32 %v195, 0.01
      %v209 = vmul.f32 %v197, 0.01
      %v210 = vmul.f32 %v200, 0.01
      %v211 = vmul.f32 %v202, 0.01
      %v212 = vsel %vm204, %v195, %v208
      %v213 = vsel %vm205, %v197, %v209
      %v214 = vsel %vm206, %v200, %v210
      %v215 = vsel %vm207, %v202, %v211
      %v216 = vpack.c.bf16 %v212, %v212
      %v217 = vpack.c.bf16 %v213, %v213
      %v218 = vpack.c.bf16 %v214, %v214
      %v219 = vpack.c.bf16 %v215, %v215
      %vm220 = vcmask 11264
      %221 = vst.msk [vmem:[%s143] sm:$0xf] %vm220, %v216
      %222 = vst.msk [vmem:[%s143 + $0x4] sm:$0xf] %vm220, %v217
      %223 = vst.msk [vmem:[%s143 + $0x8] sm:$0xf] %vm220, %v218
      %224 = vst.msk [vmem:[%s143 + $0xc] sm:$0xf] %vm220, %v219
      %p225 = scmp.lt.s32.totalorder %s13, 1
      %s226 = scalar_select %p225, %s13, 1
      %s227 = smul.addr %s226, 4
      %s228 = smul.addr %s227, 4
      %s229 = scalar_lea.vmem %s2, %s228
      // Predicated region
      $region29: #{ddual_gcn_forward.7} parent=27 // pred_check
        %p230 = pneg %p78
      $region30: #{ddual_gcn_forward.7} parent=27 // pred_check_branch
        %232 = sbr.rel (%p230) target = $region32
      $region31: #{ddual_gcn_forward.7} parent=27 // pred_region
        _
      $region32: #{ddual_gcn_forward.7} parent=27 // pred_fallthru
        _
    $region28: #{ddual_gcn_forward.7} parent=5 // pred_fallthru
      _
    %p233 = scmp.le.s32.totalorder 2, %s8
    // Predicated region
    $region33: #{ddual_gcn_forward.7} parent=5 // pred_check
      %p234 = pneg %p233
    $region34: #{ddual_gcn_forward.7} parent=5 // pred_check_branch
      %236 = sbr.rel (%p234) target = $region36
    $region35: #{ddual_gcn_forward.7} parent=5 // pred_region
      %s237 = ssub.s32 %s8, 2
      // Predicated region
      $region37: #{ddual_gcn_forward.7} parent=35 // pred_check
        %p238 = pneg %p84
      $region38: #{ddual_gcn_forward.7} parent=35 // pred_check_branch
        %240 = sbr.rel (%p238) target = $region40
      $region39: #{ddual_gcn_forward.7} parent=35 // pred_region
        %p241 = scmp.lt.s32.totalorder %s14, 1
        %s242 = scalar_select %p241, %s14, 1
        %s243 = smul.addr %s242, 4
        %s244 = smul.addr %s243, 4
        %s245 = scalar_lea.vmem %s2, %s244
      $region40: #{ddual_gcn_forward.7} parent=35 // pred_fallthru
        _
    $region36: #{ddual_gcn_forward.7} parent=5 // pred_fallthru
      _
  $region6: #{ddual_gcn_forward.7} parent=0 // loop_footer
    %s12 = sadd.s32 1, %s8
  $region7: #{ddual_gcn_forward.7} parent=0 // loop_footer_branch
    %7 = sbr.rel target = $region3
  $region8: #{ddual_gcn_forward.7} parent=0 // loop_exit
    _

// kernel: ddual_gcn_forward.9
$region0: #{ddual_gcn_forward.9}
  #allocation0 [shape = 'u32[]', space=smem, size = 0x4, offset = 0x4, fixed_abs, tag = 'smem constant byte address 0x4 - core index']
  #allocation1 [shape = 'u32[72,128]{1,0:T(1,128)}', space=vmem, size = 0x9000, scoped, tag = 'internal scratch']
  #allocation2 [shape = 'f32[1]{0:T(128)S(6)}', space=smem, size = 0x200, scoped, tag = 'scoped memory for ddual_gcn_forward.9']
  %s0 = inlined_call_operand.vmem [shape: bf16[2,16,256], index: 0, kind: input, shape index: {}]
  %s1 = inlined_call_operand.vmem [shape: bf16[4,256], index: 1, kind: input, shape index: {}]
  %s2 = inlined_call_operand.vmem [shape: bf16[2,16,4], index: 2, kind: input, shape index: {}]
  %s3 = inlined_call_operand.vmem [shape: f32[2,8,4], index: 3, kind: input, shape index: {}]
  %s4 = inlined_call_operand.vmem [shape: bf16[4,16], index: 4, kind: input, shape index: {}]
  %s5 = inlined_call_operand.vmem [shape: bf16[16,8], index: 5, kind: input, shape index: {}]
  %s6 = inlined_call_operand.vmem [shape: bf16[16,16], index: 6, kind: input, shape index: {}]
  %s7 = inlined_call_operand.vmem [shape: bf16[16,16], index: 7, kind: input, shape index: {}]
  %s8 = inlined_call_operand.vmem [shape: f32[36,1], index: 8, kind: input, shape index: {}]
  %s9 = inlined_call_operand.<no memory space> [shape: f32[1], index: 9, kind: input, shape index: {}]
  %s10 = inlined_call_operand.vmem [shape: bf16[2,16,256], index: 10, kind: output, shape index: {}]
  %s11 = sld [smem:[#allocation0]]
  $region73: #{ddual_gcn_forward.9} parent=0
    _
  %s13 = ssub.s32 1, %s11
  %s14 = scalar_select 0, %s13, %s11
  %15 = sst [smem:[#allocation2]] %s9
  loop: start=0, step=1, limit=4
  $region2: #{ddual_gcn_forward.9} parent=0 // loop_pre_header
    _
  $region3: #{ddual_gcn_forward.9} parent=0 // loop_header
    %s17 = sphi 0, %s21
    %p18 = scmp.ge.s32.totalorder %s17, 4
    %s24 = sphi 0, %s36
    %s25 = sphi 0, %s32
    %s26 = sphi 0, %s24
    %s27 = sphi 0, %s25
    %s28 = sphi 0, %s26
    %s29 = sphi 0, %s27
    %s41 = sphi 0, %s43
    %s44 = sphi 0, %s41
    %s45 = sphi 0, %s44
    %s61 = sphi 0, %s45
    %s67 = sphi 0, %s69
    %s70 = sphi 0, %s67
    %s71 = sphi 0, %s70
    %s87 = sphi 0, %s71
    %s93 = sphi 0, %s95
    %s96 = sphi 0, %s93
    %s97 = sphi 0, %s96
    %s113 = sphi 0, %s97
    %s119 = sphi 0, %s121
    %s122 = sphi 0, %s119
    %s123 = sphi 0, %s122
    %s139 = sphi 0, %s123
    %s143 = sphi 0, %s143
    %s145 = sphi 0, %s143
    %s146 = sphi 0, %s145
    %s160 = sphi 0, %s146
    %s164 = sphi 0, %s164
    %s166 = sphi 0, %s164
    %s167 = sphi 0, %s166
    %s181 = sphi 0, %s167
    %s185 = sphi 0, %s185
    %s187 = sphi 0, %s185
    %s188 = sphi 0, %s187
    %s202 = sphi 0, %s188
    %s206 = sphi 0, %s206
    %s208 = sphi 0, %s206
    %s209 = sphi 0, %s208
    %s223 = sphi 0, %s209
    %s227 = sphi 0, %s227
    %s229 = sphi 0, %s227
    %s230 = sphi 0, %s229
    %s244 = sphi 0, %s230
    %s248 = sphi 0, %s248
    %s250 = sphi 0, %s248
    %s251 = sphi 0, %s250
    %s265 = sphi 0, %s251
    %s273 = sphi 0, %s275
    %s276 = sphi 0, %s273
    %s277 = sphi 0, %s276
    %s293 = sphi 0, %s277
  $region4: #{ddual_gcn_forward.9} parent=0 // loop_header_branch
    %20 = sbr.rel (%p18) target = $region8
  $region5: #{ddual_gcn_forward.9} parent=0 // loop_body
    %s22 = ssub.s32 %s17, 1
    %s23 = ssub.s32 %s17, 2
    %s30 = sadd.s32 1, %s25
    %p31 = scmp.ge.s32.totalorder %s30, 1
    %s32 = scalar_select %p31, 0, %s30
    %s33 = sadd.s32 1, %s24
    %s34 = scalar_select %p31, %s33, %s24
    %p35 = scmp.ge.s32.totalorder %s34, 2
    %s36 = scalar_select %p35, 0, %s34
    %s37 = ssub.s32 %s24, %s36
    %s38 = ssub.s32 %s25, %s32
    %s39 = sor.u32 %s37, %s38
    %p40 = scmp.eq.s32.totalorder %s39, 0
    %s42 = sadd.s32 %s41, 1
    %s43 = scalar_select %p40, %s41, %s42
    %p46 = pneg %p40
    %p47 = scmp.eq.s32.totalorder %s17, 1
    %p48 = por %p46, %p47
    %p49 = scmp.ne.s32.totalorder %s41, %s44
    %p50 = scmp.eq.s32.totalorder %s17, 0
    %p51 = por %p49, %p50
    %p52 = scmp.ne.s32.totalorder %s41, %s44
    %p53 = scmp.eq.s32.totalorder %s22, 1
    %p54 = por %p52, %p53
    %p55 = scmp.ne.s32.totalorder %s44, %s45
    %p56 = scmp.eq.s32.totalorder %s22, 0
    %p57 = por %p55, %p56
    %p58 = scmp.ne.s32.totalorder %s44, %s45
    %p59 = scmp.eq.s32.totalorder %s23, 1
    %p60 = por %p58, %p59
    %p62 = scmp.ne.s32.totalorder %s45, %s61
    %p63 = scmp.eq.s32.totalorder %s23, 0
    %p64 = por %p62, %p63
    %s65 = ssub.s32 %s25, %s32
    %p66 = scmp.eq.s32.totalorder %s65, 0
    %s68 = sadd.s32 %s67, 1
    %s69 = scalar_select %p66, %s67, %s68
    %p72 = pneg %p66
    %p73 = scmp.eq.s32.totalorder %s17, 1
    %p74 = por %p72, %p73
    %p75 = scmp.ne.s32.totalorder %s67, %s70
    %p76 = scmp.eq.s32.totalorder %s17, 0
    %p77 = por %p75, %p76
    %p78 = scmp.ne.s32.totalorder %s67, %s70
    %p79 = scmp.eq.s32.totalorder %s22, 1
    %p80 = por %p78, %p79
    %p81 = scmp.ne.s32.totalorder %s70, %s71
    %p82 = scmp.eq.s32.totalorder %s22, 0
    %p83 = por %p81, %p82
    %p84 = scmp.ne.s32.totalorder %s70, %s71
    %p85 = scmp.eq.s32.totalorder %s23, 1
    %p86 = por %p84, %p85
    %p88 = scmp.ne.s32.totalorder %s71, %s87
    %p89 = scmp.eq.s32.totalorder %s23, 0
    %p90 = por %p88, %p89
    %s91 = ssub.s32 %s24, %s36
    %p92 = scmp.eq.s32.totalorder %s91, 0
    %s94 = sadd.s32 %s93, 1
    %s95 = scalar_select %p92, %s93, %s94
    %p98 = pneg %p92
    %p99 = scmp.eq.s32.totalorder %s17, 1
    %p100 = por %p98, %p99
    %p101 = scmp.ne.s32.totalorder %s93, %s96
    %p102 = scmp.eq.s32.totalorder %s17, 0
    %p103 = por %p101, %p102
    %p104 = scmp.ne.s32.totalorder %s93, %s96
    %p105 = scmp.eq.s32.totalorder %s22, 1
    %p106 = por %p104, %p105
    %p107 = scmp.ne.s32.totalorder %s96, %s97
    %p108 = scmp.eq.s32.totalorder %s22, 0
    %p109 = por %p107, %p108
    %p110 = scmp.ne.s32.totalorder %s96, %s97
    %p111 = scmp.eq.s32.totalorder %s23, 1
    %p112 = por %p110, %p111
    %p114 = scmp.ne.s32.totalorder %s97, %s113
    %p115 = scmp.eq.s32.totalorder %s23, 0
    %p116 = por %p114, %p115
    %s117 = ssub.s32 %s24, %s36
    %p118 = scmp.eq.s32.totalorder %s117, 0
    %s120 = sadd.s32 %s119, 1
    %s121 = scalar_select %p118, %s119, %s120
    %p124 = pneg %p118
    %p125 = scmp.eq.s32.totalorder %s17, 1
    %p126 = por %p124, %p125
    %p127 = scmp.ne.s32.totalorder %s119, %s122
    %p128 = scmp.eq.s32.totalorder %s17, 0
    %p129 = por %p127, %p128
    %p130 = scmp.ne.s32.totalorder %s119, %s122
    %p131 = scmp.eq.s32.totalorder %s22, 1
    %p132 = por %p130, %p131
    %p133 = scmp.ne.s32.totalorder %s122, %s123
    %p134 = scmp.eq.s32.totalorder %s22, 0
    %p135 = por %p133, %p134
    %p136 = scmp.ne.s32.totalorder %s122, %s123
    %p137 = scmp.eq.s32.totalorder %s23, 1
    %p138 = por %p136, %p137
    %p140 = scmp.ne.s32.totalorder %s123, %s139
    %p141 = scmp.eq.s32.totalorder %s23, 0
    %p142 = por %p140, %p141
    %s144 = sadd.s32 %s143, 1
    %p147 = scmp.eq.s32.totalorder %s17, 1
    %p148 = scmp.ne.s32.totalorder %s143, %s145
    %p149 = scmp.eq.s32.totalorder %s17, 0
    %p150 = por %p148, %p149
    %p151 = scmp.ne.s32.totalorder %s143, %s145
    %p152 = scmp.eq.s32.totalorder %s22, 1
    %p153 = por %p151, %p152
    %p154 = scmp.ne.s32.totalorder %s145, %s146
    %p155 = scmp.eq.s32.totalorder %s22, 0
    %p156 = por %p154, %p155
    %p157 = scmp.ne.s32.totalorder %s145, %s146
    %p158 = scmp.eq.s32.totalorder %s23, 1
    %p159 = por %p157, %p158
    %p161 = scmp.ne.s32.totalorder %s146, %s160
    %p162 = scmp.eq.s32.totalorder %s23, 0
    %p163 = por %p161, %p162
    %s165 = sadd.s32 %s164, 1
    %p168 = scmp.eq.s32.totalorder %s17, 1
    %p169 = scmp.ne.s32.totalorder %s164, %s166
    %p170 = scmp.eq.s32.totalorder %s17, 0
    %p171 = por %p169, %p170
    %p172 = scmp.ne.s32.totalorder %s164, %s166
    %p173 = scmp.eq.s32.totalorder %s22, 1
    %p174 = por %p172, %p173
    %p175 = scmp.ne.s32.totalorder %s166, %s167
    %p176 = scmp.eq.s32.totalorder %s22, 0
    %p177 = por %p175, %p176
    %p178 = scmp.ne.s32.totalorder %s166, %s167
    %p179 = scmp.eq.s32.totalorder %s23, 1
    %p180 = por %p178, %p179
    %p182 = scmp.ne.s32.totalorder %s167, %s181
    %p183 = scmp.eq.s32.totalorder %s23, 0
    %p184 = por %p182, %p183
    %s186 = sadd.s32 %s185, 1
    %p189 = scmp.eq.s32.totalorder %s17, 1
    %p190 = scmp.ne.s32.totalorder %s185, %s187
    %p191 = scmp.eq.s32.totalorder %s17, 0
    %p192 = por %p190, %p191
    %p193 = scmp.ne.s32.totalorder %s185, %s187
    %p194 = scmp.eq.s32.totalorder %s22, 1
    %p195 = por %p193, %p194
    %p196 = scmp.ne.s32.totalorder %s187, %s188
    %p197 = scmp.eq.s32.totalorder %s22, 0
    %p198 = por %p196, %p197
    %p199 = scmp.ne.s32.totalorder %s187, %s188
    %p200 = scmp.eq.s32.totalorder %s23, 1
    %p201 = por %p199, %p200
    %p203 = scmp.ne.s32.totalorder %s188, %s202
    %p204 = scmp.eq.s32.totalorder %s23, 0
    %p205 = por %p203, %p204
    %s207 = sadd.s32 %s206, 1
    %p210 = scmp.eq.s32.totalorder %s17, 1
    %p211 = scmp.ne.s32.totalorder %s206, %s208
    %p212 = scmp.eq.s32.totalorder %s17, 0
    %p213 = por %p211, %p212
    %p214 = scmp.ne.s32.totalorder %s206, %s208
    %p215 = scmp.eq.s32.totalorder %s22, 1
    %p216 = por %p214, %p215
    %p217 = scmp.ne.s32.totalorder %s208, %s209
    %p218 = scmp.eq.s32.totalorder %s22, 0
    %p219 = por %p217, %p218
    %p220 = scmp.ne.s32.totalorder %s208, %s209
    %p221 = scmp.eq.s32.totalorder %s23, 1
    %p222 = por %p220, %p221
    %p224 = scmp.ne.s32.totalorder %s209, %s223
    %p225 = scmp.eq.s32.totalorder %s23, 0
    %p226 = por %p224, %p225
    %s228 = sadd.s32 %s227, 1
    %p231 = scmp.eq.s32.totalorder %s17, 1
    %p232 = scmp.ne.s32.totalorder %s227, %s229
    %p233 = scmp.eq.s32.totalorder %s17, 0
    %p234 = por %p232, %p233
    %p235 = scmp.ne.s32.totalorder %s227, %s229
    %p236 = scmp.eq.s32.totalorder %s22, 1
    %p237 = por %p235, %p236
    %p238 = scmp.ne.s32.totalorder %s229, %s230
    %p239 = scmp.eq.s32.totalorder %s22, 0
    %p240 = por %p238, %p239
    %p241 = scmp.ne.s32.totalorder %s229, %s230
    %p242 = scmp.eq.s32.totalorder %s23, 1
    %p243 = por %p241, %p242
    %p245 = scmp.ne.s32.totalorder %s230, %s244
    %p246 = scmp.eq.s32.totalorder %s23, 0
    %p247 = por %p245, %p246
    %s249 = sadd.s32 %s248, 1
    %p252 = scmp.eq.s32.totalorder %s17, 1
    %p253 = scmp.ne.s32.totalorder %s248, %s250
    %p254 = scmp.eq.s32.totalorder %s17, 0
    %p255 = por %p253, %p254
    %p256 = scmp.ne.s32.totalorder %s248, %s250
    %p257 = scmp.eq.s32.totalorder %s22, 1
    %p258 = por %p256, %p257
    %p259 = scmp.ne.s32.totalorder %s250, %s251
    %p260 = scmp.eq.s32.totalorder %s22, 0
    %p261 = por %p259, %p260
    %p262 = scmp.ne.s32.totalorder %s250, %s251
    %p263 = scmp.eq.s32.totalorder %s23, 1
    %p264 = por %p262, %p263
    %p266 = scmp.ne.s32.totalorder %s251, %s265
    %p267 = scmp.eq.s32.totalorder %s23, 0
    %p268 = por %p266, %p267
    %s269 = ssub.s32 %s24, %s36
    %s270 = ssub.s32 %s25, %s32
    %s271 = sor.u32 %s269, %s270
    %p272 = scmp.eq.s32.totalorder %s271, 0
    %s274 = sadd.s32 %s273, 1
    %s275 = scalar_select %p272, %s273, %s274
    %p278 = pneg %p272
    %p279 = scmp.eq.s32.totalorder %s17, 1
    %p280 = por %p278, %p279
    %p281 = scmp.ne.s32.totalorder %s273, %s276
    %p282 = scmp.eq.s32.totalorder %s17, 0
    %p283 = por %p281, %p282
    %p284 = scmp.ne.s32.totalorder %s273, %s276
    %p285 = scmp.eq.s32.totalorder %s22, 1
    %p286 = por %p284, %p285
    %p287 = scmp.ne.s32.totalorder %s276, %s277
    %p288 = scmp.eq.s32.totalorder %s22, 0
    %p289 = por %p287, %p288
    %p290 = scmp.ne.s32.totalorder %s276, %s277
    %p291 = scmp.eq.s32.totalorder %s23, 1
    %p292 = por %p290, %p291
    %p294 = scmp.ne.s32.totalorder %s277, %s293
    %p295 = scmp.eq.s32.totalorder %s23, 0
    %p296 = por %p294, %p295
    %p297 = scmp.le.s32.totalorder 1, %s17
    %p298 = scmp.lt.s32.totalorder %s17, 3
    %p299 = pnand %p297, %p298
    %p300 = pneg %p299
    // Predicated region
    $region9: #{ddual_gcn_forward.9} parent=5 // pred_check
      _
    $region10: #{ddual_gcn_forward.9} parent=5 // pred_check_branch
      %302 = sbr.rel (%p299) target = $region12
    $region11: #{ddual_gcn_forward.9} parent=5 // pred_region
      %s303 = ssub.s32 %s17, 1
      // Predicated region
      $region13: #{ddual_gcn_forward.9} parent=11 // pred_check
        %p304 = pneg %p83
      $region14: #{ddual_gcn_forward.9} parent=11 // pred_check_branch
        %306 = sbr.rel (%p304) target = $region16
      $region15: #{ddual_gcn_forward.9} parent=11 // pred_region
        %s307 = smul.u32 2, %s27
        %p308 = scmp.lt.s32.totalorder %s307, 1
        %s309 = scalar_select %p308, %s307, 1
        %s310 = smul.addr %s309, 2
        %s311 = scalar_lea.vmem %s1, %s310
        %s312 = smul.u32 2, %s27
      $region16: #{ddual_gcn_forward.9} parent=11 // pred_fallthru
        _
      // Predicated region
      $region17: #{ddual_gcn_forward.9} parent=11 // pred_check
        %p313 = pneg %p156
      $region18: #{ddual_gcn_forward.9} parent=11 // pred_check_branch
        %315 = sbr.rel (%p313) target = $region20
      $region19: #{ddual_gcn_forward.9} parent=11 // pred_region
        _
      $region20: #{ddual_gcn_forward.9} parent=11 // pred_fallthru
        _
      // Predicated region
      $region21: #{ddual_gcn_forward.9} parent=11 // pred_check
        %p316 = pneg %p177
      $region22: #{ddual_gcn_forward.9} parent=11 // pred_check_branch
        %318 = sbr.rel (%p316) target = $region24
      $region23: #{ddual_gcn_forward.9} parent=11 // pred_region
        _
      $region24: #{ddual_gcn_forward.9} parent=11 // pred_fallthru
        _
      // Predicated region
      $region25: #{ddual_gcn_forward.9} parent=11 // pred_check
        %p319 = pneg %p198
      $region26: #{ddual_gcn_forward.9} parent=11 // pred_check_branch
        %321 = sbr.rel (%p319) target = $region28
      $region27: #{ddual_gcn_forward.9} parent=11 // pred_region
        _
      $region28: #{ddual_gcn_forward.9} parent=11 // pred_fallthru
        _
      // Predicated region
      $region29: #{ddual_gcn_forward.9} parent=11 // pred_check
        %p322 = pneg %p219
      $region30: #{ddual_gcn_forward.9} parent=11 // pred_check_branch
        %324 = sbr.rel (%p322) target = $region32
      $region31: #{ddual_gcn_forward.9} parent=11 // pred_region
        _
      $region32: #{ddual_gcn_forward.9} parent=11 // pred_fallthru
        _
      // Predicated region
      $region33: #{ddual_gcn_forward.9} parent=11 // pred_check
        %p325 = pneg %p240
      $region34: #{ddual_gcn_forward.9} parent=11 // pred_check_branch
        %327 = sbr.rel (%p325) target = $region36
      $region35: #{ddual_gcn_forward.9} parent=11 // pred_region
        _
      $region36: #{ddual_gcn_forward.9} parent=11 // pred_fallthru
        _
      // Predicated region
      $region37: #{ddual_gcn_forward.9} parent=11 // pred_check
        %p328 = pneg %p261
      $region38: #{ddual_gcn_forward.9} parent=11 // pred_check_branch
        %330 = sbr.rel (%p328) target = $region40
      $region39: #{ddual_gcn_forward.9} parent=11 // pred_region
        _
      $region40: #{ddual_gcn_forward.9} parent=11 // pred_fallthru
        _
    $region12: #{ddual_gcn_forward.9} parent=5 // pred_fallthru
      _
    %p331 = scmp.lt.s32.totalorder %s17, 2
    // Predicated region
    $region41: #{ddual_gcn_forward.9} parent=5 // pred_check
      %p332 = pneg %p331
    $region42: #{ddual_gcn_forward.9} parent=5 // pred_check_branch
      %334 = sbr.rel (%p332) target = $region44
    $region43: #{ddual_gcn_forward.9} parent=5 // pred_region
      // Predicated region
      $region45: #{ddual_gcn_forward.9} parent=43 // pred_check
        %p335 = pneg %p51
      $region46: #{ddual_gcn_forward.9} parent=43 // pred_check_branch
        %337 = sbr.rel (%p335) target = $region48
      $region47: #{ddual_gcn_forward.9} parent=43 // pred_region
        %s338 = smul.u32 2, %s25
        %p339 = scmp.lt.s32.totalorder %s24, 1
        %s340 = scalar_select %p339, %s24, 1
        %p341 = scmp.lt.s32.totalorder %s338, 1
        %s342 = scalar_select %p341, %s338, 1
        %s343 = smul.addr %s340, 4
        %s344 = sadd.s32 %s342, %s343
        %s345 = smul.addr %s344, 4
        %s346 = scalar_lea.vmem %s0, %s345
        %s347 = smul.u32 2, %s25
      $region48: #{ddual_gcn_forward.9} parent=43 // pred_fallthru
        _
      // Predicated region
      $region49: #{ddual_gcn_forward.9} parent=43 // pred_check
        %p348 = pneg %p103
      $region50: #{ddual_gcn_forward.9} parent=43 // pred_check_branch
        %350 = sbr.rel (%p348) target = $region52
      $region51: #{ddual_gcn_forward.9} parent=43 // pred_region
        %p351 = scmp.lt.s32.totalorder %s24, 1
        %s352 = scalar_select %p351, %s24, 1
        %s353 = smul.addr %s352, 2
        %s354 = smul.addr %s353, 4
        %s355 = scalar_lea.vmem %s2, %s354
      $region52: #{ddual_gcn_forward.9} parent=43 // pred_fallthru
        _
      // Predicated region
      $region53: #{ddual_gcn_forward.9} parent=43 // pred_check
        %p356 = pneg %p129
      $region54: #{ddual_gcn_forward.9} parent=43 // pred_check_branch
        %358 = sbr.rel (%p356) target = $region56
      $region55: #{ddual_gcn_forward.9} parent=43 // pred_region
        %p359 = scmp.lt.s32.totalorder %s24, 1
        %s360 = scalar_select %p359, %s24, 1
        %s361 = smul.addr %s360, 8
        %s362 = scalar_lea.vmem %s3, %s361
      $region56: #{ddual_gcn_forward.9} parent=43 // pred_fallthru
        _
    $region44: #{ddual_gcn_forward.9} parent=5 // pred_fallthru
      _
    %p363 = scmp.le.s32.totalorder 1, %s17
    %p364 = scmp.lt.s32.totalorder %s17, 3
    %p365 = pnand %p363, %p364
    %p366 = pneg %p365
    // Predicated region
    $region57: #{ddual_gcn_forward.9} parent=5 // pred_check
      _
    $region58: #{ddual_gcn_forward.9} parent=5 // pred_check_branch
      %368 = sbr.rel (%p365) target = $region60
    $region59: #{ddual_gcn_forward.9} parent=5 // pred_region
      %s369 = ssub.s32 %s17, 1
      %s370 = smul.u32 2, %s27
      %p371 = scmp.lt.s32.totalorder %s26, 1
      %s372 = scalar_select %p371, %s26, 1
      %p373 = scmp.lt.s32.totalorder %s370, 1
      %s374 = scalar_select %p373, %s370, 1
      %s375 = smul.addr %s372, 4
      %s376 = sadd.s32 %s374, %s375
      %s377 = smul.addr %s376, 4
      %s378 = scalar_lea.vmem %s0, %s377
      %p379 = pneg %p57
      %p380 = pneg %p54
      %s381 = smul.u32 2, %s27
      %p382 = scmp.lt.s32.totalorder %s381, 1
      %s383 = scalar_select %p382, %s381, 1
      %s384 = smul.addr %s383, 2
      %s385 = scalar_lea.vmem %s1, %s384
      %p386 = pneg %p83
      %p387 = pneg %p80
      %p388 = scmp.lt.s32.totalorder %s26, 1
      %s389 = scalar_select %p388, %s26, 1
      %s390 = smul.addr %s389, 2
      %s391 = smul.addr %s390, 4
      %s392 = scalar_lea.vmem %s2, %s391
      %p393 = pneg %p109
      %p394 = pneg %p106
      %p395 = scmp.lt.s32.totalorder %s26, 1
      %s396 = scalar_select %p395, %s26, 1
      %s397 = smul.addr %s396, 8
      %s398 = scalar_lea.vmem %s3, %s397
      %p399 = pneg %p135
      %p400 = pneg %p132
      %p401 = pneg %p156
      %p402 = pneg %p153
      %p403 = pneg %p177
      %p404 = pneg %p174
      %p405 = pneg %p198
      %p406 = pneg %p195
      %p407 = pneg %p219
      %p408 = pneg %p216
      %p409 = pneg %p240
      %p410 = pneg %p237
      %p411 = pneg %p261
      %p412 = pneg %p258
      %p413 = pneg %p289
      %p414 = pneg %p286
      %s415 = smul.u32 2, %s27
      %p416 = scmp.lt.s32.totalorder %s26, 1
      %s417 = scalar_select %p416, %s26, 1
      %p418 = scmp.lt.s32.totalorder %s415, 1
      %s419 = scalar_select %p418, %s415, 1
      %s420 = smul.addr %s417, 4
      %s421 = sadd.s32 %s419, %s420
      %s422 = smul.addr %s421, 4
      %s423 = scalar_lea.vmem %s10, %s422
      %s424 = smul.u32 2, %s27
      %p425 = scmp.lt.s32.totalorder %s26, 1
      %s426 = scalar_select %p425, %s26, 1
      %p427 = scmp.lt.s32.totalorder %s424, 1
      %s428 = scalar_select %p427, %s424, 1
      %s429 = smul.addr %s426, 4
      %s430 = sadd.s32 %s428, %s429
      %s431 = smul.addr %s430, 4
      %s432 = scalar_lea.vmem %s0, %s431
      %s433 = smul.u32 2, %s27
      %s434 = smul.u32 2, %s27
      %p435 = scmp.lt.s32.totalorder %s434, 1
      %s436 = scalar_select %p435, %s434, 1
      %s437 = smul.addr %s436, 2
      %s438 = scalar_lea.vmem %s1, %s437
      %s439 = smul.u32 2, %s27
      %p440 = scmp.lt.s32.totalorder %s26, 1
      %s441 = scalar_select %p440, %s26, 1
      %s442 = smul.addr %s441, 2
      %s443 = smul.addr %s442, 4
      %s444 = scalar_lea.vmem %s2, %s443
      %p445 = scmp.lt.s32.totalorder %s26, 1
      %s446 = scalar_select %p445, %s26, 1
      %s447 = smul.addr %s446, 8
      %s448 = scalar_lea.vmem %s3, %s447
      %s449 = smul.u32 2, %s27
      %p450 = scmp.lt.s32.totalorder %s26, 1
      %s451 = scalar_select %p450, %s26, 1
      %p452 = scmp.lt.s32.totalorder %s449, 1
      %s453 = scalar_select %p452, %s449, 1
      %s454 = smul.addr %s451, 4
      %s455 = sadd.s32 %s453, %s454
      %s456 = smul.addr %s455, 4
      %s457 = scalar_lea.vmem %s10, %s456
      %s458 = smul.u32 2, %s27
      %v460 = vld [vmem:[%s432] sm:$0xff]
      %v461 = vld [vmem:[%s432 + $0x8] sm:$0xff]
      %v462 = vunpack.c.l.bf16 %v460
      %v463 = vunpack.c.h.bf16 %v460
      %v464 = vunpack.c.l.bf16 %v461
      %v465 = vunpack.c.h.bf16 %v461
      %v466 = vld [vmem:[%s444] sm:$0xf]
      %v467 = vld [vmem:[%s444 + $0x4] sm:$0xf]
      %v468 = vld [vmem:[%s438] sm:$0xf]
      %v471 = vunpack.c.l.b16 %v466
      %v472 = vunpack.c.l.b16 %v467
      %v473 = vpack.c.b16 %v472, %v471
      %475 = vst [vmem:[#allocation1] ss:$4 sm:$0xff] %v468
      %v476 = vld.sshfl [vmem:[#allocation1] sm:$0xff pattern:$0x73625140]
      %v477 = vld.sshfl [vmem:[#allocation1 + $0x8] sm:$0xff pattern:$0x73625140]
      %vm478 = vcmask 31744
      %v480 = vsel %vm478, %v473, 0
      %vm482 = vcmask 1041408
      %v483 = vsel %vm482, %v476, 0
      %v485 = vsel %vm482, %v477, 0
      %487 = vmatpush.bf16.msra.mxu0 0
      %488 = vmatpush.bf16.msra.mxu0 0
      %489 = vmatpush.bf16.msra.mxu0 0
      %490 = vmatpush.bf16.msra.mxu0 0
      %491 = vmatpush.bf16.msra.mxu0 0
      %492 = vmatpush.bf16.msra.mxu0 0
      %493 = vmatpush.bf16.msra.mxu0 0
      %494 = vmatpush.bf16.msra.mxu0 %v483
      %495 = vmatmul.bf16.gmra.mxu0 %v480
      %v496 = vpop.f32.mrf.mxu0
      %v497 = vadd.f32 0.0, %v496
      %v498 = vpop.f32.mrf.mxu0
      %v499 = vadd.f32 0.0, %v498
      %500 = vdwg.mxu0
      %501 = vmatpush.bf16.msra.mxu0 0
      %502 = vmatpush.bf16.msra.mxu0 0
      %503 = vmatpush.bf16.msra.mxu0 0
      %504 = vmatpush.bf16.msra.mxu0 0
      %505 = vmatpush.bf16.msra.mxu0 0
      %506 = vmatpush.bf16.msra.mxu0 0
      %507 = vmatpush.bf16.msra.mxu0 0
      %508 = vmatpush.bf16.msra.mxu0 %v485
      %509 = vmatmul.bf16.gmra.mxu0 %v480
      %v510 = vpop.f32.mrf.mxu0
      %v511 = vadd.f32 0.0, %v510
      %v512 = vpop.f32.mrf.mxu0
      %v513 = vadd.f32 0.0, %v512
      %514 = vdwg.mxu0
      %v515 = vmul.f32 %v462, %v497
      %v516 = vmul.f32 %v463, %v511
      %v517 = vmul.f32 %v464, %v499
      %v518 = vmul.f32 %v465, %v513
      %v519 = vadd.f32 %v515, %v462
      %v520 = vadd.f32 %v516, %v463
      %v521 = vadd.f32 %v517, %v464
      %v522 = vadd.f32 %v518, %v465
      %v523 = vld [vmem:[%s4] sm:$0x3]
      %v524 = vld [vmem:[%s8] sm:$0xf]
      %526 = vset.pattern.permute.xlu0 0
      %527 = vperm.xlu0 %526, %v524
      %v528 = vpop.permute.xlu0 %527
      %v532 = vunpack.c.l.b16 %v460
      %v533 = vunpack.c.h.b16 %v460
      %v534 = vunpack.c.l.b16 %v461
      %v535 = vunpack.c.h.b16 %v461
      %v536 = vpack.c.b16 %v534, %v532
      %v537 = vpack.c.b16 %v535, %v533
      %vm540 = vcmask 130048
      %v542 = vsel %vm540, %v523, 0
      %544 = vmatpush.bf16.msra.mxu0 0
      %545 = vmatpush.bf16.msra.mxu0 0
      %546 = vmatpush.bf16.msra.mxu0 0
      %547 = vmatpush.bf16.msra.mxu0 0
      %548 = vmatpush.bf16.msra.mxu0 0
      %549 = vmatpush.bf16.msra.mxu0 0
      %550 = vmatpush.bf16.msra.mxu0 0
      %551 = vmatpush.bf16.msra.mxu0 %v536
      %552 = vmatmul.bf16.gmra.mxu0 %v542
      %v553 = vpop.f32.mrf.mxu0
      %v554 = vadd.f32 %v528, %v553
      %v555 = vpop.f32.mrf.mxu0
      %556 = vdwg.mxu0
      %557 = vmatpush.bf16.msra.mxu0 0
      %558 = vmatpush.bf16.msra.mxu0 0
      %559 = vmatpush.bf16.msra.mxu0 0
      %560 = vmatpush.bf16.msra.mxu0 0
      %561 = vmatpush.bf16.msra.mxu0 0
      %562 = vmatpush.bf16.msra.mxu0 0
      %563 = vmatpush.bf16.msra.mxu0 0
      %564 = vmatpush.bf16.msra.mxu0 %v537
      %565 = vmatmul.bf16.gmra.mxu0 %v542
      %v566 = vpop.f32.mrf.mxu0
      %v567 = vadd.f32 %v528, %v566
      %v568 = vpop.f32.mrf.mxu0
      %569 = vdwg.mxu0
      %vm570 = vcmp.ge.f32.partialorder %v554, 0.0
      %vm571 = vcmp.ge.f32.partialorder %v567, 0.0
      %v572 = vmul.f32 %v554, 0.01
      %v573 = vmul.f32 %v567, 0.01
      %v574 = vsel %vm570, %v554, %v572
      %v575 = vsel %vm571, %v567, %v573
      %v576 = vld [vmem:[%s448] sm:$0xff]
      %v577 = vpack.c.bf16 %v576, %v576
      %v578 = vpack.c.bf16 %v574, %v574
      %v579 = vpack.c.bf16 %v575, %v575
      %v581 = vsel %vm478, %v577, 0
      %v584 = vsel %vm482, %v578, 0
      %v587 = vsel %vm482, %v579, 0
      %589 = vmatpush.bf16.msra.mxu0 0
      %590 = vmatpush.bf16.msra.mxu0 0
      %591 = vmatpush.bf16.msra.mxu0 0
      %592 = vmatpush.bf16.msra.mxu0 0
      %593 = vmatpush.bf16.msra.mxu0 0
      %594 = vmatpush.bf16.msra.mxu0 0
      %595 = vmatpush.bf16.msra.mxu0 0
      %596 = vmatpush.bf16.msra.mxu0 %v584
      %597 = vmatmul.bf16.gmra.mxu0 %v581
      %v598 = vpop.f32.mrf.mxu0
      %v599 = vadd.f32 0.0, %v598
      %v600 = vpop.f32.mrf.mxu0
      %601 = vdwg.mxu0
      %602 = vmatpush.bf16.msra.mxu0 0
      %603 = vmatpush.bf16.msra.mxu0 0
      %604 = vmatpush.bf16.msra.mxu0 0
      %605 = vmatpush.bf16.msra.mxu0 0
      %606 = vmatpush.bf16.msra.mxu0 0
      %607 = vmatpush.bf16.msra.mxu0 0
      %608 = vmatpush.bf16.msra.mxu0 0
      %609 = vmatpush.bf16.msra.mxu0 %v587
      %610 = vmatmul.bf16.gmra.mxu0 %v581
      %v611 = vpop.f32.mrf.mxu0
      %v612 = vadd.f32 0.0, %v611
      %v613 = vpop.f32.mrf.mxu0
      %614 = vdwg.mxu0
      %v615 = vld [vmem:[%s5] sm:$0xf]
      %v616 = vld [vmem:[%s5 + $0x4] sm:$0xf]
      %v617 = vpack.c.bf16 %v599, %v599
      %v618 = vpack.c.bf16 %v612, %v612
      %v619 = vld [vmem:[%s8 + $0x4] sm:$0xff]
      %v620 = vld [vmem:[%s8 + $0xc] sm:$0xff]
      %622 = vset.pattern.permute.xlu0 0
      %623 = vperm.xlu0 %622, %v619
      %v624 = vpop.permute.xlu0 %623
      %627 = vset.pattern.permute.xlu0 0
      %628 = vperm.xlu0 %627, %v620
      %v629 = vpop.permute.xlu0 %628
      %v633 = vunpack.c.l.b16 %v615
      %v634 = vunpack.c.l.b16 %v616
      %v635 = vpack.c.b16 %v634, %v633
      %vm636 = vcmask 64512
      %v638 = vsel %vm636, %v635, 0
      %vm640 = vcmask 1043456
      %v642 = vsel %vm640, %v617, 0
      %v645 = vsel %vm640, %v618, 0
      %647 = vmatpush.bf16.msra.mxu0 0
      %648 = vmatpush.bf16.msra.mxu0 0
      %649 = vmatpush.bf16.msra.mxu0 0
      %650 = vmatpush.bf16.msra.mxu0 0
      %651 = vmatpush.bf16.msra.mxu0 0
      %652 = vmatpush.bf16.msra.mxu0 0
      %653 = vmatpush.bf16.msra.mxu0 0
      %654 = vmatpush.bf16.msra.mxu0 %v642
      %655 = vmatmul.bf16.gmra.mxu0 %v638
      %v656 = vpop.f32.mrf.mxu0
      %v657 = vadd.f32 %v624, %v656
      %v658 = vpop.f32.mrf.mxu0
      %v659 = vadd.f32 %v629, %v658
      %660 = vdwg.mxu0
      %661 = vmatpush.bf16.msra.mxu0 0
      %662 = vmatpush.bf16.msra.mxu0 0
      %663 = vmatpush.bf16.msra.mxu0 0
      %664 = vmatpush.bf16.msra.mxu0 0
      %665 = vmatpush.bf16.msra.mxu0 0
      %666 = vmatpush.bf16.msra.mxu0 0
      %667 = vmatpush.bf16.msra.mxu0 0
      %668 = vmatpush.bf16.msra.mxu0 %v645
      %669 = vmatmul.bf16.gmra.mxu0 %v638
      %v670 = vpop.f32.mrf.mxu0
      %v671 = vadd.f32 %v624, %v670
      %v672 = vpop.f32.mrf.mxu0
      %v673 = vadd.f32 %v629, %v672
      %674 = vdwg.mxu0
      %vm675 = vcmp.ge.f32.partialorder %v657, 0.0
      %vm676 = vcmp.ge.f32.partialorder %v671, 0.0
      %vm677 = vcmp.ge.f32.partialorder %v659, 0.0
      %vm678 = vcmp.ge.f32.partialorder %v673, 0.0
      %v679 = vmul.f32 %v657, 0.01
      %v680 = vmul.f32 %v671, 0.01
      %v681 = vmul.f32 %v659, 0.01
      %v682 = vmul.f32 %v673, 0.01
      %v683 = vsel %vm675, %v657, %v679
      %v684 = vsel %vm676, %v671, %v680
      %v685 = vsel %vm677, %v659, %v681
      %v686 = vsel %vm678, %v673, %v682
      %s687 = sld [smem:[#allocation2]]
      %v688 = vstv %s687
      %v689 = vmul.f32 %v688, %v683
      %v690 = vmul.f32 %v688, %v684
      %v691 = vmul.f32 %v688, %v685
      %v692 = vmul.f32 %v688, %v686
      %v693 = vadd.f32 %v689, %v462
      %v694 = vadd.f32 %v690, %v463
      %v695 = vadd.f32 %v691, %v464
      %v696 = vadd.f32 %v692, %v465
      %v697 = vld [vmem:[%s6] sm:$0xf]
      %v698 = vld [vmem:[%s6 + $0x4] sm:$0xf]
      %v699 = vpack.c.bf16 %v521, %v519
      %v700 = vpack.c.bf16 %v522, %v520
      %v701 = vld [vmem:[%s7] sm:$0xf]
      %v702 = vld [vmem:[%s7 + $0x4] sm:$0xf]
      %v703 = vpack.c.bf16 %v695, %v693
      %v704 = vpack.c.bf16 %v696, %v694
      %v707 = vunpack.c.l.b16 %v701
      %v708 = vunpack.c.l.b16 %v702
      %v709 = vpack.c.b16 %v708, %v707
      %v711 = vsel %vm540, %v709, 0
      %713 = vmatpush.bf16.msra.mxu0 0
      %714 = vmatpush.bf16.msra.mxu0 0
      %715 = vmatpush.bf16.msra.mxu0 0
      %716 = vmatpush.bf16.msra.mxu0 0
      %717 = vmatpush.bf16.msra.mxu0 0
      %718 = vmatpush.bf16.msra.mxu0 0
      %719 = vmatpush.bf16.msra.mxu0 0
      %720 = vmatpush.bf16.msra.mxu0 %v703
      %721 = vmatmul.bf16.gmra.mxu0 %v711
      %v722 = vpop.f32.mrf.mxu0
      %v723 = vadd.f32 0.0, %v722
      %v724 = vpop.f32.mrf.mxu0
      %v725 = vadd.f32 0.0, %v724
      %726 = vdwg.mxu0
      %727 = vmatpush.bf16.msra.mxu0 0
      %728 = vmatpush.bf16.msra.mxu0 0
      %729 = vmatpush.bf16.msra.mxu0 0
      %730 = vmatpush.bf16.msra.mxu0 0
      %731 = vmatpush.bf16.msra.mxu0 0
      %732 = vmatpush.bf16.msra.mxu0 0
      %733 = vmatpush.bf16.msra.mxu0 0
      %734 = vmatpush.bf16.msra.mxu0 %v704
      %735 = vmatmul.bf16.gmra.mxu0 %v711
      %v736 = vpop.f32.mrf.mxu0
      %v737 = vadd.f32 0.0, %v736
      %v738 = vpop.f32.mrf.mxu0
      %v739 = vadd.f32 0.0, %v738
      %740 = vdwg.mxu0
      %v743 = vunpack.c.l.b16 %v697
      %v744 = vunpack.c.l.b16 %v698
      %v745 = vpack.c.b16 %v744, %v743
      %v747 = vsel %vm540, %v745, 0
      %749 = vmatpush.bf16.msra.mxu0 0
      %750 = vmatpush.bf16.msra.mxu0 0
      %751 = vmatpush.bf16.msra.mxu0 0
      %752 = vmatpush.bf16.msra.mxu0 0
      %753 = vmatpush.bf16.msra.mxu0 0
      %754 = vmatpush.bf16.msra.mxu0 0
      %755 = vmatpush.bf16.msra.mxu0 0
      %756 = vmatpush.bf16.msra.mxu0 %v699
      %757 = vmatmul.bf16.gmra.mxu0 %v747
      %v758 = vpop.f32.mrf.mxu0
      %v759 = vadd.f32 %v723, %v758
      %v760 = vpop.f32.mrf.mxu0
      %v761 = vadd.f32 %v725, %v760
      %762 = vdwg.mxu0
      %763 = vmatpush.bf16.msra.mxu0 0
      %764 = vmatpush.bf16.msra.mxu0 0
      %765 = vmatpush.bf16.msra.mxu0 0
      %766 = vmatpush.bf16.msra.mxu0 0
      %767 = vmatpush.bf16.msra.mxu0 0
      %768 = vmatpush.bf16.msra.mxu0 0
      %769 = vmatpush.bf16.msra.mxu0 0
      %770 = vmatpush.bf16.msra.mxu0 %v700
      %771 = vmatmul.bf16.gmra.mxu0 %v747
      %v772 = vpop.f32.mrf.mxu0
      %v773 = vadd.f32 %v737, %v772
      %v774 = vpop.f32.mrf.mxu0
      %v775 = vadd.f32 %v739, %v774
      %776 = vdwg.mxu0
      %v777 = vld [vmem:[%s8 + $0x14] sm:$0xff]
      %v778 = vld [vmem:[%s8 + $0x1c] sm:$0xff]
      %780 = vset.pattern.permute.xlu0 0
      %781 = vperm.xlu0 %780, %v777
      %v782 = vpop.permute.xlu0 %781
      %785 = vset.pattern.permute.xlu0 0
      %786 = vperm.xlu0 %785, %v778
      %v787 = vpop.permute.xlu0 %786
      %v789 = vadd.f32 %v759, %v782
      %v790 = vadd.f32 %v773, %v782
      %v791 = vadd.f32 %v761, %v787
      %v792 = vadd.f32 %v775, %v787
      %vm793 = vcmp.ge.f32.partialorder %v789, 0.0
      %vm794 = vcmp.ge.f32.partialorder %v790, 0.0
      %vm795 = vcmp.ge.f32.partialorder %v791, 0.0
      %vm796 = vcmp.ge.f32.partialorder %v792, 0.0
      %v797 = vmul.f32 %v789, 0.01
      %v798 = vmul.f32 %v790, 0.01
      %v799 = vmul.f32 %v791, 0.01
      %v800 = vmul.f32 %v792, 0.01
      %v801 = vsel %vm793, %v789, %v797
      %v802 = vsel %vm794, %v790, %v798
      %v803 = vsel %vm795, %v791, %v799
      %v804 = vsel %vm796, %v792, %v800
      %v805 = vpack.c.bf16 %v802, %v801
      %v806 = vpack.c.bf16 %v804, %v803
      %807 = vst [vmem:[%s457] sm:$0xff] %v805
      %808 = vst [vmem:[%s457 + $0x8] sm:$0xff] %v806
      %s809 = smul.u32 2, %s27
      %p810 = scmp.lt.s32.totalorder %s26, 1
      %s811 = scalar_select %p810, %s26, 1
      %p812 = scmp.lt.s32.totalorder %s809, 1
      %s813 = scalar_select %p812, %s809, 1
      %s814 = smul.addr %s811, 4
      %s815 = sadd.s32 %s813, %s814
      %s816 = smul.addr %s815, 4
      %s817 = scalar_lea.vmem %s10, %s816
      // Predicated region
      $region61: #{ddual_gcn_forward.9} parent=59 // pred_check
        %p818 = pneg %p286
      $region62: #{ddual_gcn_forward.9} parent=59 // pred_check_branch
        %820 = sbr.rel (%p818) target = $region64
      $region63: #{ddual_gcn_forward.9} parent=59 // pred_region
        %s821 = smul.u32 2, %s27
      $region64: #{ddual_gcn_forward.9} parent=59 // pred_fallthru
        _
    $region60: #{ddual_gcn_forward.9} parent=5 // pred_fallthru
      _
    %p822 = scmp.le.s32.totalorder 2, %s17
    // Predicated region
    $region65: #{ddual_gcn_forward.9} parent=5 // pred_check
      %p823 = pneg %p822
    $region66: #{ddual_gcn_forward.9} parent=5 // pred_check_branch
      %825 = sbr.rel (%p823) target = $region68
    $region67: #{ddual_gcn_forward.9} parent=5 // pred_region
      %s826 = ssub.s32 %s17, 2
      // Predicated region
      $region69: #{ddual_gcn_forward.9} parent=67 // pred_check
        %p827 = pneg %p292
      $region70: #{ddual_gcn_forward.9} parent=67 // pred_check_branch
        %829 = sbr.rel (%p827) target = $region72
      $region71: #{ddual_gcn_forward.9} parent=67 // pred_region
        %s830 = smul.u32 2, %s29
        %p831 = scmp.lt.s32.totalorder %s28, 1
        %s832 = scalar_select %p831, %s28, 1
        %p833 = scmp.lt.s32.totalorder %s830, 1
        %s834 = scalar_select %p833, %s830, 1
        %s835 = smul.addr %s832, 4
        %s836 = sadd.s32 %s834, %s835
        %s837 = smul.addr %s836, 4
        %s838 = scalar_lea.vmem %s10, %s837
      $region72: #{ddual_gcn_forward.9} parent=67 // pred_fallthru
        _
    $region68: #{ddual_gcn_forward.9} parent=5 // pred_fallthru
      _
  $region6: #{ddual_gcn_forward.9} parent=0 // loop_footer
    %s21 = sadd.s32 1, %s17
  $region7: #{ddual_gcn_forward.9} parent=0 // loop_footer_branch
    %16 = sbr.rel target = $region3
  $region8: #{ddual_gcn_forward.9} parent=0 // loop_exit
    _

// kernel: ddual_gcn_forward.8
$region0: #{ddual_gcn_forward.8}
  #allocation0 [shape = 'u32[]', space=smem, size = 0x4, offset = 0x4, fixed_abs, tag = 'smem constant byte address 0x4 - core index']
  #allocation1 [shape = 'u32[72,128]{1,0:T(1,128)}', space=vmem, size = 0x9000, scoped, tag = 'internal scratch']
  #allocation2 [shape = 'f32[8,4]{1,0:T(8,128)}', space=vmem, size = 0x1000, scoped, tag = 'scratch operand']
  #allocation3 [shape = 'f32[1]{0:T(128)S(6)}', space=smem, size = 0x200, scoped, tag = 'scoped memory for ddual_gcn_forward.8']
  %s0 = inlined_call_operand.vmem [shape: bf16[2,16,256], index: 0, kind: input, shape index: {}]
  %s1 = inlined_call_operand.vmem [shape: bf16[2,16,4], index: 1, kind: input, shape index: {}]
  %s2 = inlined_call_operand.vmem [shape: bf16[24,16], index: 2, kind: input, shape index: {}]
  %s3 = inlined_call_operand.vmem [shape: f32[8,8], index: 3, kind: input, shape index: {}]
  %s4 = inlined_call_operand.vmem [shape: bf16[16,8], index: 4, kind: input, shape index: {}]
  %s5 = inlined_call_operand.vmem [shape: bf16[12,16], index: 5, kind: input, shape index: {}]
  %s6 = inlined_call_operand.vmem [shape: f32[4,4], index: 6, kind: input, shape index: {}]
  %s7 = inlined_call_operand.vmem [shape: f32[8,8], index: 7, kind: input, shape index: {}]
  %s8 = inlined_call_operand.vmem [shape: f32[72,1], index: 8, kind: input, shape index: {}]
  %s9 = inlined_call_operand.<no memory space> [shape: f32[1], index: 9, kind: input, shape index: {}]
  %s10 = inlined_call_operand.vmem [shape: bf16[2,16,4], index: 10, kind: output, shape index: {0}]
  %s11 = inlined_call_operand.vmem [shape: f32[2,8,4], index: 11, kind: output, shape index: {1}]
  %12 = xla_tuple %s10, %s11
  %s13 = sld [smem:[#allocation0]]
  $region89: #{ddual_gcn_forward.8} parent=0
    _
  %s15 = ssub.s32 1, %s13
  %s16 = scalar_select 0, %s15, %s13
  %17 = sst [smem:[#allocation3]] %s9
  loop: start=0, step=1, limit=4
  $region2: #{ddual_gcn_forward.8} parent=0 // loop_pre_header
    _
  $region3: #{ddual_gcn_forward.8} parent=0 // loop_header
    %s19 = sphi 0, %s23
    %p20 = scmp.ge.s32.totalorder %s19, 4
    %s26 = sphi 0, %s38
    %s27 = sphi 0, %s34
    %s28 = sphi 0, %s26
    %s29 = sphi 0, %s27
    %s30 = sphi 0, %s28
    %s31 = sphi 0, %s29
    %s43 = sphi 0, %s45
    %s46 = sphi 0, %s43
    %s47 = sphi 0, %s46
    %s63 = sphi 0, %s47
    %s69 = sphi 0, %s71
    %s72 = sphi 0, %s69
    %s73 = sphi 0, %s72
    %s89 = sphi 0, %s73
    %s93 = sphi 0, %s93
    %s95 = sphi 0, %s93
    %s96 = sphi 0, %s95
    %s110 = sphi 0, %s96
    %s114 = sphi 0, %s114
    %s116 = sphi 0, %s114
    %s117 = sphi 0, %s116
    %s131 = sphi 0, %s117
    %s135 = sphi 0, %s135
    %s137 = sphi 0, %s135
    %s138 = sphi 0, %s137
    %s152 = sphi 0, %s138
    %s156 = sphi 0, %s156
    %s158 = sphi 0, %s156
    %s159 = sphi 0, %s158
    %s173 = sphi 0, %s159
    %s177 = sphi 0, %s177
    %s179 = sphi 0, %s177
    %s180 = sphi 0, %s179
    %s194 = sphi 0, %s180
    %s198 = sphi 0, %s198
    %s200 = sphi 0, %s198
    %s201 = sphi 0, %s200
    %s215 = sphi 0, %s201
    %s219 = sphi 0, %s219
    %s221 = sphi 0, %s219
    %s222 = sphi 0, %s221
    %s236 = sphi 0, %s222
    %s240 = sphi 0, %s240
    %s242 = sphi 0, %s240
    %s243 = sphi 0, %s242
    %s257 = sphi 0, %s243
    %s263 = sphi 0, %s265
    %s266 = sphi 0, %s263
    %s267 = sphi 0, %s266
    %s283 = sphi 0, %s267
    %s289 = sphi 0, %s291
    %s292 = sphi 0, %s289
    %s293 = sphi 0, %s292
    %s309 = sphi 0, %s293
  $region4: #{ddual_gcn_forward.8} parent=0 // loop_header_branch
    %22 = sbr.rel (%p20) target = $region8
  $region5: #{ddual_gcn_forward.8} parent=0 // loop_body
    %s24 = ssub.s32 %s19, 1
    %s25 = ssub.s32 %s19, 2
    %s32 = sadd.s32 1, %s27
    %p33 = scmp.ge.s32.totalorder %s32, 1
    %s34 = scalar_select %p33, 0, %s32
    %s35 = sadd.s32 1, %s26
    %s36 = scalar_select %p33, %s35, %s26
    %p37 = scmp.ge.s32.totalorder %s36, 2
    %s38 = scalar_select %p37, 0, %s36
    %s39 = ssub.s32 %s26, %s38
    %s40 = ssub.s32 %s27, %s34
    %s41 = sor.u32 %s39, %s40
    %p42 = scmp.eq.s32.totalorder %s41, 0
    %s44 = sadd.s32 %s43, 1
    %s45 = scalar_select %p42, %s43, %s44
    %p48 = pneg %p42
    %p49 = scmp.eq.s32.totalorder %s19, 1
    %p50 = por %p48, %p49
    %p51 = scmp.ne.s32.totalorder %s43, %s46
    %p52 = scmp.eq.s32.totalorder %s19, 0
    %p53 = por %p51, %p52
    %p54 = scmp.ne.s32.totalorder %s43, %s46
    %p55 = scmp.eq.s32.totalorder %s24, 1
    %p56 = por %p54, %p55
    %p57 = scmp.ne.s32.totalorder %s46, %s47
    %p58 = scmp.eq.s32.totalorder %s24, 0
    %p59 = por %p57, %p58
    %p60 = scmp.ne.s32.totalorder %s46, %s47
    %p61 = scmp.eq.s32.totalorder %s25, 1
    %p62 = por %p60, %p61
    %p64 = scmp.ne.s32.totalorder %s47, %s63
    %p65 = scmp.eq.s32.totalorder %s25, 0
    %p66 = por %p64, %p65
    %s67 = ssub.s32 %s26, %s38
    %p68 = scmp.eq.s32.totalorder %s67, 0
    %s70 = sadd.s32 %s69, 1
    %s71 = scalar_select %p68, %s69, %s70
    %p74 = pneg %p68
    %p75 = scmp.eq.s32.totalorder %s19, 1
    %p76 = por %p74, %p75
    %p77 = scmp.ne.s32.totalorder %s69, %s72
    %p78 = scmp.eq.s32.totalorder %s19, 0
    %p79 = por %p77, %p78
    %p80 = scmp.ne.s32.totalorder %s69, %s72
    %p81 = scmp.eq.s32.totalorder %s24, 1
    %p82 = por %p80, %p81
    %p83 = scmp.ne.s32.totalorder %s72, %s73
    %p84 = scmp.eq.s32.totalorder %s24, 0
    %p85 = por %p83, %p84
    %p86 = scmp.ne.s32.totalorder %s72, %s73
    %p87 = scmp.eq.s32.totalorder %s25, 1
    %p88 = por %p86, %p87
    %p90 = scmp.ne.s32.totalorder %s73, %s89
    %p91 = scmp.eq.s32.totalorder %s25, 0
    %p92 = por %p90, %p91
    %s94 = sadd.s32 %s93, 1
    %p97 = scmp.eq.s32.totalorder %s19, 1
    %p98 = scmp.ne.s32.totalorder %s93, %s95
    %p99 = scmp.eq.s32.totalorder %s19, 0
    %p100 = por %p98, %p99
    %p101 = scmp.ne.s32.totalorder %s93, %s95
    %p102 = scmp.eq.s32.totalorder %s24, 1
    %p103 = por %p101, %p102
    %p104 = scmp.ne.s32.totalorder %s95, %s96
    %p105 = scmp.eq.s32.totalorder %s24, 0
    %p106 = por %p104, %p105
    %p107 = scmp.ne.s32.totalorder %s95, %s96
    %p108 = scmp.eq.s32.totalorder %s25, 1
    %p109 = por %p107, %p108
    %p111 = scmp.ne.s32.totalorder %s96, %s110
    %p112 = scmp.eq.s32.totalorder %s25, 0
    %p113 = por %p111, %p112
    %s115 = sadd.s32 %s114, 1
    %p118 = scmp.eq.s32.totalorder %s19, 1
    %p119 = scmp.ne.s32.totalorder %s114, %s116
    %p120 = scmp.eq.s32.totalorder %s19, 0
    %p121 = por %p119, %p120
    %p122 = scmp.ne.s32.totalorder %s114, %s116
    %p123 = scmp.eq.s32.totalorder %s24, 1
    %p124 = por %p122, %p123
    %p125 = scmp.ne.s32.totalorder %s116, %s117
    %p126 = scmp.eq.s32.totalorder %s24, 0
    %p127 = por %p125, %p126
    %p128 = scmp.ne.s32.totalorder %s116, %s117
    %p129 = scmp.eq.s32.totalorder %s25, 1
    %p130 = por %p128, %p129
    %p132 = scmp.ne.s32.totalorder %s117, %s131
    %p133 = scmp.eq.s32.totalorder %s25, 0
    %p134 = por %p132, %p133
    %s136 = sadd.s32 %s135, 1
    %p139 = scmp.eq.s32.totalorder %s19, 1
    %p140 = scmp.ne.s32.totalorder %s135, %s137
    %p141 = scmp.eq.s32.totalorder %s19, 0
    %p142 = por %p140, %p141
    %p143 = scmp.ne.s32.totalorder %s135, %s137
    %p144 = scmp.eq.s32.totalorder %s24, 1
    %p145 = por %p143, %p144
    %p146 = scmp.ne.s32.totalorder %s137, %s138
    %p147 = scmp.eq.s32.totalorder %s24, 0
    %p148 = por %p146, %p147
    %p149 = scmp.ne.s32.totalorder %s137, %s138
    %p150 = scmp.eq.s32.totalorder %s25, 1
    %p151 = por %p149, %p150
    %p153 = scmp.ne.s32.totalorder %s138, %s152
    %p154 = scmp.eq.s32.totalorder %s25, 0
    %p155 = por %p153, %p154
    %s157 = sadd.s32 %s156, 1
    %p160 = scmp.eq.s32.totalorder %s19, 1
    %p161 = scmp.ne.s32.totalorder %s156, %s158
    %p162 = scmp.eq.s32.totalorder %s19, 0
    %p163 = por %p161, %p162
    %p164 = scmp.ne.s32.totalorder %s156, %s158
    %p165 = scmp.eq.s32.totalorder %s24, 1
    %p166 = por %p164, %p165
    %p167 = scmp.ne.s32.totalorder %s158, %s159
    %p168 = scmp.eq.s32.totalorder %s24, 0
    %p169 = por %p167, %p168
    %p170 = scmp.ne.s32.totalorder %s158, %s159
    %p171 = scmp.eq.s32.totalorder %s25, 1
    %p172 = por %p170, %p171
    %p174 = scmp.ne.s32.totalorder %s159, %s173
    %p175 = scmp.eq.s32.totalorder %s25, 0
    %p176 = por %p174, %p175
    %s178 = sadd.s32 %s177, 1
    %p181 = scmp.eq.s32.totalorder %s19, 1
    %p182 = scmp.ne.s32.totalorder %s177, %s179
    %p183 = scmp.eq.s32.totalorder %s19, 0
    %p184 = por %p182, %p183
    %p185 = scmp.ne.s32.totalorder %s177, %s179
    %p186 = scmp.eq.s32.totalorder %s24, 1
    %p187 = por %p185, %p186
    %p188 = scmp.ne.s32.totalorder %s179, %s180
    %p189 = scmp.eq.s32.totalorder %s24, 0
    %p190 = por %p188, %p189
    %p191 = scmp.ne.s32.totalorder %s179, %s180
    %p192 = scmp.eq.s32.totalorder %s25, 1
    %p193 = por %p191, %p192
    %p195 = scmp.ne.s32.totalorder %s180, %s194
    %p196 = scmp.eq.s32.totalorder %s25, 0
    %p197 = por %p195, %p196
    %s199 = sadd.s32 %s198, 1
    %p202 = scmp.eq.s32.totalorder %s19, 1
    %p203 = scmp.ne.s32.totalorder %s198, %s200
    %p204 = scmp.eq.s32.totalorder %s19, 0
    %p205 = por %p203, %p204
    %p206 = scmp.ne.s32.totalorder %s198, %s200
    %p207 = scmp.eq.s32.totalorder %s24, 1
    %p208 = por %p206, %p207
    %p209 = scmp.ne.s32.totalorder %s200, %s201
    %p210 = scmp.eq.s32.totalorder %s24, 0
    %p211 = por %p209, %p210
    %p212 = scmp.ne.s32.totalorder %s200, %s201
    %p213 = scmp.eq.s32.totalorder %s25, 1
    %p214 = por %p212, %p213
    %p216 = scmp.ne.s32.totalorder %s201, %s215
    %p217 = scmp.eq.s32.totalorder %s25, 0
    %p218 = por %p216, %p217
    %s220 = sadd.s32 %s219, 1
    %p223 = scmp.eq.s32.totalorder %s19, 1
    %p224 = scmp.ne.s32.totalorder %s219, %s221
    %p225 = scmp.eq.s32.totalorder %s19, 0
    %p226 = por %p224, %p225
    %p227 = scmp.ne.s32.totalorder %s219, %s221
    %p228 = scmp.eq.s32.totalorder %s24, 1
    %p229 = por %p227, %p228
    %p230 = scmp.ne.s32.totalorder %s221, %s222
    %p231 = scmp.eq.s32.totalorder %s24, 0
    %p232 = por %p230, %p231
    %p233 = scmp.ne.s32.totalorder %s221, %s222
    %p234 = scmp.eq.s32.totalorder %s25, 1
    %p235 = por %p233, %p234
    %p237 = scmp.ne.s32.totalorder %s222, %s236
    %p238 = scmp.eq.s32.totalorder %s25, 0
    %p239 = por %p237, %p238
    %s241 = sadd.s32 %s240, 1
    %p244 = scmp.eq.s32.totalorder %s19, 1
    %p245 = scmp.ne.s32.totalorder %s240, %s242
    %p246 = scmp.eq.s32.totalorder %s19, 0
    %p247 = por %p245, %p246
    %p248 = scmp.ne.s32.totalorder %s240, %s242
    %p249 = scmp.eq.s32.totalorder %s24, 1
    %p250 = por %p248, %p249
    %p251 = scmp.ne.s32.totalorder %s242, %s243
    %p252 = scmp.eq.s32.totalorder %s24, 0
    %p253 = por %p251, %p252
    %p254 = scmp.ne.s32.totalorder %s242, %s243
    %p255 = scmp.eq.s32.totalorder %s25, 1
    %p256 = por %p254, %p255
    %p258 = scmp.ne.s32.totalorder %s243, %s257
    %p259 = scmp.eq.s32.totalorder %s25, 0
    %p260 = por %p258, %p259
    %s261 = ssub.s32 %s26, %s38
    %p262 = scmp.eq.s32.totalorder %s261, 0
    %s264 = sadd.s32 %s263, 1
    %s265 = scalar_select %p262, %s263, %s264
    %p268 = pneg %p262
    %p269 = scmp.eq.s32.totalorder %s19, 1
    %p270 = por %p268, %p269
    %p271 = scmp.ne.s32.totalorder %s263, %s266
    %p272 = scmp.eq.s32.totalorder %s19, 0
    %p273 = por %p271, %p272
    %p274 = scmp.ne.s32.totalorder %s263, %s266
    %p275 = scmp.eq.s32.totalorder %s24, 1
    %p276 = por %p274, %p275
    %p277 = scmp.ne.s32.totalorder %s266, %s267
    %p278 = scmp.eq.s32.totalorder %s24, 0
    %p279 = por %p277, %p278
    %p280 = scmp.ne.s32.totalorder %s266, %s267
    %p281 = scmp.eq.s32.totalorder %s25, 1
    %p282 = por %p280, %p281
    %p284 = scmp.ne.s32.totalorder %s267, %s283
    %p285 = scmp.eq.s32.totalorder %s25, 0
    %p286 = por %p284, %p285
    %s287 = ssub.s32 %s26, %s38
    %p288 = scmp.eq.s32.totalorder %s287, 0
    %s290 = sadd.s32 %s289, 1
    %s291 = scalar_select %p288, %s289, %s290
    %p294 = pneg %p288
    %p295 = scmp.eq.s32.totalorder %s19, 1
    %p296 = por %p294, %p295
    %p297 = scmp.ne.s32.totalorder %s289, %s292
    %p298 = scmp.eq.s32.totalorder %s19, 0
    %p299 = por %p297, %p298
    %p300 = scmp.ne.s32.totalorder %s289, %s292
    %p301 = scmp.eq.s32.totalorder %s24, 1
    %p302 = por %p300, %p301
    %p303 = scmp.ne.s32.totalorder %s292, %s293
    %p304 = scmp.eq.s32.totalorder %s24, 0
    %p305 = por %p303, %p304
    %p306 = scmp.ne.s32.totalorder %s292, %s293
    %p307 = scmp.eq.s32.totalorder %s25, 1
    %p308 = por %p306, %p307
    %p310 = scmp.ne.s32.totalorder %s293, %s309
    %p311 = scmp.eq.s32.totalorder %s25, 0
    %p312 = por %p310, %p311
    %p313 = scmp.le.s32.totalorder 1, %s19
    %p314 = scmp.lt.s32.totalorder %s19, 3
    %p315 = pnand %p313, %p314
    %p316 = pneg %p315
    // Predicated region
    $region9: #{ddual_gcn_forward.8} parent=5 // pred_check
      _
    $region10: #{ddual_gcn_forward.8} parent=5 // pred_check_branch
      %318 = sbr.rel (%p315) target = $region12
    $region11: #{ddual_gcn_forward.8} parent=5 // pred_region
      %s319 = ssub.s32 %s19, 1
      // Predicated region
      $region13: #{ddual_gcn_forward.8} parent=11 // pred_check
        %p320 = pneg %p106
      $region14: #{ddual_gcn_forward.8} parent=11 // pred_check_branch
        %322 = sbr.rel (%p320) target = $region16
      $region15: #{ddual_gcn_forward.8} parent=11 // pred_region
        _
      $region16: #{ddual_gcn_forward.8} parent=11 // pred_fallthru
        _
      // Predicated region
      $region17: #{ddual_gcn_forward.8} parent=11 // pred_check
        %p323 = pneg %p127
      $region18: #{ddual_gcn_forward.8} parent=11 // pred_check_branch
        %325 = sbr.rel (%p323) target = $region20
      $region19: #{ddual_gcn_forward.8} parent=11 // pred_region
        _
      $region20: #{ddual_gcn_forward.8} parent=11 // pred_fallthru
        _
      // Predicated region
      $region21: #{ddual_gcn_forward.8} parent=11 // pred_check
        %p326 = pneg %p148
      $region22: #{ddual_gcn_forward.8} parent=11 // pred_check_branch
        %328 = sbr.rel (%p326) target = $region24
      $region23: #{ddual_gcn_forward.8} parent=11 // pred_region
        _
      $region24: #{ddual_gcn_forward.8} parent=11 // pred_fallthru
        _
      // Predicated region
      $region25: #{ddual_gcn_forward.8} parent=11 // pred_check
        %p329 = pneg %p169
      $region26: #{ddual_gcn_forward.8} parent=11 // pred_check_branch
        %331 = sbr.rel (%p329) target = $region28
      $region27: #{ddual_gcn_forward.8} parent=11 // pred_region
        _
      $region28: #{ddual_gcn_forward.8} parent=11 // pred_fallthru
        _
      // Predicated region
      $region29: #{ddual_gcn_forward.8} parent=11 // pred_check
        %p332 = pneg %p190
      $region30: #{ddual_gcn_forward.8} parent=11 // pred_check_branch
        %334 = sbr.rel (%p332) target = $region32
      $region31: #{ddual_gcn_forward.8} parent=11 // pred_region
        _
      $region32: #{ddual_gcn_forward.8} parent=11 // pred_fallthru
        _
      // Predicated region
      $region33: #{ddual_gcn_forward.8} parent=11 // pred_check
        %p335 = pneg %p211
      $region34: #{ddual_gcn_forward.8} parent=11 // pred_check_branch
        %337 = sbr.rel (%p335) target = $region36
      $region35: #{ddual_gcn_forward.8} parent=11 // pred_region
        _
      $region36: #{ddual_gcn_forward.8} parent=11 // pred_fallthru
        _
      // Predicated region
      $region37: #{ddual_gcn_forward.8} parent=11 // pred_check
        %p338 = pneg %p232
      $region38: #{ddual_gcn_forward.8} parent=11 // pred_check_branch
        %340 = sbr.rel (%p338) target = $region40
      $region39: #{ddual_gcn_forward.8} parent=11 // pred_region
        _
      $region40: #{ddual_gcn_forward.8} parent=11 // pred_fallthru
        _
      // Predicated region
      $region41: #{ddual_gcn_forward.8} parent=11 // pred_check
        %p341 = pneg %p253
      $region42: #{ddual_gcn_forward.8} parent=11 // pred_check_branch
        %343 = sbr.rel (%p341) target = $region44
      $region43: #{ddual_gcn_forward.8} parent=11 // pred_region
        _
      $region44: #{ddual_gcn_forward.8} parent=11 // pred_fallthru
        _
    $region12: #{ddual_gcn_forward.8} parent=5 // pred_fallthru
      _
    %p344 = scmp.lt.s32.totalorder %s19, 2
    // Predicated region
    $region45: #{ddual_gcn_forward.8} parent=5 // pred_check
      %p345 = pneg %p344
    $region46: #{ddual_gcn_forward.8} parent=5 // pred_check_branch
      %347 = sbr.rel (%p345) target = $region48
    $region47: #{ddual_gcn_forward.8} parent=5 // pred_region
      // Predicated region
      $region49: #{ddual_gcn_forward.8} parent=47 // pred_check
        %p348 = pneg %p53
      $region50: #{ddual_gcn_forward.8} parent=47 // pred_check_branch
        %350 = sbr.rel (%p348) target = $region52
      $region51: #{ddual_gcn_forward.8} parent=47 // pred_region
        %s351 = smul.u32 2, %s27
        %p352 = scmp.lt.s32.totalorder %s26, 1
        %s353 = scalar_select %p352, %s26, 1
        %p354 = scmp.lt.s32.totalorder %s351, 1
        %s355 = scalar_select %p354, %s351, 1
        %s356 = smul.addr %s353, 4
        %s357 = sadd.s32 %s355, %s356
        %s358 = smul.addr %s357, 4
        %s359 = scalar_lea.vmem %s0, %s358
        %s360 = smul.u32 2, %s27
      $region52: #{ddual_gcn_forward.8} parent=47 // pred_fallthru
        _
      // Predicated region
      $region53: #{ddual_gcn_forward.8} parent=47 // pred_check
        %p361 = pneg %p79
      $region54: #{ddual_gcn_forward.8} parent=47 // pred_check_branch
        %363 = sbr.rel (%p361) target = $region56
      $region55: #{ddual_gcn_forward.8} parent=47 // pred_region
        %p364 = scmp.lt.s32.totalorder %s26, 1
        %s365 = scalar_select %p364, %s26, 1
        %s366 = smul.addr %s365, 2
        %s367 = smul.addr %s366, 4
        %s368 = scalar_lea.vmem %s1, %s367
      $region56: #{ddual_gcn_forward.8} parent=47 // pred_fallthru
        _
    $region48: #{ddual_gcn_forward.8} parent=5 // pred_fallthru
      _
    %p369 = scmp.le.s32.totalorder 1, %s19
    %p370 = scmp.lt.s32.totalorder %s19, 3
    %p371 = pnand %p369, %p370
    %p372 = pneg %p371
    // Predicated region
    $region57: #{ddual_gcn_forward.8} parent=5 // pred_check
      _
    $region58: #{ddual_gcn_forward.8} parent=5 // pred_check_branch
      %374 = sbr.rel (%p371) target = $region60
    $region59: #{ddual_gcn_forward.8} parent=5 // pred_region
      %s375 = ssub.s32 %s19, 1
      %s376 = smul.u32 2, %s29
      %p377 = scmp.lt.s32.totalorder %s28, 1
      %s378 = scalar_select %p377, %s28, 1
      %p379 = scmp.lt.s32.totalorder %s376, 1
      %s380 = scalar_select %p379, %s376, 1
      %s381 = smul.addr %s378, 4
      %s382 = sadd.s32 %s380, %s381
      %s383 = smul.addr %s382, 4
      %s384 = scalar_lea.vmem %s0, %s383
      %p385 = pneg %p59
      %p386 = pneg %p56
      %p387 = scmp.lt.s32.totalorder %s28, 1
      %s388 = scalar_select %p387, %s28, 1
      %s389 = smul.addr %s388, 2
      %s390 = smul.addr %s389, 4
      %s391 = scalar_lea.vmem %s1, %s390
      %p392 = pneg %p85
      %p393 = pneg %p82
      %p394 = pneg %p106
      %p395 = pneg %p103
      %p396 = pneg %p127
      %p397 = pneg %p124
      %p398 = pneg %p148
      %p399 = pneg %p145
      %p400 = pneg %p169
      %p401 = pneg %p166
      %p402 = pneg %p190
      %p403 = pneg %p187
      %p404 = pneg %p211
      %p405 = pneg %p208
      %p406 = pneg %p232
      %p407 = pneg %p229
      %p408 = pneg %p253
      %p409 = pneg %p250
      %p410 = pneg %p279
      %p411 = pneg %p276
      %p412 = scmp.lt.s32.totalorder %s28, 1
      %s413 = scalar_select %p412, %s28, 1
      %s414 = smul.addr %s413, 2
      %s415 = smul.addr %s414, 4
      %s416 = scalar_lea.vmem %s10, %s415
      %p417 = pneg %p305
      %p418 = pneg %p302
      %p419 = scmp.lt.s32.totalorder %s28, 1
      %s420 = scalar_select %p419, %s28, 1
      %s421 = smul.addr %s420, 8
      %s422 = scalar_lea.vmem %s11, %s421
      %s423 = smul.u32 2, %s29
      %p424 = scmp.lt.s32.totalorder %s28, 1
      %s425 = scalar_select %p424, %s28, 1
      %p426 = scmp.lt.s32.totalorder %s423, 1
      %s427 = scalar_select %p426, %s423, 1
      %s428 = smul.addr %s425, 4
      %s429 = sadd.s32 %s427, %s428
      %s430 = smul.addr %s429, 4
      %s431 = scalar_lea.vmem %s0, %s430
      %s432 = smul.u32 2, %s29
      %p433 = scmp.lt.s32.totalorder %s28, 1
      %s434 = scalar_select %p433, %s28, 1
      %s435 = smul.addr %s434, 2
      %s436 = smul.addr %s435, 4
      %s437 = scalar_lea.vmem %s1, %s436
      %p438 = scmp.lt.s32.totalorder %s28, 1
      %s439 = scalar_select %p438, %s28, 1
      %s440 = smul.addr %s439, 2
      %s441 = smul.addr %s440, 4
      %s442 = scalar_lea.vmem %s10, %s441
      %p443 = scmp.lt.s32.totalorder %s28, 1
      %s444 = scalar_select %p443, %s28, 1
      %s445 = smul.addr %s444, 8
      %s446 = scalar_lea.vmem %s11, %s445
      %p448 = scmp.eq.s32.totalorder %s29, 0
      // Predicated region
      $region61: #{ddual_gcn_forward.8} parent=59 // pred_check
        %p449 = pneg %p448
      $region62: #{ddual_gcn_forward.8} parent=59 // pred_check_branch
        %451 = sbr.rel (%p449) target = $region64
      $region63: #{ddual_gcn_forward.8} parent=59 // pred_region
        %vm452 = vcmask 31744
        %453 = vst.msk [vmem:[#allocation2] sm:$0xff] %vm452, 0.0
      $region64: #{ddual_gcn_forward.8} parent=59 // pred_fallthru
        _
      %v454 = vld [vmem:[%s431] sm:$0xff]
      %v455 = vld [vmem:[%s431 + $0x8] sm:$0xff]
      %v456 = vld [vmem:[%s5] sm:$0xf]
      %v457 = vld [vmem:[%s5 + $0x4] sm:$0x3]
      %v458 = vld [vmem:[%s8 + $0x30] sm:$0xff]
      %v459 = vld [vmem:[%s8 + $0x38] sm:$0xf]
      %461 = vset.pattern.permute.xlu0 0
      %462 = vperm.xlu0 %461, %v458
      %v463 = vpop.permute.xlu0 %462
      %466 = vset.pattern.permute.xlu0 0
      %467 = vperm.xlu0 %466, %v459
      %v468 = vpop.permute.xlu0 %467
      %v472 = vunpack.c.l.b16 %v456
      %v473 = vunpack.c.l.b16 %v457
      %v474 = vpack.c.b16 %v473, %v472
      %v477 = vunpack.c.l.b16 %v454
      %v478 = vunpack.c.h.b16 %v454
      %v479 = vunpack.c.l.b16 %v455
      %v480 = vunpack.c.h.b16 %v455
      %v481 = vpack.c.b16 %v479, %v477
      %v482 = vpack.c.b16 %v480, %v478
      %vm485 = vcmask 130048
      %v487 = vsel %vm485, %v474, 0
      %489 = vmatpush.bf16.msra.mxu0 0
      %490 = vmatpush.bf16.msra.mxu0 0
      %491 = vmatpush.bf16.msra.mxu0 0
      %492 = vmatpush.bf16.msra.mxu0 0
      %493 = vmatpush.bf16.msra.mxu0 0
      %494 = vmatpush.bf16.msra.mxu0 0
      %495 = vmatpush.bf16.msra.mxu0 0
      %496 = vmatpush.bf16.msra.mxu0 %v481
      %497 = vmatmul.bf16.gmra.mxu0 %v487
      %v498 = vpop.f32.mrf.mxu0
      %v499 = vadd.f32 %v463, %v498
      %v500 = vpop.f32.mrf.mxu0
      %v501 = vadd.f32 %v468, %v500
      %502 = vdwg.mxu0
      %503 = vmatpush.bf16.msra.mxu0 0
      %504 = vmatpush.bf16.msra.mxu0 0
      %505 = vmatpush.bf16.msra.mxu0 0
      %506 = vmatpush.bf16.msra.mxu0 0
      %507 = vmatpush.bf16.msra.mxu0 0
      %508 = vmatpush.bf16.msra.mxu0 0
      %509 = vmatpush.bf16.msra.mxu0 0
      %510 = vmatpush.bf16.msra.mxu0 %v482
      %511 = vmatmul.bf16.gmra.mxu0 %v487
      %v512 = vpop.f32.mrf.mxu0
      %v513 = vadd.f32 %v463, %v512
      %v514 = vpop.f32.mrf.mxu0
      %v515 = vadd.f32 %v468, %v514
      %516 = vdwg.mxu0
      %vm517 = vcmp.ge.f32.partialorder %v499, 0.0
      %vm518 = vcmp.ge.f32.partialorder %v513, 0.0
      %vm519 = vcmp.ge.f32.partialorder %v501, 0.0
      %vm520 = vcmp.ge.f32.partialorder %v515, 0.0
      %v521 = vmul.f32 %v499, 0.01
      %v522 = vmul.f32 %v513, 0.01
      %v523 = vmul.f32 %v501, 0.01
      %v524 = vmul.f32 %v515, 0.01
      %v525 = vsel %vm517, %v499, %v521
      %v526 = vsel %vm518, %v513, %v522
      %v527 = vsel %vm519, %v501, %v523
      %v528 = vsel %vm520, %v515, %v524
      %v529 = vpack.c.bf16 %v525, %v525
      %v530 = vpack.c.bf16 %v526, %v526
      %v531 = vpack.c.bf16 %v527, %v527
      %v532 = vpack.c.bf16 %v528, %v528
      %v533 = vld [vmem:[#allocation2] sm:$0xff]
      %534 = vmatpush.bf16.xpose.msra.mxu0 0
      %535 = vmatpush.bf16.xpose.msra.mxu0 0
      %536 = vmatpush.bf16.xpose.msra.mxu0 0
      %537 = vmatpush.bf16.xpose.msra.mxu0 0
      %538 = vmatpush.bf16.xpose.msra.mxu0 0
      %539 = vmatpush.bf16.xpose.msra.mxu0 0
      %540 = vmatpush.bf16.xpose.msra.mxu0 0
      %541 = vmatpush.bf16.xpose.msra.mxu0 %v531
      %542 = vmatmul.bf16.gmra.mxu0 %v529
      %v543 = vpop.f32.mrf.mxu0
      %v544 = vadd.f32 0.0, %v543
      %v545 = vpop.f32.mrf.mxu0
      %546 = vdwg.mxu0
      %547 = vmatpush.bf16.xpose.msra.mxu0 0
      %548 = vmatpush.bf16.xpose.msra.mxu0 0
      %549 = vmatpush.bf16.xpose.msra.mxu0 0
      %550 = vmatpush.bf16.xpose.msra.mxu0 0
      %551 = vmatpush.bf16.xpose.msra.mxu0 0
      %552 = vmatpush.bf16.xpose.msra.mxu0 0
      %553 = vmatpush.bf16.xpose.msra.mxu0 0
      %554 = vmatpush.bf16.xpose.msra.mxu0 %v532
      %555 = vmatmul.bf16.gmra.mxu0 %v530
      %v556 = vpop.f32.mrf.mxu0
      %v557 = vadd.f32 %v544, %v556
      %v558 = vpop.f32.mrf.mxu0
      %559 = vdwg.mxu0
      %v560 = vadd.f32 %v533, %v557
      %vm561 = vcmask 31744
      %562 = vst.msk [vmem:[#allocation2] sm:$0xff] %vm561, %v560
      // Predicated region
      $region65: #{ddual_gcn_forward.8} parent=59 // pred_check
        %p563 = pneg %p448
      $region66: #{ddual_gcn_forward.8} parent=59 // pred_check_branch
        %565 = sbr.rel (%p563) target = $region68
      $region67: #{ddual_gcn_forward.8} parent=59 // pred_region
        %v566 = vld [vmem:[%s437] sm:$0xf]
        %v567 = vld [vmem:[%s437 + $0x4] sm:$0xf]
        %v568 = vld [vmem:[%s2] sm:$0xf]
        %v569 = vld [vmem:[%s2 + $0x4] sm:$0xf]
        %v570 = vld [vmem:[%s2 + $0x8] sm:$0xf]
        %v571 = vld [vmem:[%s8] sm:$0xff]
        %v572 = vld [vmem:[%s8 + $0x8] sm:$0xff]
        %v573 = vld [vmem:[%s8 + $0x10] sm:$0xff]
        %575 = vset.pattern.permute.xlu0 0
        %576 = vperm.xlu0 %575, %v571
        %v577 = vpop.permute.xlu0 %576
        %580 = vset.pattern.permute.xlu0 0
        %581 = vperm.xlu0 %580, %v572
        %v582 = vpop.permute.xlu0 %581
        %585 = vset.pattern.permute.xlu0 0
        %586 = vperm.xlu0 %585, %v573
        %v587 = vpop.permute.xlu0 %586
        %v592 = vunpack.c.l.b16 %v568
        %v593 = vunpack.c.l.b16 %v569
        %v594 = vunpack.c.l.b16 %v570
        %v595 = vpack.c.b16 %v593, %v592
        %v596 = vpack.c.b16 %v594, %v594
        %v599 = vunpack.c.l.b16 %v566
        %v600 = vunpack.c.l.b16 %v567
        %v601 = vpack.c.b16 %v600, %v599
        %v604 = vsel %vm485, %v595, 0
        %v607 = vsel %vm485, %v596, 0
        %609 = vmatpush.bf16.msra.mxu0 0
        %610 = vmatpush.bf16.msra.mxu0 0
        %611 = vmatpush.bf16.msra.mxu0 0
        %612 = vmatpush.bf16.msra.mxu0 0
        %613 = vmatpush.bf16.msra.mxu0 0
        %614 = vmatpush.bf16.msra.mxu0 0
        %615 = vmatpush.bf16.msra.mxu0 0
        %616 = vmatpush.bf16.msra.mxu0 %v601
        %617 = vmatmul.bf16.gmra.mxu0 %v604
        %v618 = vpop.f32.mrf.mxu0
        %v619 = vadd.f32 %v577, %v618
        %v620 = vpop.f32.mrf.mxu0
        %v621 = vadd.f32 %v582, %v620
        %622 = vmatmul.bf16.gmra.mxu0 %v607
        %v623 = vpop.f32.mrf.mxu0
        %v624 = vadd.f32 %v587, %v623
        %v625 = vpop.f32.mrf.mxu0
        %626 = vdwg.mxu0
        %v628 = vsel %vm561, %v621, 0
        %v631 = vsel %vm561, %v624, 0
        %633 = vmatpush.xpose.msra.mxu0 0.0
        %634 = vmatpush.xpose.msra.mxu0 0.0
        %635 = vmatpush.xpose.msra.mxu0 0.0
        %636 = vmatpush.xpose.msra.mxu0 0.0
        %637 = vmatpush.xpose.msra.mxu0 0.0
        %638 = vmatpush.xpose.msra.mxu0 0.0
        %639 = vmatpush.xpose.msra.mxu0 0.0
        %640 = vmatpush.xpose.msra.mxu0 0.0
        %641 = vmatpush.xpose.msra.mxu0 0.0
        %642 = vmatpush.xpose.msra.mxu0 0.0
        %643 = vmatpush.xpose.msra.mxu0 0.0
        %644 = vmatpush.xpose.msra.mxu0 0.0
        %645 = vmatpush.xpose.msra.mxu0 0.0
        %646 = vmatpush.xpose.msra.mxu0 0.0
        %647 = vmatpush.xpose.msra.mxu0 0.0
        %648 = vmatpush.xpose.msra.mxu0 %v631
        %649 = vmatmul.f32.gmra.mxu0 %v628
        %v650 = vpop.f32.mrf.mxu0
        %v651 = vadd.f32 0.0, %v650
        %652 = vdwg.mxu0
        %vm653 = vcmask 64512
        %v654 = vsel %vm653, %v651, -inf
        %v655 = vrot.slane %v654, 4
        %v656 = vmax.f32 %v654, %v655
        %v657 = vrot.slane %v656, 2
        %v658 = vmax.f32 %v656, %v657
        %v659 = vrot.slane %v658, 1
        %v660 = vmax.f32 %v658, %v659
        %v661 = vsub.f32 %v651, %v660
        %v662 = vmul.f32 %v661, 1.442695
        %v663 = vpow.pop %v662
        %v664 = vsel %vm653, %v663, 0.0
        %v665 = vrot.slane %v664, 4
        %v666 = vadd.f32 %v664, %v665
        %v667 = vrot.slane %v666, 2
        %v668 = vadd.f32 %v666, %v667
        %v669 = vrot.slane %v668, 1
        %v670 = vadd.f32 %v668, %v669
        %v671 = vrcp.pop %v670
        %v672 = vmul.f32 %v670, %v671
        %v673 = vsub.f32 1.0, %v672
        %v674 = vmul.f32 %v671, %v673
        %v675 = vadd.f32 %v671, %v674
        %vm676 = vweird.f32 %v670
        %vm677 = vweird.f32 %v671
        %vm678 = vmor %vm676, %vm677
        %v679 = vsel %vm678, %v671, %v675
        %v680 = vand.u32 2147483647, %v670
        %vm681 = vcmp.eq.f32.partialorder %v680, 8.507059e+37
        %v682 = vand.u32 %v670, 2147483648
        %v683 = vor.u32 1.1754944e-38, %v682
        %v684 = vsel %vm681, %v683, %v679
        %v685 = vmul.f32 %v663, %v684
        %v687 = vsel %vm653, %v685, 0
        %689 = vmatpush.msra.mxu0 0.0
        %690 = vmatpush.msra.mxu0 0.0
        %691 = vmatpush.msra.mxu0 0.0
        %692 = vmatpush.msra.mxu0 0.0
        %693 = vmatpush.msra.mxu0 0.0
        %694 = vmatpush.msra.mxu0 0.0
        %695 = vmatpush.msra.mxu0 0.0
        %696 = vmatpush.msra.mxu0 0.0
        %697 = vmatpush.msra.mxu0 0.0
        %698 = vmatpush.msra.mxu0 0.0
        %699 = vmatpush.msra.mxu0 0.0
        %700 = vmatpush.msra.mxu0 0.0
        %701 = vmatpush.msra.mxu0 0.0
        %702 = vmatpush.msra.mxu0 0.0
        %703 = vmatpush.msra.mxu0 0.0
        %704 = vmatpush.msra.mxu0 %v619
        %705 = vmatmul.f32.gmra.mxu0 %v687
        %v706 = vpop.f32.mrf.mxu0
        %v707 = vadd.f32 0.0, %v706
        %708 = vdwg.mxu0
        %v709 = vld [vmem:[%s3] sm:$0xff]
        %v710 = vld [vmem:[%s8 + $0x18] sm:$0xff]
        %712 = vset.pattern.permute.xlu0 0
        %713 = vperm.xlu0 %712, %v710
        %v714 = vpop.permute.xlu0 %713
        %v717 = vsel %vm653, %v709, 0
        %719 = vmatpush.msra.mxu0 0.0
        %720 = vmatpush.msra.mxu0 0.0
        %721 = vmatpush.msra.mxu0 0.0
        %722 = vmatpush.msra.mxu0 0.0
        %723 = vmatpush.msra.mxu0 0.0
        %724 = vmatpush.msra.mxu0 0.0
        %725 = vmatpush.msra.mxu0 0.0
        %726 = vmatpush.msra.mxu0 0.0
        %727 = vmatpush.msra.mxu0 0.0
        %728 = vmatpush.msra.mxu0 0.0
        %729 = vmatpush.msra.mxu0 0.0
        %730 = vmatpush.msra.mxu0 0.0
        %731 = vmatpush.msra.mxu0 0.0
        %732 = vmatpush.msra.mxu0 0.0
        %733 = vmatpush.msra.mxu0 0.0
        %734 = vmatpush.msra.mxu0 %v707
        %735 = vmatmul.f32.gmra.mxu0 %v717
        %v736 = vpop.f32.mrf.mxu0
        %v737 = vadd.f32 %v714, %v736
        %738 = vdwg.mxu0
        %v739 = vld [vmem:[%s4] sm:$0xf]
        %v740 = vld [vmem:[%s4 + $0x4] sm:$0xf]
        %v741 = vpack.c.bf16 %v737, %v737
        %v742 = vld [vmem:[%s8 + $0x20] sm:$0xff]
        %v743 = vld [vmem:[%s8 + $0x28] sm:$0xff]
        %745 = vset.pattern.permute.xlu0 0
        %746 = vperm.xlu0 %745, %v742
        %v747 = vpop.permute.xlu0 %746
        %750 = vset.pattern.permute.xlu0 0
        %751 = vperm.xlu0 %750, %v743
        %v752 = vpop.permute.xlu0 %751
        %v756 = vunpack.c.l.b16 %v739
        %v757 = vunpack.c.l.b16 %v740
        %v758 = vpack.c.b16 %v757, %v756
        %v760 = vsel %vm653, %v758, 0
        %vm762 = vcmask 1043456
        %v764 = vsel %vm762, %v741, 0
        %766 = vmatpush.bf16.msra.mxu0 0
        %767 = vmatpush.bf16.msra.mxu0 0
        %768 = vmatpush.bf16.msra.mxu0 0
        %769 = vmatpush.bf16.msra.mxu0 0
        %770 = vmatpush.bf16.msra.mxu0 0
        %771 = vmatpush.bf16.msra.mxu0 0
        %772 = vmatpush.bf16.msra.mxu0 0
        %773 = vmatpush.bf16.msra.mxu0 %v764
        %774 = vmatmul.bf16.gmra.mxu0 %v760
        %v775 = vpop.f32.mrf.mxu0
        %v776 = vadd.f32 %v747, %v775
        %v777 = vpop.f32.mrf.mxu0
        %v778 = vadd.f32 %v752, %v777
        %779 = vdwg.mxu0
        %vm780 = vcmp.ge.f32.partialorder %v776, 0.0
        %vm781 = vcmp.ge.f32.partialorder %v778, 0.0
        %v782 = vmul.f32 %v776, 0.01
        %v783 = vmul.f32 %v778, 0.01
        %v784 = vsel %vm780, %v776, %v782
        %v785 = vsel %vm781, %v778, %v783
        %s786 = sld [smem:[#allocation3]]
        %v787 = vstv %s786
        %v788 = vmul.f32 %v787, %v784
        %v789 = vmul.f32 %v787, %v785
        %v790 = vunpack.c.l.bf16 %v566
        %v791 = vunpack.c.l.bf16 %v567
        %v792 = vadd.f32 %v788, %v790
        %v793 = vadd.f32 %v789, %v791
        %v794 = vpack.c.bf16 %v792, %v792
        %v795 = vpack.c.bf16 %v793, %v793
        %vm796 = vcmask 27648
        %797 = vst.msk [vmem:[%s442] sm:$0xf] %vm796, %v794
        %798 = vst.msk [vmem:[%s442 + $0x4] sm:$0xf] %vm796, %v795
        %v799 = vld [vmem:[#allocation2] sm:$0xff]
        %v800 = vld [vmem:[%s6] sm:$0xf]
        %v801 = vld [vmem:[%s8 + $0x3c] sm:$0xf]
        %803 = vset.pattern.permute.xlu0 0
        %804 = vperm.xlu0 %803, %v801
        %v805 = vpop.permute.xlu0 %804
        %v808 = vsel %vm561, %v800, 0
        %v811 = vsel %vm561, %v799, 0
        %813 = vmatpush.xpose.msra.mxu0 0.0
        %814 = vmatpush.xpose.msra.mxu0 0.0
        %815 = vmatpush.xpose.msra.mxu0 0.0
        %816 = vmatpush.xpose.msra.mxu0 0.0
        %817 = vmatpush.xpose.msra.mxu0 0.0
        %818 = vmatpush.xpose.msra.mxu0 0.0
        %819 = vmatpush.xpose.msra.mxu0 0.0
        %820 = vmatpush.xpose.msra.mxu0 0.0
        %821 = vmatpush.xpose.msra.mxu0 0.0
        %822 = vmatpush.xpose.msra.mxu0 0.0
        %823 = vmatpush.xpose.msra.mxu0 0.0
        %824 = vmatpush.xpose.msra.mxu0 0.0
        %825 = vmatpush.xpose.msra.mxu0 0.0
        %826 = vmatpush.xpose.msra.mxu0 0.0
        %827 = vmatpush.xpose.msra.mxu0 0.0
        %828 = vmatpush.xpose.msra.mxu0 %v811
        %829 = vmatmul.f32.gmra.mxu0 %v808
        %v830 = vpop.f32.mrf.mxu0
        %v831 = vadd.f32 %v805, %v830
        %832 = vdwg.mxu0
        %v833 = vld [vmem:[%s7] sm:$0xff]
        %v835 = vsel %vm653, %v833, 0
        %837 = vmatpush.msra.mxu0 0.0
        %838 = vmatpush.msra.mxu0 0.0
        %839 = vmatpush.msra.mxu0 0.0
        %840 = vmatpush.msra.mxu0 0.0
        %841 = vmatpush.msra.mxu0 0.0
        %842 = vmatpush.msra.mxu0 0.0
        %843 = vmatpush.msra.mxu0 0.0
        %844 = vmatpush.msra.mxu0 0.0
        %845 = vmatpush.msra.mxu0 0.0
        %846 = vmatpush.msra.mxu0 0.0
        %847 = vmatpush.msra.mxu0 0.0
        %848 = vmatpush.msra.mxu0 0.0
        %849 = vmatpush.msra.mxu0 0.0
        %850 = vmatpush.msra.mxu0 0.0
        %851 = vmatpush.msra.mxu0 0.0
        %852 = vmatpush.msra.mxu0 %v799
        %853 = vmatmul.f32.gmra.mxu0 %v835
        %v854 = vpop.f32.mrf.mxu0
        %v855 = vadd.f32 0.0, %v854
        %856 = vdwg.mxu0
        %v858 = vsel %vm653, %v831, 0
        %860 = vmatpush.xpose.msra.mxu0 0.0
        %861 = vmatpush.xpose.msra.mxu0 0.0
        %862 = vmatpush.xpose.msra.mxu0 0.0
        %863 = vmatpush.xpose.msra.mxu0 0.0
        %864 = vmatpush.xpose.msra.mxu0 0.0
        %865 = vmatpush.xpose.msra.mxu0 0.0
        %866 = vmatpush.xpose.msra.mxu0 0.0
        %867 = vmatpush.xpose.msra.mxu0 0.0
        %868 = vmatpush.xpose.msra.mxu0 0.0
        %869 = vmatpush.xpose.msra.mxu0 0.0
        %870 = vmatpush.xpose.msra.mxu0 0.0
        %871 = vmatpush.xpose.msra.mxu0 0.0
        %872 = vmatpush.xpose.msra.mxu0 0.0
        %873 = vmatpush.xpose.msra.mxu0 0.0
        %874 = vmatpush.xpose.msra.mxu0 0.0
        %875 = vmatpush.xpose.msra.mxu0 %v858
        %876 = vmatmul.f32.gmra.mxu0 %v835
        %v877 = vpop.f32.mrf.mxu0
        %v878 = vadd.f32 %v855, %v877
        %879 = vdwg.mxu0
        %v880 = vld [vmem:[%s8 + $0x40] sm:$0xff]
        %882 = vset.pattern.permute.xlu0 0
        %883 = vperm.xlu0 %882, %v880
        %v884 = vpop.permute.xlu0 %883
        %v886 = vadd.f32 %v878, %v884
        %887 = vst.msk [vmem:[%s446] sm:$0xff] %vm561, %v886
      $region68: #{ddual_gcn_forward.8} parent=59 // pred_fallthru
        _
      %p888 = scmp.lt.s32.totalorder %s28, 1
      %s889 = scalar_select %p888, %s28, 1
      %s890 = smul.addr %s889, 2
      %s891 = smul.addr %s890, 4
      %s892 = scalar_lea.vmem %s10, %s891
      %p893 = scmp.lt.s32.totalorder %s28, 1
      %s894 = scalar_select %p893, %s28, 1
      %s895 = smul.addr %s894, 8
      %s896 = scalar_lea.vmem %s11, %s895
      // Predicated region
      $region69: #{ddual_gcn_forward.8} parent=59 // pred_check
        %p897 = pneg %p276
      $region70: #{ddual_gcn_forward.8} parent=59 // pred_check_branch
        %899 = sbr.rel (%p897) target = $region72
      $region71: #{ddual_gcn_forward.8} parent=59 // pred_region
        _
      $region72: #{ddual_gcn_forward.8} parent=59 // pred_fallthru
        _
      // Predicated region
      $region73: #{ddual_gcn_forward.8} parent=59 // pred_check
        %p900 = pneg %p302
      $region74: #{ddual_gcn_forward.8} parent=59 // pred_check_branch
        %902 = sbr.rel (%p900) target = $region76
      $region75: #{ddual_gcn_forward.8} parent=59 // pred_region
        _
      $region76: #{ddual_gcn_forward.8} parent=59 // pred_fallthru
        _
    $region60: #{ddual_gcn_forward.8} parent=5 // pred_fallthru
      _
    %p903 = scmp.le.s32.totalorder 2, %s19
    // Predicated region
    $region77: #{ddual_gcn_forward.8} parent=5 // pred_check
      %p904 = pneg %p903
    $region78: #{ddual_gcn_forward.8} parent=5 // pred_check_branch
      %906 = sbr.rel (%p904) target = $region80
    $region79: #{ddual_gcn_forward.8} parent=5 // pred_region
      %s907 = ssub.s32 %s19, 2
      // Predicated region
      $region81: #{ddual_gcn_forward.8} parent=79 // pred_check
        %p908 = pneg %p282
      $region82: #{ddual_gcn_forward.8} parent=79 // pred_check_branch
        %910 = sbr.rel (%p908) target = $region84
      $region83: #{ddual_gcn_forward.8} parent=79 // pred_region
        %p911 = scmp.lt.s32.totalorder %s30, 1
        %s912 = scalar_select %p911, %s30, 1
        %s913 = smul.addr %s912, 2
        %s914 = smul.addr %s913, 4
        %s915 = scalar_lea.vmem %s10, %s914
      $region84: #{ddual_gcn_forward.8} parent=79 // pred_fallthru
        _
      // Predicated region
      $region85: #{ddual_gcn_forward.8} parent=79 // pred_check
        %p916 = pneg %p308
      $region86: #{ddual_gcn_forward.8} parent=79 // pred_check_branch
        %918 = sbr.rel (%p916) target = $region88
      $region87: #{ddual_gcn_forward.8} parent=79 // pred_region
        %p919 = scmp.lt.s32.totalorder %s30, 1
        %s920 = scalar_select %p919, %s30, 1
        %s921 = smul.addr %s920, 8
        %s922 = scalar_lea.vmem %s11, %s921
      $region88: #{ddual_gcn_forward.8} parent=79 // pred_fallthru
        _
    $region80: #{ddual_gcn_forward.8} parent=5 // pred_fallthru
      _
  $region6: #{ddual_gcn_forward.8} parent=0 // loop_footer
    %s23 = sadd.s32 1, %s19
  $region7: #{ddual_gcn_forward.8} parent=0 // loop_footer_branch
    %18 = sbr.rel target = $region3
  $region8: #{ddual_gcn_forward.8} parent=0 // loop_exit
    _

</llo_original>
